<compile_context>
chip_gen: v5e
topology: v5e:2x2
jax: 0.10.0
libtpu: 0.0.40
codegen_flags: <defaults>
</compile_context>

<pallas_src>
import jax
import jax.numpy as jnp
from jax.experimental import pallas as pl
from jax.experimental.pallas import tpu as pltpu

DIM = 256  # `dim` in model.py


def _classifier_kernel(g1_ref, g2_ref, w1a_ref, w1b_ref, b1_ref,
                       w2_ref, b2_ref, o_ref):
    # lin1 on the (virtually) concatenated embedding:
    #   concat([g1, g2]) @ W1  ==  g1 @ W1[:DIM] + g2 @ W1[DIM:]
    # Operands are fed to the MXU in their stored dtype (bf16 stays bf16);
    # f32 accumulation matches `embeds.to(torch.float32)`.
    h = jnp.dot(g1_ref[...], w1a_ref[...], preferred_element_type=jnp.float32)
    h = h + jnp.dot(g2_ref[...], w1b_ref[...],
                    preferred_element_type=jnp.float32)
    h = h + b1_ref[...].astype(jnp.float32)    # (1, DIM) broadcasts over rows
    h = jnp.maximum(h, 0.0)                    # ReLU

    # TODO(synk): dropout(p=0.4) is identity here (inference / training=False);
    # a training-mode version would use pltpu.prng_seed + prng_random_bits.

    # lin2 (N=1) as VPU multiply + lane reduction; result is batch-on-lanes,
    # pairing with the lane-dense (1, block_b) output tile (unmasked stores
    # for all but the ragged last tile).
    logits = jnp.sum(h * w2_ref[...].astype(jnp.float32), axis=-1)
    logits = logits + b2_ref[0, 0]
    o_ref[...] = jax.nn.sigmoid(logits.reshape(1, -1))          # (1, block_b)


def _pick_block_b(batch, desired):
    """Choose the batch tile (rows per grid step).

    * multiples of 128 (lane width) only,
    * large tiles (default 1024) to amortize ~0.35 us per-grid-step overhead,
    * keep >= 2 grid steps when batch allows it, so both TensorCores on
      dual-core chips (v7x) get work under dimension_semantics=("parallel",).
    """
    desired = max(128, (desired // 128) * 128)
    if batch <= 128:
        return 128
    half = -(-batch // 2)              # ceil(batch / 2)
    half = -(-half // 128) * 128       # round up to a lane multiple
    return min(desired, half)


def classifier_layer(gene1_f, gene2_f, params, *, block_b=1024):
    """params = (w1a, w1b, b1, w2, b2) with shapes
       (DIM,DIM), (DIM,DIM), (1,DIM), (1,DIM), (1,1).

    block_b is the *desired* batch tile; it is rounded to a multiple of 128
    and capped so at least two grid steps exist when B > 128 (v7x megacore)."""
    w1a, w1b, b1, w2, b2 = params
    B = gene1_f.shape[0]
    assert gene1_f.shape == (B, DIM) and gene2_f.shape == (B, DIM)

    blk = _pick_block_b(B, block_b)
    num_blocks = pl.cdiv(B, blk)   # ragged last tile handled by Pallas:
                                   # no wrapper-side jnp.pad / extra HBM pass.

    # Rough double-buffered VMEM footprint; raise the scoped limit only when a
    # big tile needs it (v5e default scoped VMEM is 16 MiB).
    in_bytes = jnp.dtype(gene1_f.dtype).itemsize
    est = (2 * 2 * blk * DIM * in_bytes            # g1/g2 tiles, 2 buffers each
           + 2 * (2 * DIM * DIM + 2 * DIM) * 4     # W1 halves + b1 + w2
           + 2 * 2 * blk * 4                       # output tile, 2 buffers
           + 2 * blk * DIM * 4)                    # h / intermediates headroom
    vmem_limit = None
    if est > 12 * 1024 * 1024:
        vmem_limit = min(2 * est, 96 * 1024 * 1024)

    out = pl.pallas_call(
        _classifier_kernel,
        out_shape=jax.ShapeDtypeStruct((1, B), jnp.float32),
        grid=(num_blocks,),
        in_specs=[
            pl.BlockSpec((blk, DIM), lambda i: (i, 0)),         # gene1_f tile
            pl.BlockSpec((blk, DIM), lambda i: (i, 0)),         # gene2_f tile
            pl.BlockSpec((DIM, DIM), lambda i: (0, 0)),         # W1[:DIM] (resident)
            pl.BlockSpec((DIM, DIM), lambda i: (0, 0)),         # W1[DIM:] (resident)
            pl.BlockSpec((1, DIM),   lambda i: (0, 0)),         # b1
            pl.BlockSpec((1, DIM),   lambda i: (0, 0)),         # w2 row vector
            pl.BlockSpec(memory_space=pltpu.MemorySpace.SMEM),  # b2 scalar
        ],
        out_specs=pl.BlockSpec((1, blk), lambda i: (0, i)),     # lane-dense
        compiler_params=pltpu.CompilerParams(
            dimension_semantics=("parallel",),
            vmem_limit_bytes=vmem_limit),
    )(gene1_f, gene2_f, w1a, w1b, b1, w2, b2)

    # Layout plumbing only: lane-dense (1, B) -> (B, 1).
    return out.reshape(B, 1)


def init_params(key):
    """Deterministic init mimicking nn.Linear default U(-1/sqrt(fan_in), +)."""
    k1, k2, k3, k4 = jax.random.split(key, 4)
    fan1 = 2 * DIM
    bound1 = 1.0 / jnp.sqrt(jnp.float32(fan1))
    # Full lin1 weight stored as (in=2*DIM, out=DIM), i.e. already transposed.
    w1 = jax.random.uniform(k1, (fan1, DIM), jnp.float32, -bound1, bound1)
    b1 = jax.random.uniform(k2, (1, DIM), jnp.float32, -bound1, bound1)
    w1a = w1[:DIM, :]     # multiplies gene1_f
    w1b = w1[DIM:, :]     # multiplies gene2_f

    bound2 = 1.0 / jnp.sqrt(jnp.float32(DIM))
    w2 = jax.random.uniform(k3, (1, DIM), jnp.float32, -bound2, bound2)  # row
    b2 = jax.random.uniform(k4, (1, 1), jnp.float32, -bound2, bound2)
    return w1a, w1b, b1, w2, b2


def reference(gene1_f, gene2_f, params):
    w1a, w1b, b1, w2, b2 = params
    x = jnp.concatenate([gene1_f, gene2_f], axis=1).astype(jnp.float32)
    w1 = jnp.concatenate([w1a, w1b], axis=0)
    h = jax.nn.relu(x @ w1 + b1)
    return jax.nn.sigmoid(h @ w2.T + b2)


if __name__ == "__main__":
    key = jax.random.PRNGKey(0)
    kp, kx1, kx2 = jax.random.split(key, 3)
    params = init_params(kp)

    # Case 1: small batch, not a multiple of the tile -> ragged last tile,
    # block_b capped to keep >= 2 grid steps (two-TensorCore friendly).
    B = 300
    g1 = jax.random.normal(kx1, (B, DIM), jnp.float32)
    g2 = jax.random.normal(kx2, (B, DIM), jnp.float32)
    out = jax.block_until_ready(classifier_layer(g1, g2, params))
    ref = reference(g1, g2, params)
    assert out.shape == (B, 1)
    assert jnp.allclose(out, ref, atol=1e-5, rtol=1e-5), \
        float(jnp.max(jnp.abs(out - ref)))

    # Case 2: batch large enough to use the full 1024-row tile, still ragged.
    B2 = 2304
    g1b = jax.random.normal(jax.random.PRNGKey(1), (B2, DIM), jnp.float32)
    g2b = jax.random.normal(jax.random.PRNGKey(2), (B2, DIM), jnp.float32)
    out2 = jax.block_until_ready(classifier_layer(g1b, g2b, params))
    ref2 = reference(g1b, g2b, params)
    assert out2.shape == (B2, 1)
    assert jnp.allclose(out2, ref2, atol=1e-5, rtol=1e-5), \
        float(jnp.max(jnp.abs(out2 - ref2)))

    print("KERNEL_OK")
</pallas_src>

<mosaic_0001>
module attributes {stable_mosaic.version = 11 : i64} {
  func.func @_classifier_kernel(%arg0: i32, %arg1: memref<256x256xf32, #tpu.memory_space<vmem>>, %arg2: memref<256x256xf32, #tpu.memory_space<vmem>>, %arg3: memref<256x256xf32, #tpu.memory_space<vmem>>, %arg4: memref<256x256xf32, #tpu.memory_space<vmem>>, %arg5: memref<1x256xf32, #tpu.memory_space<vmem>>, %arg6: memref<1x256xf32, #tpu.memory_space<vmem>>, %arg7: memref<1x1xf32, #tpu.memory_space<smem>>, %arg8: memref<1x256xf32, #tpu.memory_space<vmem>>) attributes {dimension_semantics = [#tpu.dimension_semantics<parallel>], iteration_bounds = array<i64: 2>, scalar_prefetch = 0 : i64, scratch_operands = 0 : i64, tpu.core_type = #tpu.core_type<tc>, window_params = [{transform_indices = @transform_0, window_bounds = array<i64: 256, 256>}, {transform_indices = @transform_1, window_bounds = array<i64: 256, 256>}, {pipeline_mode = #tpu.pipeline_mode<synchronous>, transform_indices = @transform_2, window_bounds = array<i64: 256, 256>}, {pipeline_mode = #tpu.pipeline_mode<synchronous>, transform_indices = @transform_3, window_bounds = array<i64: 256, 256>}, {pipeline_mode = #tpu.pipeline_mode<synchronous>, transform_indices = @transform_4, window_bounds = array<i64: 1, 256>}, {pipeline_mode = #tpu.pipeline_mode<synchronous>, transform_indices = @transform_5, window_bounds = array<i64: 1, 256>}, {transform_indices = @transform_6, window_bounds = array<i64: 1, 1>}, {transform_indices = @transform_7, window_bounds = array<i64: 1, 256>}]} {
    %c0 = arith.constant 0 : index
    %c0_0 = arith.constant 0 : index
    %0 = vector.load %arg1[%c0, %c0_0] : memref<256x256xf32, #tpu.memory_space<vmem>>, vector<256x256xf32>
    %c0_1 = arith.constant 0 : index
    %c0_2 = arith.constant 0 : index
    %1 = vector.load %arg3[%c0_1, %c0_2] : memref<256x256xf32, #tpu.memory_space<vmem>>, vector<256x256xf32>
    %cst = arith.constant dense<0.000000e+00> : vector<256x256xf32>
    %2 = tpu.matmul %0, %1, %cst {dimension_numbers = #tpu.dot_dimension_numbers<[1], [0], [0], [1], [0, 0, 1, 1], [], []>} : vector<256x256xf32>, vector<256x256xf32>, vector<256x256xf32> -> vector<256x256xf32>
    %c0_3 = arith.constant 0 : index
    %c0_4 = arith.constant 0 : index
    %3 = vector.load %arg2[%c0_3, %c0_4] : memref<256x256xf32, #tpu.memory_space<vmem>>, vector<256x256xf32>
    %c0_5 = arith.constant 0 : index
    %c0_6 = arith.constant 0 : index
    %4 = vector.load %arg4[%c0_5, %c0_6] : memref<256x256xf32, #tpu.memory_space<vmem>>, vector<256x256xf32>
    %cst_7 = arith.constant dense<0.000000e+00> : vector<256x256xf32>
    %5 = tpu.matmul %3, %4, %cst_7 {dimension_numbers = #tpu.dot_dimension_numbers<[1], [0], [0], [1], [0, 0, 1, 1], [], []>} : vector<256x256xf32>, vector<256x256xf32>, vector<256x256xf32> -> vector<256x256xf32>
    %6 = arith.addf %2, %5 : vector<256x256xf32>
    %c0_8 = arith.constant 0 : index
    %c0_9 = arith.constant 0 : index
    %7 = vector.load %arg5[%c0_8, %c0_9] : memref<1x256xf32, #tpu.memory_space<vmem>>, vector<1x256xf32>
    %8 = vector.broadcast %7 : vector<1x256xf32> to vector<256x256xf32>
    %9 = arith.addf %6, %8 : vector<256x256xf32>
    %cst_10 = arith.constant 0.000000e+00 : f32
    %10 = vector.broadcast %cst_10 : f32 to vector<256x256xf32>
    %11 = arith.maximumf %9, %10 : vector<256x256xf32>
    %c0_11 = arith.constant 0 : index
    %c0_12 = arith.constant 0 : index
    %12 = vector.load %arg6[%c0_11, %c0_12] : memref<1x256xf32, #tpu.memory_space<vmem>>, vector<1x256xf32>
    %13 = vector.broadcast %12 : vector<1x256xf32> to vector<256x256xf32>
    %14 = arith.mulf %11, %13 : vector<256x256xf32>
    %cst_13 = arith.constant dense<0.000000e+00> : vector<256xf32>
    %15 = vector.multi_reduction <add>, %14, %cst_13 [1] : vector<256x256xf32> to vector<256xf32>
    %c0_14 = arith.constant 0 : index
    %c0_15 = arith.constant 0 : index
    %16 = memref.load %arg7[%c0_14, %c0_15] : memref<1x1xf32, #tpu.memory_space<smem>>
    %17 = vector.broadcast %16 : f32 to vector<256xf32>
    %18 = arith.addf %15, %17 : vector<256xf32>
    %19 = vector.shape_cast %18 : vector<256xf32> to vector<1x256xf32>
    %20 = arith.negf %19 : vector<1x256xf32>
    %21 = math.exp %20 : vector<1x256xf32>
    %cst_16 = arith.constant 1.000000e+00 : f32
    %22 = vector.broadcast %cst_16 : f32 to vector<1x256xf32>
    %23 = arith.addf %22, %21 : vector<1x256xf32>
    %24 = arith.divf %22, %23 : vector<1x256xf32>
    %c0_17 = arith.constant 0 : index
    %c0_18 = arith.constant 0 : index
    %25 = vector.load %arg8[%c0_17, %c0_18] : memref<1x256xf32, #tpu.memory_space<vmem>>, vector<1x256xf32>
    tpu.vector_store %arg8[%c0_17, %c0_18], %24 {strides = array<i32>} : memref<1x256xf32, #tpu.memory_space<vmem>>, vector<1x256xf32>,
    return
  }
  func.func @transform_0(%arg0: i32) -> (i32, i32) {
    %c0_i32 = arith.constant 0 : i32
    %c0_i32_0 = arith.constant 0 : i32
    return %arg0, %c0_i32 : i32, i32
  }
  func.func @transform_1(%arg0: i32) -> (i32, i32) {
    %c0_i32 = arith.constant 0 : i32
    %c0_i32_0 = arith.constant 0 : i32
    return %arg0, %c0_i32 : i32, i32
  }
  func.func @transform_2(%arg0: i32) -> (i32, i32) {
    %c0_i32 = arith.constant 0 : i32
    %c0_i32_0 = arith.constant 0 : i32
    %c0_i32_1 = arith.constant 0 : i32
    return %c0_i32, %c0_i32_0 : i32, i32
  }
  func.func @transform_3(%arg0: i32) -> (i32, i32) {
    %c0_i32 = arith.constant 0 : i32
    %c0_i32_0 = arith.constant 0 : i32
    %c0_i32_1 = arith.constant 0 : i32
    return %c0_i32, %c0_i32_0 : i32, i32
  }
  func.func @transform_4(%arg0: i32) -> (i32, i32) {
    %c0_i32 = arith.constant 0 : i32
    %c0_i32_0 = arith.constant 0 : i32
    %c0_i32_1 = arith.constant 0 : i32
    return %c0_i32, %c0_i32_0 : i32, i32
  }
  func.func @transform_5(%arg0: i32) -> (i32, i32) {
    %c0_i32 = arith.constant 0 : i32
    %c0_i32_0 = arith.constant 0 : i32
    %c0_i32_1 = arith.constant 0 : i32
    return %c0_i32, %c0_i32_0 : i32, i32
  }
  func.func @transform_6(%arg0: i32) -> (i32, i32) {
    %c0_i32 = arith.constant 0 : i32
    %c0_i32_0 = arith.constant 0 : i32
    %c0_i32_1 = arith.constant 0 : i32
    return %c0_i32, %c0_i32_0 : i32, i32
  }
  func.func @transform_7(%arg0: i32) -> (i32, i32) {
    %c0_i32 = arith.constant 0 : i32
    %c0_i32_0 = arith.constant 0 : i32
    return %c0_i32, %arg0 : i32, i32
  }
}

</mosaic_0001>

<llo_original>
// kernel: tpu_custom_call.1
$region0: #{tpu_custom_call.1}
  #allocation0 [shape = 'u32[]', space=smem, size = 0x4, offset = 0x4, fixed_abs, tag = 'smem constant byte address 0x4 - core index']
  #allocation1 [shape = 'u32[72,128]{1,0:T(1,128)}', space=vmem, size = 0x9000, scoped, tag = 'internal scratch']
  #allocation2 [shape = 'f32[1,1]{1,0:T(1,128)S(6)}', space=smem, size = 0x200, scoped, tag = 'scoped memory for tpu_custom_call.1']
  %s0 = inlined_call_operand.hbm [shape: f32[300,256], index: 0, kind: input, shape index: {}]
  %s1 = inlined_call_operand.hbm [shape: f32[300,256], index: 1, kind: input, shape index: {}]
  %s2 = inlined_call_operand.hbm [shape: f32[256,256], index: 2, kind: input, shape index: {}]
  %s3 = inlined_call_operand.hbm [shape: f32[256,256], index: 3, kind: input, shape index: {}]
  %s4 = inlined_call_operand.vmem [shape: f32[1,256], index: 4, kind: input, shape index: {}]
  %s5 = inlined_call_operand.vmem [shape: f32[1,256], index: 5, kind: input, shape index: {}]
  %s6 = inlined_call_operand.<no memory space> [shape: f32[1,1], index: 6, kind: input, shape index: {}]
  %s7 = inlined_call_operand.hbm [shape: f32[1,300], index: 7, kind: output, shape index: {}]
  %s8 = sld [smem:[#allocation0]]
  $region77: #{tpu_custom_call.1} parent=0
    _
  %s10 = ssub.s32 1, %s8
  %s11 = scalar_select 0, %s10, %s8
  %12 = sst [smem:[#allocation2]] %s6
  $region1: #{tpu_custom_call.1} parent=0
    #allocation3 [shape = 'u8[524288]{0}', space=vmem, size = 0x80000, scoped, tag = 'input window, operand 0']
    #allocation4 [shape = 's32[2]{0}', space=sflag, size = 0x8, scoped, tag = 'scoped memory for tpu_custom_call.1']
    #allocation5 [shape = 's32[2]{0}', space=sflag, size = 0x8, scoped, tag = 'scoped memory for tpu_custom_call.1']
    #allocation6 [shape = 'u8[524288]{0}', space=vmem, size = 0x80000, scoped, tag = 'input window, operand 1']
    #allocation7 [shape = 's32[2]{0}', space=sflag, size = 0x8, scoped, tag = 'scoped memory for tpu_custom_call.1']
    #allocation8 [shape = 'u8[262144]{0}', space=vmem, size = 0x40000, scoped, tag = 'input window, operand 2, single buffered']
    #allocation9 [shape = 'u8[262144]{0}', space=vmem, size = 0x40000, scoped, tag = 'input window, operand 3, single buffered']
    #allocation10 [shape = 's32[1]{0}', space=sflag, size = 0x4, scoped, tag = 'scoped memory for tpu_custom_call.1']
    #allocation11 [shape = 'u8[2048]{0}', space=vmem, size = 0x800, scoped, tag = 'output window, operand 0']
    %13 = vsyncpa [#allocation4], 0
    %s14 = scalar_lea.sflag [#allocation4], 1
    %15 = vsyncpa %s14, 0
    %16 = vsyncpa [#allocation7], 0
    %s17 = scalar_lea.sflag [#allocation7], 1
    %18 = vsyncpa %s17, 0
    %19 = vsyncpa [#allocation10], 0
    %20 = vsyncpa [#allocation5], 0
    %s21 = scalar_lea.sflag [#allocation5], 1
    %22 = vsyncpa %s21, 0
    loop: start=0, step=1, limit=4
    $region2: #{tpu_custom_call.1} parent=1 // loop_pre_header
      _
    $region3: #{tpu_custom_call.1} parent=1 // loop_header
      %s24 = sphi 0, %s28
      %p25 = scmp.ge.s32.totalorder %s24, 4
      %s34 = sphi 0, %s36
      %s37 = sphi 0, %s34
      %s38 = sphi 0, %s37
      %s54 = sphi 0, %s38
      %s60 = sphi 0, %s62
      %s63 = sphi 0, %s60
      %s64 = sphi 0, %s63
      %s80 = sphi 0, %s64
      %s84 = sphi 0, %s84
      %s86 = sphi 0, %s84
      %s87 = sphi 0, %s86
      %s101 = sphi 0, %s87
      %s105 = sphi 0, %s105
      %s107 = sphi 0, %s105
      %s108 = sphi 0, %s107
      %s122 = sphi 0, %s108
      %s126 = sphi 0, %s126
      %s128 = sphi 0, %s126
      %s129 = sphi 0, %s128
      %s143 = sphi 0, %s129
      %s147 = sphi 0, %s147
      %s149 = sphi 0, %s147
      %s150 = sphi 0, %s149
      %s164 = sphi 0, %s150
      %s168 = sphi 0, %s168
      %s170 = sphi 0, %s168
      %s171 = sphi 0, %s170
      %s185 = sphi 0, %s171
      %s191 = sphi 0, %s193
      %s194 = sphi 0, %s191
      %s195 = sphi 0, %s194
      %s211 = sphi 0, %s195
    $region4: #{tpu_custom_call.1} parent=1 // loop_header_branch
      %27 = sbr.rel (%p25) target = $region8
    $region5: #{tpu_custom_call.1} parent=1 // loop_body
      %s29 = ssub.s32 %s24, 1
      %s30 = ssub.s32 %s24, 2
      %s31 = sadd.s32 %s24, 1
      %s32 = ssub.s32 %s24, %s31
      %p33 = scmp.eq.s32.totalorder %s32, 0
      %s35 = sadd.s32 %s34, 1
      %s36 = scalar_select %p33, %s34, %s35
      %p39 = pneg %p33
      %p40 = scmp.eq.s32.totalorder %s24, 1
      %p41 = por %p39, %p40
      %p42 = scmp.ne.s32.totalorder %s34, %s37
      %p43 = scmp.eq.s32.totalorder %s24, 0
      %p44 = por %p42, %p43
      %p45 = scmp.ne.s32.totalorder %s34, %s37
      %p46 = scmp.eq.s32.totalorder %s29, 1
      %p47 = por %p45, %p46
      %p48 = scmp.ne.s32.totalorder %s37, %s38
      %p49 = scmp.eq.s32.totalorder %s29, 0
      %p50 = por %p48, %p49
      %p51 = scmp.ne.s32.totalorder %s37, %s38
      %p52 = scmp.eq.s32.totalorder %s30, 1
      %p53 = por %p51, %p52
      %p55 = scmp.ne.s32.totalorder %s38, %s54
      %p56 = scmp.eq.s32.totalorder %s30, 0
      %p57 = por %p55, %p56
      %s58 = ssub.s32 %s24, %s31
      %p59 = scmp.eq.s32.totalorder %s58, 0
      %s61 = sadd.s32 %s60, 1
      %s62 = scalar_select %p59, %s60, %s61
      %p65 = pneg %p59
      %p66 = scmp.eq.s32.totalorder %s24, 1
      %p67 = por %p65, %p66
      %p68 = scmp.ne.s32.totalorder %s60, %s63
      %p69 = scmp.eq.s32.totalorder %s24, 0
      %p70 = por %p68, %p69
      %p71 = scmp.ne.s32.totalorder %s60, %s63
      %p72 = scmp.eq.s32.totalorder %s29, 1
      %p73 = por %p71, %p72
      %p74 = scmp.ne.s32.totalorder %s63, %s64
      %p75 = scmp.eq.s32.totalorder %s29, 0
      %p76 = por %p74, %p75
      %p77 = scmp.ne.s32.totalorder %s63, %s64
      %p78 = scmp.eq.s32.totalorder %s30, 1
      %p79 = por %p77, %p78
      %p81 = scmp.ne.s32.totalorder %s64, %s80
      %p82 = scmp.eq.s32.totalorder %s30, 0
      %p83 = por %p81, %p82
      %s85 = sadd.s32 %s84, 1
      %p88 = scmp.eq.s32.totalorder %s24, 1
      %p89 = scmp.ne.s32.totalorder %s84, %s86
      %p90 = scmp.eq.s32.totalorder %s24, 0
      %p91 = por %p89, %p90
      %p92 = scmp.ne.s32.totalorder %s84, %s86
      %p93 = scmp.eq.s32.totalorder %s29, 1
      %p94 = por %p92, %p93
      %p95 = scmp.ne.s32.totalorder %s86, %s87
      %p96 = scmp.eq.s32.totalorder %s29, 0
      %p97 = por %p95, %p96
      %p98 = scmp.ne.s32.totalorder %s86, %s87
      %p99 = scmp.eq.s32.totalorder %s30, 1
      %p100 = por %p98, %p99
      %p102 = scmp.ne.s32.totalorder %s87, %s101
      %p103 = scmp.eq.s32.totalorder %s30, 0
      %p104 = por %p102, %p103
      %s106 = sadd.s32 %s105, 1
      %p109 = scmp.eq.s32.totalorder %s24, 1
      %p110 = scmp.ne.s32.totalorder %s105, %s107
      %p111 = scmp.eq.s32.totalorder %s24, 0
      %p112 = por %p110, %p111
      %p113 = scmp.ne.s32.totalorder %s105, %s107
      %p114 = scmp.eq.s32.totalorder %s29, 1
      %p115 = por %p113, %p114
      %p116 = scmp.ne.s32.totalorder %s107, %s108
      %p117 = scmp.eq.s32.totalorder %s29, 0
      %p118 = por %p116, %p117
      %p119 = scmp.ne.s32.totalorder %s107, %s108
      %p120 = scmp.eq.s32.totalorder %s30, 1
      %p121 = por %p119, %p120
      %p123 = scmp.ne.s32.totalorder %s108, %s122
      %p124 = scmp.eq.s32.totalorder %s30, 0
      %p125 = por %p123, %p124
      %s127 = sadd.s32 %s126, 1
      %p130 = scmp.eq.s32.totalorder %s24, 1
      %p131 = scmp.ne.s32.totalorder %s126, %s128
      %p132 = scmp.eq.s32.totalorder %s24, 0
      %p133 = por %p131, %p132
      %p134 = scmp.ne.s32.totalorder %s126, %s128
      %p135 = scmp.eq.s32.totalorder %s29, 1
      %p136 = por %p134, %p135
      %p137 = scmp.ne.s32.totalorder %s128, %s129
      %p138 = scmp.eq.s32.totalorder %s29, 0
      %p139 = por %p137, %p138
      %p140 = scmp.ne.s32.totalorder %s128, %s129
      %p141 = scmp.eq.s32.totalorder %s30, 1
      %p142 = por %p140, %p141
      %p144 = scmp.ne.s32.totalorder %s129, %s143
      %p145 = scmp.eq.s32.totalorder %s30, 0
      %p146 = por %p144, %p145
      %s148 = sadd.s32 %s147, 1
      %p151 = scmp.eq.s32.totalorder %s24, 1
      %p152 = scmp.ne.s32.totalorder %s147, %s149
      %p153 = scmp.eq.s32.totalorder %s24, 0
      %p154 = por %p152, %p153
      %p155 = scmp.ne.s32.totalorder %s147, %s149
      %p156 = scmp.eq.s32.totalorder %s29, 1
      %p157 = por %p155, %p156
      %p158 = scmp.ne.s32.totalorder %s149, %s150
      %p159 = scmp.eq.s32.totalorder %s29, 0
      %p160 = por %p158, %p159
      %p161 = scmp.ne.s32.totalorder %s149, %s150
      %p162 = scmp.eq.s32.totalorder %s30, 1
      %p163 = por %p161, %p162
      %p165 = scmp.ne.s32.totalorder %s150, %s164
      %p166 = scmp.eq.s32.totalorder %s30, 0
      %p167 = por %p165, %p166
      %s169 = sadd.s32 %s168, 1
      %p172 = scmp.eq.s32.totalorder %s24, 1
      %p173 = scmp.ne.s32.totalorder %s168, %s170
      %p174 = scmp.eq.s32.totalorder %s24, 0
      %p175 = por %p173, %p174
      %p176 = scmp.ne.s32.totalorder %s168, %s170
      %p177 = scmp.eq.s32.totalorder %s29, 1
      %p178 = por %p176, %p177
      %p179 = scmp.ne.s32.totalorder %s170, %s171
      %p180 = scmp.eq.s32.totalorder %s29, 0
      %p181 = por %p179, %p180
      %p182 = scmp.ne.s32.totalorder %s170, %s171
      %p183 = scmp.eq.s32.totalorder %s30, 1
      %p184 = por %p182, %p183
      %p186 = scmp.ne.s32.totalorder %s171, %s185
      %p187 = scmp.eq.s32.totalorder %s30, 0
      %p188 = por %p186, %p187
      %s189 = ssub.s32 %s24, %s31
      %p190 = scmp.eq.s32.totalorder %s189, 0
      %s192 = sadd.s32 %s191, 1
      %s193 = scalar_select %p190, %s191, %s192
      %p196 = pneg %p190
      %p197 = scmp.eq.s32.totalorder %s24, 1
      %p198 = por %p196, %p197
      %p199 = scmp.ne.s32.totalorder %s191, %s194
      %p200 = scmp.eq.s32.totalorder %s24, 0
      %p201 = por %p199, %p200
      %p202 = scmp.ne.s32.totalorder %s191, %s194
      %p203 = scmp.eq.s32.totalorder %s29, 1
      %p204 = por %p202, %p203
      %p205 = scmp.ne.s32.totalorder %s194, %s195
      %p206 = scmp.eq.s32.totalorder %s29, 0
      %p207 = por %p205, %p206
      %p208 = scmp.ne.s32.totalorder %s194, %s195
      %p209 = scmp.eq.s32.totalorder %s30, 1
      %p210 = por %p208, %p209
      %p212 = scmp.ne.s32.totalorder %s195, %s211
      %p213 = scmp.eq.s32.totalorder %s30, 0
      %p214 = por %p212, %p213
      %p215 = scmp.le.s32.totalorder 1, %s24
      %p216 = scmp.lt.s32.totalorder %s24, 3
      %p217 = pnand %p215, %p216
      %p218 = pneg %p217
      // Predicated region
      $region9: #{tpu_custom_call.1} parent=5 // pred_check
        _
      $region10: #{tpu_custom_call.1} parent=5 // pred_check_branch
        %220 = sbr.rel (%p217) target = $region12
      $region11: #{tpu_custom_call.1} parent=5 // pred_region
        %s221 = ssub.s32 %s24, 1
        // Predicated region
        $region13: #{tpu_custom_call.1} parent=11 // pred_check
          %p222 = pneg %p97
        $region14: #{tpu_custom_call.1} parent=11 // pred_check_branch
          %224 = sbr.rel (%p222) target = $region16
        $region15: #{tpu_custom_call.1} parent=11 // pred_region
          %226 = vsyncadd [#allocation7], 0
          %s227 = sshll.u32 %s2, 4
          %s228 = int_to_ptr.hbm [resolvable:$true] %s227
          %s229 = sshll.u32 [#allocation8], 4
          %s230 = int_to_ptr.vmem [resolvable:$true] %s229
          %235 = dma.hbm_to_vmem [thread:$0]  %s228, 8192, %s230, [#allocation7], 256, 256, 16
        $region16: #{tpu_custom_call.1} parent=11 // pred_fallthru
          _
        // Predicated region
        $region17: #{tpu_custom_call.1} parent=11 // pred_check
          %p236 = pneg %p118
        $region18: #{tpu_custom_call.1} parent=11 // pred_check_branch
          %238 = sbr.rel (%p236) target = $region20
        $region19: #{tpu_custom_call.1} parent=11 // pred_region
          %240 = vsyncadd [#allocation10], 0
          %s241 = sshll.u32 %s3, 4
          %s242 = int_to_ptr.hbm [resolvable:$true] %s241
          %s243 = sshll.u32 [#allocation9], 4
          %s244 = int_to_ptr.vmem [resolvable:$true] %s243
          %249 = dma.hbm_to_vmem [thread:$0]  %s242, 8192, %s244, [#allocation10], 256, 256, 16
        $region20: #{tpu_custom_call.1} parent=11 // pred_fallthru
          _
        // Predicated region
        $region21: #{tpu_custom_call.1} parent=11 // pred_check
          %p250 = pneg %p139
        $region22: #{tpu_custom_call.1} parent=11 // pred_check_branch
          %252 = sbr.rel (%p250) target = $region24
        $region23: #{tpu_custom_call.1} parent=11 // pred_region
          _
        $region24: #{tpu_custom_call.1} parent=11 // pred_fallthru
          _
        // Predicated region
        $region25: #{tpu_custom_call.1} parent=11 // pred_check
          %p253 = pneg %p160
        $region26: #{tpu_custom_call.1} parent=11 // pred_check_branch
          %255 = sbr.rel (%p253) target = $region28
        $region27: #{tpu_custom_call.1} parent=11 // pred_region
          _
        $region28: #{tpu_custom_call.1} parent=11 // pred_fallthru
          _
        // Predicated region
        $region29: #{tpu_custom_call.1} parent=11 // pred_check
          %p256 = pneg %p181
        $region30: #{tpu_custom_call.1} parent=11 // pred_check_branch
          %258 = sbr.rel (%p256) target = $region32
        $region31: #{tpu_custom_call.1} parent=11 // pred_region
          _
        $region32: #{tpu_custom_call.1} parent=11 // pred_fallthru
          _
      $region12: #{tpu_custom_call.1} parent=5 // pred_fallthru
        _
      %p259 = scmp.lt.s32.totalorder %s24, 2
      // Predicated region
      $region33: #{tpu_custom_call.1} parent=5 // pred_check
        %p260 = pneg %p259
      $region34: #{tpu_custom_call.1} parent=5 // pred_check_branch
        %262 = sbr.rel (%p260) target = $region36
      $region35: #{tpu_custom_call.1} parent=5 // pred_region
        // Predicated region
        $region37: #{tpu_custom_call.1} parent=35 // pred_check
          %p263 = pneg %p44
        $region38: #{tpu_custom_call.1} parent=35 // pred_check_branch
          %265 = sbr.rel (%p263) target = $region40
        $region39: #{tpu_custom_call.1} parent=35 // pred_region
          %s266 = sand.u32 %s34, 1
          %s267 = scalar_lea.sflag [#allocation4], %s266
          %s268 = sand.u32 %s34, 1
          %s269 = smul.addr %s268, 512
          %s270 = scalar_lea.vmem [#allocation3], %s269
          %s271 = smul.u32 32, %s24
          %s272 = ssub.s32 38, %s271
          %p273 = scmp.lt.s32.totalorder %s272, 32
          %s274 = scalar_select %p273, %s272, 32
          %s275 = smul.u32 8, %s274
          %s276 = smul.u32 %s275, 2
          %s277 = ssub.s32 512, %s276
          %s278 = sshll.u32 %s277, 4
          %279 = vsyncadd %s267, %s278
          %p280 = scmp.ne.s32.totalorder 0, %s276
          %s281 = smul.addr %s271, 2
          %s282 = smul.addr %s281, 8
          %s283 = scalar_lea.hbm %s0, %s282
          %s284 = smul.u32 16, %s274
          %s285 = sshll.u32 %s283, 4
          %s286 = int_to_ptr.hbm [resolvable:$true] %s285
          %s287 = sshll.u32 %s270, 4
          %s288 = int_to_ptr.vmem [resolvable:$true] %s287
          %s289 = sshll.u32 %s284, 4
          %293 = dma.hbm_to_vmem [thread:$0]  (%p280), %s286, %s289, %s288, %s267, 256, 256, 16
        $region40: #{tpu_custom_call.1} parent=35 // pred_fallthru
          _
        // Predicated region
        $region41: #{tpu_custom_call.1} parent=35 // pred_check
          %p294 = pneg %p70
        $region42: #{tpu_custom_call.1} parent=35 // pred_check_branch
          %296 = sbr.rel (%p294) target = $region44
        $region43: #{tpu_custom_call.1} parent=35 // pred_region
          %s297 = sand.u32 %s24, 1
          %s298 = scalar_lea.sflag [#allocation7], %s297
          %s299 = sand.u32 %s60, 1
          %s300 = smul.addr %s299, 512
          %s301 = scalar_lea.vmem [#allocation6], %s300
          %s302 = smul.u32 32, %s24
          %s303 = ssub.s32 38, %s302
          %p304 = scmp.lt.s32.totalorder %s303, 32
          %s305 = scalar_select %p304, %s303, 32
          %s306 = smul.u32 8, %s305
          %s307 = smul.u32 %s306, 2
          %s308 = ssub.s32 512, %s307
          %s309 = sshll.u32 %s308, 4
          %310 = vsyncadd %s298, %s309
          %p311 = scmp.ne.s32.totalorder 0, %s307
          %s312 = smul.addr %s302, 2
          %s313 = smul.addr %s312, 8
          %s314 = scalar_lea.hbm %s1, %s313
          %s315 = smul.u32 16, %s305
          %s316 = sshll.u32 %s314, 4
          %s317 = int_to_ptr.hbm [resolvable:$true] %s316
          %s318 = sshll.u32 %s301, 4
          %s319 = int_to_ptr.vmem [resolvable:$true] %s318
          %s320 = sshll.u32 %s315, 4
          %324 = dma.hbm_to_vmem [thread:$0]  (%p311), %s317, %s320, %s319, %s298, 256, 256, 16
        $region44: #{tpu_custom_call.1} parent=35 // pred_fallthru
          _
      $region36: #{tpu_custom_call.1} parent=5 // pred_fallthru
        _
      %p325 = scmp.le.s32.totalorder 1, %s24
      %p326 = scmp.lt.s32.totalorder %s24, 3
      %p327 = pnand %p325, %p326
      %p328 = pneg %p327
      // Predicated region
      $region45: #{tpu_custom_call.1} parent=5 // pred_check
        _
      $region46: #{tpu_custom_call.1} parent=5 // pred_check_branch
        %330 = sbr.rel (%p327) target = $region48
      $region47: #{tpu_custom_call.1} parent=5 // pred_region
        %s331 = ssub.s32 %s24, 1
        %s332 = sand.u32 %s37, 1
        %s333 = scalar_lea.sflag [#allocation4], %s332
        %s334 = sand.u32 %s37, 1
        %s335 = smul.addr %s334, 512
        %s336 = scalar_lea.vmem [#allocation3], %s335
        // Predicated region
        $region49: #{tpu_custom_call.1} parent=47 // pred_check
          %p337 = pneg %p50
        $region50: #{tpu_custom_call.1} parent=47 // pred_check_branch
          %339 = sbr.rel (%p337) target = $region52
        $region51: #{tpu_custom_call.1} parent=47 // pred_region
          %341 = dma.done %s333, 8192
        $region52: #{tpu_custom_call.1} parent=47 // pred_fallthru
          _
        %s342 = sand.u32 %s29, 1
        %s343 = scalar_lea.sflag [#allocation7], %s342
        %s344 = sand.u32 %s63, 1
        %s345 = smul.addr %s344, 512
        %s346 = scalar_lea.vmem [#allocation6], %s345
        // Predicated region
        $region53: #{tpu_custom_call.1} parent=47 // pred_check
          %p347 = pneg %p76
        $region54: #{tpu_custom_call.1} parent=47 // pred_check_branch
          %349 = sbr.rel (%p347) target = $region56
        $region55: #{tpu_custom_call.1} parent=47 // pred_region
          %351 = dma.done %s343, 8192
        $region56: #{tpu_custom_call.1} parent=47 // pred_fallthru
          _
        // Predicated region
        $region57: #{tpu_custom_call.1} parent=47 // pred_check
          %p352 = pneg %p97
        $region58: #{tpu_custom_call.1} parent=47 // pred_check_branch
          %354 = sbr.rel (%p352) target = $region60
        $region59: #{tpu_custom_call.1} parent=47 // pred_region
          %356 = dma.done [#allocation7], 8192
        $region60: #{tpu_custom_call.1} parent=47 // pred_fallthru
          _
        // Predicated region
        $region61: #{tpu_custom_call.1} parent=47 // pred_check
          %p357 = pneg %p118
        $region62: #{tpu_custom_call.1} parent=47 // pred_check_branch
          %359 = sbr.rel (%p357) target = $region64
        $region63: #{tpu_custom_call.1} parent=47 // pred_region
          %361 = dma.done [#allocation10], 8192
        $region64: #{tpu_custom_call.1} parent=47 // pred_fallthru
          _
        %s362 = sand.u32 %s37, 1
        %s363 = scalar_lea.sflag [#allocation4], %s362
        %s364 = sand.u32 %s37, 1
        %s365 = smul.addr %s364, 512
        %s366 = scalar_lea.vmem [#allocation3], %s365
        %p367 = pneg %p50
        %p368 = pneg %p47
        %s369 = sand.u32 %s29, 1
        %s370 = scalar_lea.sflag [#allocation7], %s369
        %s371 = sand.u32 %s63, 1
        %s372 = smul.addr %s371, 512
        %s373 = scalar_lea.vmem [#allocation6], %s372
        %p374 = pneg %p76
        %p375 = pneg %p73
        %p376 = pneg %p97
        %p377 = pneg %p94
        %p378 = pneg %p118
        %p379 = pneg %p115
        %p380 = pneg %p139
        %p381 = pneg %p136
        %p382 = pneg %p160
        %p383 = pneg %p157
        %p384 = pneg %p181
        %p385 = pneg %p178
        %p386 = pneg %p207
        %p387 = pneg %p204
        %s388 = sand.u32 %s194, 1
        %s389 = scalar_lea.sflag [#allocation5], %s388
        %s390 = sand.u32 %s194, 1
        %s391 = smul.addr %s390, 2
        %s392 = scalar_lea.vmem [#allocation11], %s391
        %s393 = smul.u32 32, %s29
        %s394 = ssub.s32 38, %s393
        %p395 = scmp.lt.s32.totalorder %s394, 32
        %s396 = scalar_select %p395, %s394, 32
        %s397 = smul.u32 8, %s396
        %s398 = smul.u32 %s397, 2
        %s399 = smul.u32 32, %s29
        %s400 = ssub.s32 38, %s399
        %p401 = scmp.lt.s32.totalorder %s400, 32
        %s402 = scalar_select %p401, %s400, 32
        %s403 = smul.u32 8, %s402
        %s404 = smul.u32 %s403, 2
        %s405 = smul.u32 2, %s29
        %s406 = ssub.s32 3, %s405
        %p407 = scmp.lt.s32.totalorder %s406, 2
        %s408 = scalar_select %p407, %s406, 2
        %v409 = vld [vmem:[%s336] sm:$0xff]
        %v410 = vld [vmem:[%s336 + $0x8] sm:$0xff]
        %v411 = vld [vmem:[%s336 + $0x10] sm:$0xff]
        %v412 = vld [vmem:[%s336 + $0x18] sm:$0xff]
        %v413 = vld [vmem:[%s336 + $0x20] sm:$0xff]
        %v414 = vld [vmem:[%s336 + $0x28] sm:$0xff]
        %v415 = vld [vmem:[%s336 + $0x30] sm:$0xff]
        %v416 = vld [vmem:[%s336 + $0x38] sm:$0xff]
        %v417 = vld [vmem:[%s336 + $0x40] sm:$0xff]
        %v418 = vld [vmem:[%s336 + $0x48] sm:$0xff]
        %v419 = vld [vmem:[%s336 + $0x50] sm:$0xff]
        %v420 = vld [vmem:[%s336 + $0x58] sm:$0xff]
        %v421 = vld [vmem:[%s336 + $0x60] sm:$0xff]
        %v422 = vld [vmem:[%s336 + $0x68] sm:$0xff]
        %v423 = vld [vmem:[%s336 + $0x70] sm:$0xff]
        %v424 = vld [vmem:[%s336 + $0x78] sm:$0xff]
        %v425 = vld [vmem:[%s336 + $0x80] sm:$0xff]
        %v426 = vld [vmem:[%s336 + $0x88] sm:$0xff]
        %v427 = vld [vmem:[%s336 + $0x90] sm:$0xff]
        %v428 = vld [vmem:[%s336 + $0x98] sm:$0xff]
        %v429 = vld [vmem:[%s336 + $0xa0] sm:$0xff]
        %v430 = vld [vmem:[%s336 + $0xa8] sm:$0xff]
        %v431 = vld [vmem:[%s336 + $0xb0] sm:$0xff]
        %v432 = vld [vmem:[%s336 + $0xb8] sm:$0xff]
        %v433 = vld [vmem:[%s336 + $0xc0] sm:$0xff]
        %v434 = vld [vmem:[%s336 + $0xc8] sm:$0xff]
        %v435 = vld [vmem:[%s336 + $0xd0] sm:$0xff]
        %v436 = vld [vmem:[%s336 + $0xd8] sm:$0xff]
        %v437 = vld [vmem:[%s336 + $0xe0] sm:$0xff]
        %v438 = vld [vmem:[%s336 + $0xe8] sm:$0xff]
        %v439 = vld [vmem:[%s336 + $0xf0] sm:$0xff]
        %v440 = vld [vmem:[%s336 + $0xf8] sm:$0xff]
        %v441 = vld [vmem:[%s336 + $0x100] sm:$0xff]
        %v442 = vld [vmem:[%s336 + $0x108] sm:$0xff]
        %v443 = vld [vmem:[%s336 + $0x110] sm:$0xff]
        %v444 = vld [vmem:[%s336 + $0x118] sm:$0xff]
        %v445 = vld [vmem:[%s336 + $0x120] sm:$0xff]
        %v446 = vld [vmem:[%s336 + $0x128] sm:$0xff]
        %v447 = vld [vmem:[%s336 + $0x130] sm:$0xff]
        %v448 = vld [vmem:[%s336 + $0x138] sm:$0xff]
        %v449 = vld [vmem:[%s336 + $0x140] sm:$0xff]
        %v450 = vld [vmem:[%s336 + $0x148] sm:$0xff]
        %v451 = vld [vmem:[%s336 + $0x150] sm:$0xff]
        %v452 = vld [vmem:[%s336 + $0x158] sm:$0xff]
        %v453 = vld [vmem:[%s336 + $0x160] sm:$0xff]
        %v454 = vld [vmem:[%s336 + $0x168] sm:$0xff]
        %v455 = vld [vmem:[%s336 + $0x170] sm:$0xff]
        %v456 = vld [vmem:[%s336 + $0x178] sm:$0xff]
        %v457 = vld [vmem:[%s336 + $0x180] sm:$0xff]
        %v458 = vld [vmem:[%s336 + $0x188] sm:$0xff]
        %v459 = vld [vmem:[%s336 + $0x190] sm:$0xff]
        %v460 = vld [vmem:[%s336 + $0x198] sm:$0xff]
        %v461 = vld [vmem:[%s336 + $0x1a0] sm:$0xff]
        %v462 = vld [vmem:[%s336 + $0x1a8] sm:$0xff]
        %v463 = vld [vmem:[%s336 + $0x1b0] sm:$0xff]
        %v464 = vld [vmem:[%s336 + $0x1b8] sm:$0xff]
        %v465 = vld [vmem:[%s336 + $0x1c0] sm:$0xff]
        %v466 = vld [vmem:[%s336 + $0x1c8] sm:$0xff]
        %v467 = vld [vmem:[%s336 + $0x1d0] sm:$0xff]
        %v468 = vld [vmem:[%s336 + $0x1d8] sm:$0xff]
        %v469 = vld [vmem:[%s336 + $0x1e0] sm:$0xff]
        %v470 = vld [vmem:[%s336 + $0x1e8] sm:$0xff]
        %v471 = vld [vmem:[%s336 + $0x1f0] sm:$0xff]
        %v472 = vld [vmem:[%s336 + $0x1f8] sm:$0xff]
        %v473 = vld [vmem:[#allocation8] sm:$0xff]
        %v474 = vld [vmem:[#allocation8 + $0x8] sm:$0xff]
        %v475 = vld [vmem:[#allocation8 + $0x10] sm:$0xff]
        %v476 = vld [vmem:[#allocation8 + $0x18] sm:$0xff]
        %v477 = vld [vmem:[#allocation8 + $0x20] sm:$0xff]
        %v478 = vld [vmem:[#allocation8 + $0x28] sm:$0xff]
        %v479 = vld [vmem:[#allocation8 + $0x30] sm:$0xff]
        %v480 = vld [vmem:[#allocation8 + $0x38] sm:$0xff]
        %v481 = vld [vmem:[#allocation8 + $0x40] sm:$0xff]
        %v482 = vld [vmem:[#allocation8 + $0x48] sm:$0xff]
        %v483 = vld [vmem:[#allocation8 + $0x50] sm:$0xff]
        %v484 = vld [vmem:[#allocation8 + $0x58] sm:$0xff]
        %v485 = vld [vmem:[#allocation8 + $0x60] sm:$0xff]
        %v486 = vld [vmem:[#allocation8 + $0x68] sm:$0xff]
        %v487 = vld [vmem:[#allocation8 + $0x70] sm:$0xff]
        %v488 = vld [vmem:[#allocation8 + $0x78] sm:$0xff]
        %v489 = vld [vmem:[#allocation8 + $0x80] sm:$0xff]
        %v490 = vld [vmem:[#allocation8 + $0x88] sm:$0xff]
        %v491 = vld [vmem:[#allocation8 + $0x90] sm:$0xff]
        %v492 = vld [vmem:[#allocation8 + $0x98] sm:$0xff]
        %v493 = vld [vmem:[#allocation8 + $0xa0] sm:$0xff]
        %v494 = vld [vmem:[#allocation8 + $0xa8] sm:$0xff]
        %v495 = vld [vmem:[#allocation8 + $0xb0] sm:$0xff]
        %v496 = vld [vmem:[#allocation8 + $0xb8] sm:$0xff]
        %v497 = vld [vmem:[#allocation8 + $0xc0] sm:$0xff]
        %v498 = vld [vmem:[#allocation8 + $0xc8] sm:$0xff]
        %v499 = vld [vmem:[#allocation8 + $0xd0] sm:$0xff]
        %v500 = vld [vmem:[#allocation8 + $0xd8] sm:$0xff]
        %v501 = vld [vmem:[#allocation8 + $0xe0] sm:$0xff]
        %v502 = vld [vmem:[#allocation8 + $0xe8] sm:$0xff]
        %v503 = vld [vmem:[#allocation8 + $0xf0] sm:$0xff]
        %v504 = vld [vmem:[#allocation8 + $0xf8] sm:$0xff]
        %v505 = vld [vmem:[#allocation8 + $0x100] sm:$0xff]
        %v506 = vld [vmem:[#allocation8 + $0x108] sm:$0xff]
        %v507 = vld [vmem:[#allocation8 + $0x110] sm:$0xff]
        %v508 = vld [vmem:[#allocation8 + $0x118] sm:$0xff]
        %v509 = vld [vmem:[#allocation8 + $0x120] sm:$0xff]
        %v510 = vld [vmem:[#allocation8 + $0x128] sm:$0xff]
        %v511 = vld [vmem:[#allocation8 + $0x130] sm:$0xff]
        %v512 = vld [vmem:[#allocation8 + $0x138] sm:$0xff]
        %v513 = vld [vmem:[#allocation8 + $0x140] sm:$0xff]
        %v514 = vld [vmem:[#allocation8 + $0x148] sm:$0xff]
        %v515 = vld [vmem:[#allocation8 + $0x150] sm:$0xff]
        %v516 = vld [vmem:[#allocation8 + $0x158] sm:$0xff]
        %v517 = vld [vmem:[#allocation8 + $0x160] sm:$0xff]
        %v518 = vld [vmem:[#allocation8 + $0x168] sm:$0xff]
        %v519 = vld [vmem:[#allocation8 + $0x170] sm:$0xff]
        %v520 = vld [vmem:[#allocation8 + $0x178] sm:$0xff]
        %v521 = vld [vmem:[#allocation8 + $0x180] sm:$0xff]
        %v522 = vld [vmem:[#allocation8 + $0x188] sm:$0xff]
        %v523 = vld [vmem:[#allocation8 + $0x190] sm:$0xff]
        %v524 = vld [vmem:[#allocation8 + $0x198] sm:$0xff]
        %v525 = vld [vmem:[#allocation8 + $0x1a0] sm:$0xff]
        %v526 = vld [vmem:[#allocation8 + $0x1a8] sm:$0xff]
        %v527 = vld [vmem:[#allocation8 + $0x1b0] sm:$0xff]
        %v528 = vld [vmem:[#allocation8 + $0x1b8] sm:$0xff]
        %v529 = vld [vmem:[#allocation8 + $0x1c0] sm:$0xff]
        %v530 = vld [vmem:[#allocation8 + $0x1c8] sm:$0xff]
        %v531 = vld [vmem:[#allocation8 + $0x1d0] sm:$0xff]
        %v532 = vld [vmem:[#allocation8 + $0x1d8] sm:$0xff]
        %v533 = vld [vmem:[#allocation8 + $0x1e0] sm:$0xff]
        %v534 = vld [vmem:[#allocation8 + $0x1e8] sm:$0xff]
        %v535 = vld [vmem:[#allocation8 + $0x1f0] sm:$0xff]
        %v536 = vld [vmem:[#allocation8 + $0x1f8] sm:$0xff]
        %v537 = vld [vmem:[%s346] sm:$0xff]
        %v538 = vld [vmem:[%s346 + $0x8] sm:$0xff]
        %v539 = vld [vmem:[%s346 + $0x10] sm:$0xff]
        %v540 = vld [vmem:[%s346 + $0x18] sm:$0xff]
        %v541 = vld [vmem:[%s346 + $0x20] sm:$0xff]
        %v542 = vld [vmem:[%s346 + $0x28] sm:$0xff]
        %v543 = vld [vmem:[%s346 + $0x30] sm:$0xff]
        %v544 = vld [vmem:[%s346 + $0x38] sm:$0xff]
        %v545 = vld [vmem:[%s346 + $0x40] sm:$0xff]
        %v546 = vld [vmem:[%s346 + $0x48] sm:$0xff]
        %v547 = vld [vmem:[%s346 + $0x50] sm:$0xff]
        %v548 = vld [vmem:[%s346 + $0x58] sm:$0xff]
        %v549 = vld [vmem:[%s346 + $0x60] sm:$0xff]
        %v550 = vld [vmem:[%s346 + $0x68] sm:$0xff]
        %v551 = vld [vmem:[%s346 + $0x70] sm:$0xff]
        %v552 = vld [vmem:[%s346 + $0x78] sm:$0xff]
        %v553 = vld [vmem:[%s346 + $0x80] sm:$0xff]
        %v554 = vld [vmem:[%s346 + $0x88] sm:$0xff]
        %v555 = vld [vmem:[%s346 + $0x90] sm:$0xff]
        %v556 = vld [vmem:[%s346 + $0x98] sm:$0xff]
        %v557 = vld [vmem:[%s346 + $0xa0] sm:$0xff]
        %v558 = vld [vmem:[%s346 + $0xa8] sm:$0xff]
        %v559 = vld [vmem:[%s346 + $0xb0] sm:$0xff]
        %v560 = vld [vmem:[%s346 + $0xb8] sm:$0xff]
        %v561 = vld [vmem:[%s346 + $0xc0] sm:$0xff]
        %v562 = vld [vmem:[%s346 + $0xc8] sm:$0xff]
        %v563 = vld [vmem:[%s346 + $0xd0] sm:$0xff]
        %v564 = vld [vmem:[%s346 + $0xd8] sm:$0xff]
        %v565 = vld [vmem:[%s346 + $0xe0] sm:$0xff]
        %v566 = vld [vmem:[%s346 + $0xe8] sm:$0xff]
        %v567 = vld [vmem:[%s346 + $0xf0] sm:$0xff]
        %v568 = vld [vmem:[%s346 + $0xf8] sm:$0xff]
        %v569 = vld [vmem:[%s346 + $0x100] sm:$0xff]
        %v570 = vld [vmem:[%s346 + $0x108] sm:$0xff]
        %v571 = vld [vmem:[%s346 + $0x110] sm:$0xff]
        %v572 = vld [vmem:[%s346 + $0x118] sm:$0xff]
        %v573 = vld [vmem:[%s346 + $0x120] sm:$0xff]
        %v574 = vld [vmem:[%s346 + $0x128] sm:$0xff]
        %v575 = vld [vmem:[%s346 + $0x130] sm:$0xff]
        %v576 = vld [vmem:[%s346 + $0x138] sm:$0xff]
        %v577 = vld [vmem:[%s346 + $0x140] sm:$0xff]
        %v578 = vld [vmem:[%s346 + $0x148] sm:$0xff]
        %v579 = vld [vmem:[%s346 + $0x150] sm:$0xff]
        %v580 = vld [vmem:[%s346 + $0x158] sm:$0xff]
        %v581 = vld [vmem:[%s346 + $0x160] sm:$0xff]
        %v582 = vld [vmem:[%s346 + $0x168] sm:$0xff]
        %v583 = vld [vmem:[%s346 + $0x170] sm:$0xff]
        %v584 = vld [vmem:[%s346 + $0x178] sm:$0xff]
        %v585 = vld [vmem:[%s346 + $0x180] sm:$0xff]
        %v586 = vld [vmem:[%s346 + $0x188] sm:$0xff]
        %v587 = vld [vmem:[%s346 + $0x190] sm:$0xff]
        %v588 = vld [vmem:[%s346 + $0x198] sm:$0xff]
        %v589 = vld [vmem:[%s346 + $0x1a0] sm:$0xff]
        %v590 = vld [vmem:[%s346 + $0x1a8] sm:$0xff]
        %v591 = vld [vmem:[%s346 + $0x1b0] sm:$0xff]
        %v592 = vld [vmem:[%s346 + $0x1b8] sm:$0xff]
        %v593 = vld [vmem:[%s346 + $0x1c0] sm:$0xff]
        %v594 = vld [vmem:[%s346 + $0x1c8] sm:$0xff]
        %v595 = vld [vmem:[%s346 + $0x1d0] sm:$0xff]
        %v596 = vld [vmem:[%s346 + $0x1d8] sm:$0xff]
        %v597 = vld [vmem:[%s346 + $0x1e0] sm:$0xff]
        %v598 = vld [vmem:[%s346 + $0x1e8] sm:$0xff]
        %v599 = vld [vmem:[%s346 + $0x1f0] sm:$0xff]
        %v600 = vld [vmem:[%s346 + $0x1f8] sm:$0xff]
        %v601 = vld [vmem:[#allocation9] sm:$0xff]
        %v602 = vld [vmem:[#allocation9 + $0x8] sm:$0xff]
        %v603 = vld [vmem:[#allocation9 + $0x10] sm:$0xff]
        %v604 = vld [vmem:[#allocation9 + $0x18] sm:$0xff]
        %v605 = vld [vmem:[#allocation9 + $0x20] sm:$0xff]
        %v606 = vld [vmem:[#allocation9 + $0x28] sm:$0xff]
        %v607 = vld [vmem:[#allocation9 + $0x30] sm:$0xff]
        %v608 = vld [vmem:[#allocation9 + $0x38] sm:$0xff]
        %v609 = vld [vmem:[#allocation9 + $0x40] sm:$0xff]
        %v610 = vld [vmem:[#allocation9 + $0x48] sm:$0xff]
        %v611 = vld [vmem:[#allocation9 + $0x50] sm:$0xff]
        %v612 = vld [vmem:[#allocation9 + $0x58] sm:$0xff]
        %v613 = vld [vmem:[#allocation9 + $0x60] sm:$0xff]
        %v614 = vld [vmem:[#allocation9 + $0x68] sm:$0xff]
        %v615 = vld [vmem:[#allocation9 + $0x70] sm:$0xff]
        %v616 = vld [vmem:[#allocation9 + $0x78] sm:$0xff]
        %v617 = vld [vmem:[#allocation9 + $0x80] sm:$0xff]
        %v618 = vld [vmem:[#allocation9 + $0x88] sm:$0xff]
        %v619 = vld [vmem:[#allocation9 + $0x90] sm:$0xff]
        %v620 = vld [vmem:[#allocation9 + $0x98] sm:$0xff]
        %v621 = vld [vmem:[#allocation9 + $0xa0] sm:$0xff]
        %v622 = vld [vmem:[#allocation9 + $0xa8] sm:$0xff]
        %v623 = vld [vmem:[#allocation9 + $0xb0] sm:$0xff]
        %v624 = vld [vmem:[#allocation9 + $0xb8] sm:$0xff]
        %v625 = vld [vmem:[#allocation9 + $0xc0] sm:$0xff]
        %v626 = vld [vmem:[#allocation9 + $0xc8] sm:$0xff]
        %v627 = vld [vmem:[#allocation9 + $0xd0] sm:$0xff]
        %v628 = vld [vmem:[#allocation9 + $0xd8] sm:$0xff]
        %v629 = vld [vmem:[#allocation9 + $0xe0] sm:$0xff]
        %v630 = vld [vmem:[#allocation9 + $0xe8] sm:$0xff]
        %v631 = vld [vmem:[#allocation9 + $0xf0] sm:$0xff]
        %v632 = vld [vmem:[#allocation9 + $0xf8] sm:$0xff]
        %v633 = vld [vmem:[#allocation9 + $0x100] sm:$0xff]
        %v634 = vld [vmem:[#allocation9 + $0x108] sm:$0xff]
        %v635 = vld [vmem:[#allocation9 + $0x110] sm:$0xff]
        %v636 = vld [vmem:[#allocation9 + $0x118] sm:$0xff]
        %v637 = vld [vmem:[#allocation9 + $0x120] sm:$0xff]
        %v638 = vld [vmem:[#allocation9 + $0x128] sm:$0xff]
        %v639 = vld [vmem:[#allocation9 + $0x130] sm:$0xff]
        %v640 = vld [vmem:[#allocation9 + $0x138] sm:$0xff]
        %v641 = vld [vmem:[#allocation9 + $0x140] sm:$0xff]
        %v642 = vld [vmem:[#allocation9 + $0x148] sm:$0xff]
        %v643 = vld [vmem:[#allocation9 + $0x150] sm:$0xff]
        %v644 = vld [vmem:[#allocation9 + $0x158] sm:$0xff]
        %v645 = vld [vmem:[#allocation9 + $0x160] sm:$0xff]
        %v646 = vld [vmem:[#allocation9 + $0x168] sm:$0xff]
        %v647 = vld [vmem:[#allocation9 + $0x170] sm:$0xff]
        %v648 = vld [vmem:[#allocation9 + $0x178] sm:$0xff]
        %v649 = vld [vmem:[#allocation9 + $0x180] sm:$0xff]
        %v650 = vld [vmem:[#allocation9 + $0x188] sm:$0xff]
        %v651 = vld [vmem:[#allocation9 + $0x190] sm:$0xff]
        %v652 = vld [vmem:[#allocation9 + $0x198] sm:$0xff]
        %v653 = vld [vmem:[#allocation9 + $0x1a0] sm:$0xff]
        %v654 = vld [vmem:[#allocation9 + $0x1a8] sm:$0xff]
        %v655 = vld [vmem:[#allocation9 + $0x1b0] sm:$0xff]
        %v656 = vld [vmem:[#allocation9 + $0x1b8] sm:$0xff]
        %v657 = vld [vmem:[#allocation9 + $0x1c0] sm:$0xff]
        %v658 = vld [vmem:[#allocation9 + $0x1c8] sm:$0xff]
        %v659 = vld [vmem:[#allocation9 + $0x1d0] sm:$0xff]
        %v660 = vld [vmem:[#allocation9 + $0x1d8] sm:$0xff]
        %v661 = vld [vmem:[#allocation9 + $0x1e0] sm:$0xff]
        %v662 = vld [vmem:[#allocation9 + $0x1e8] sm:$0xff]
        %v663 = vld [vmem:[#allocation9 + $0x1f0] sm:$0xff]
        %v664 = vld [vmem:[#allocation9 + $0x1f8] sm:$0xff]
        %665 = vmatpush.msra.mxu0 %v631
        %666 = vmatpush.msra.mxu0 %v629
        %667 = vmatpush.msra.mxu0 %v627
        %668 = vmatpush.msra.mxu0 %v625
        %669 = vmatpush.msra.mxu0 %v623
        %670 = vmatpush.msra.mxu0 %v621
        %671 = vmatpush.msra.mxu0 %v619
        %672 = vmatpush.msra.mxu0 %v617
        %673 = vmatpush.msra.mxu0 %v615
        %674 = vmatpush.msra.mxu0 %v613
        %675 = vmatpush.msra.mxu0 %v611
        %676 = vmatpush.msra.mxu0 %v609
        %677 = vmatpush.msra.mxu0 %v607
        %678 = vmatpush.msra.mxu0 %v605
        %679 = vmatpush.msra.mxu0 %v603
        %680 = vmatpush.msra.mxu0 %v601
        %681 = vmatmul.f32.gmra.mxu0 %v537
        %v682 = vpop.f32.mrf.mxu0
        %v683 = vadd.f32 0.0, %v682
        %684 = vmatmul.f32.gmra.mxu0 %v539
        %v685 = vpop.f32.mrf.mxu0
        %v686 = vadd.f32 0.0, %v685
        %687 = vmatmul.f32.gmra.mxu0 %v541
        %v688 = vpop.f32.mrf.mxu0
        %v689 = vadd.f32 0.0, %v688
        %690 = vmatmul.f32.gmra.mxu0 %v543
        %v691 = vpop.f32.mrf.mxu0
        %v692 = vadd.f32 0.0, %v691
        %693 = vmatmul.f32.gmra.mxu0 %v545
        %v694 = vpop.f32.mrf.mxu0
        %v695 = vadd.f32 0.0, %v694
        %696 = vmatmul.f32.gmra.mxu0 %v547
        %v697 = vpop.f32.mrf.mxu0
        %v698 = vadd.f32 0.0, %v697
        %699 = vmatmul.f32.gmra.mxu0 %v549
        %v700 = vpop.f32.mrf.mxu0
        %v701 = vadd.f32 0.0, %v700
        %702 = vmatmul.f32.gmra.mxu0 %v551
        %v703 = vpop.f32.mrf.mxu0
        %v704 = vadd.f32 0.0, %v703
        %705 = vmatmul.f32.gmra.mxu0 %v553
        %v706 = vpop.f32.mrf.mxu0
        %v707 = vadd.f32 0.0, %v706
        %708 = vmatmul.f32.gmra.mxu0 %v555
        %v709 = vpop.f32.mrf.mxu0
        %v710 = vadd.f32 0.0, %v709
        %711 = vmatmul.f32.gmra.mxu0 %v557
        %v712 = vpop.f32.mrf.mxu0
        %v713 = vadd.f32 0.0, %v712
        %714 = vmatmul.f32.gmra.mxu0 %v559
        %v715 = vpop.f32.mrf.mxu0
        %v716 = vadd.f32 0.0, %v715
        %717 = vmatmul.f32.gmra.mxu0 %v561
        %v718 = vpop.f32.mrf.mxu0
        %v719 = vadd.f32 0.0, %v718
        %720 = vmatmul.f32.gmra.mxu0 %v563
        %v721 = vpop.f32.mrf.mxu0
        %v722 = vadd.f32 0.0, %v721
        %723 = vmatmul.f32.gmra.mxu0 %v565
        %v724 = vpop.f32.mrf.mxu0
        %v725 = vadd.f32 0.0, %v724
        %726 = vmatmul.f32.gmra.mxu0 %v567
        %v727 = vpop.f32.mrf.mxu0
        %v728 = vadd.f32 0.0, %v727
        %729 = vmatmul.f32.gmra.mxu0 %v569
        %v730 = vpop.f32.mrf.mxu0
        %v731 = vadd.f32 0.0, %v730
        %732 = vmatmul.f32.gmra.mxu0 %v571
        %v733 = vpop.f32.mrf.mxu0
        %v734 = vadd.f32 0.0, %v733
        %735 = vmatmul.f32.gmra.mxu0 %v573
        %v736 = vpop.f32.mrf.mxu0
        %v737 = vadd.f32 0.0, %v736
        %738 = vmatmul.f32.gmra.mxu0 %v575
        %v739 = vpop.f32.mrf.mxu0
        %v740 = vadd.f32 0.0, %v739
        %741 = vmatmul.f32.gmra.mxu0 %v577
        %v742 = vpop.f32.mrf.mxu0
        %v743 = vadd.f32 0.0, %v742
        %744 = vmatmul.f32.gmra.mxu0 %v579
        %v745 = vpop.f32.mrf.mxu0
        %v746 = vadd.f32 0.0, %v745
        %747 = vmatmul.f32.gmra.mxu0 %v581
        %v748 = vpop.f32.mrf.mxu0
        %v749 = vadd.f32 0.0, %v748
        %750 = vmatmul.f32.gmra.mxu0 %v583
        %v751 = vpop.f32.mrf.mxu0
        %v752 = vadd.f32 0.0, %v751
        %753 = vmatmul.f32.gmra.mxu0 %v585
        %v754 = vpop.f32.mrf.mxu0
        %v755 = vadd.f32 0.0, %v754
        %756 = vmatmul.f32.gmra.mxu0 %v587
        %v757 = vpop.f32.mrf.mxu0
        %v758 = vadd.f32 0.0, %v757
        %759 = vmatmul.f32.gmra.mxu0 %v589
        %v760 = vpop.f32.mrf.mxu0
        %v761 = vadd.f32 0.0, %v760
        %762 = vmatmul.f32.gmra.mxu0 %v591
        %v763 = vpop.f32.mrf.mxu0
        %v764 = vadd.f32 0.0, %v763
        %765 = vmatmul.f32.gmra.mxu0 %v593
        %v766 = vpop.f32.mrf.mxu0
        %v767 = vadd.f32 0.0, %v766
        %768 = vmatmul.f32.gmra.mxu0 %v595
        %v769 = vpop.f32.mrf.mxu0
        %v770 = vadd.f32 0.0, %v769
        %771 = vmatmul.f32.gmra.mxu0 %v597
        %v772 = vpop.f32.mrf.mxu0
        %v773 = vadd.f32 0.0, %v772
        %774 = vmatmul.f32.gmra.mxu0 %v599
        %v775 = vpop.f32.mrf.mxu0
        %v776 = vadd.f32 0.0, %v775
        %777 = vdwg.mxu0
        %778 = vmatpush.msra.mxu0 %v663
        %779 = vmatpush.msra.mxu0 %v661
        %780 = vmatpush.msra.mxu0 %v659
        %781 = vmatpush.msra.mxu0 %v657
        %782 = vmatpush.msra.mxu0 %v655
        %783 = vmatpush.msra.mxu0 %v653
        %784 = vmatpush.msra.mxu0 %v651
        %785 = vmatpush.msra.mxu0 %v649
        %786 = vmatpush.msra.mxu0 %v647
        %787 = vmatpush.msra.mxu0 %v645
        %788 = vmatpush.msra.mxu0 %v643
        %789 = vmatpush.msra.mxu0 %v641
        %790 = vmatpush.msra.mxu0 %v639
        %791 = vmatpush.msra.mxu0 %v637
        %792 = vmatpush.msra.mxu0 %v635
        %793 = vmatpush.msra.mxu0 %v633
        %794 = vmatmul.f32.gmra.mxu0 %v538
        %v795 = vpop.f32.mrf.mxu0
        %v796 = vadd.f32 %v683, %v795
        %797 = vmatmul.f32.gmra.mxu0 %v540
        %v798 = vpop.f32.mrf.mxu0
        %v799 = vadd.f32 %v686, %v798
        %800 = vmatmul.f32.gmra.mxu0 %v542
        %v801 = vpop.f32.mrf.mxu0
        %v802 = vadd.f32 %v689, %v801
        %803 = vmatmul.f32.gmra.mxu0 %v544
        %v804 = vpop.f32.mrf.mxu0
        %v805 = vadd.f32 %v692, %v804
        %806 = vmatmul.f32.gmra.mxu0 %v546
        %v807 = vpop.f32.mrf.mxu0
        %v808 = vadd.f32 %v695, %v807
        %809 = vmatmul.f32.gmra.mxu0 %v548
        %v810 = vpop.f32.mrf.mxu0
        %v811 = vadd.f32 %v698, %v810
        %812 = vmatmul.f32.gmra.mxu0 %v550
        %v813 = vpop.f32.mrf.mxu0
        %v814 = vadd.f32 %v701, %v813
        %815 = vmatmul.f32.gmra.mxu0 %v552
        %v816 = vpop.f32.mrf.mxu0
        %v817 = vadd.f32 %v704, %v816
        %818 = vmatmul.f32.gmra.mxu0 %v554
        %v819 = vpop.f32.mrf.mxu0
        %v820 = vadd.f32 %v707, %v819
        %821 = vmatmul.f32.gmra.mxu0 %v556
        %v822 = vpop.f32.mrf.mxu0
        %v823 = vadd.f32 %v710, %v822
        %824 = vmatmul.f32.gmra.mxu0 %v558
        %v825 = vpop.f32.mrf.mxu0
        %v826 = vadd.f32 %v713, %v825
        %827 = vmatmul.f32.gmra.mxu0 %v560
        %v828 = vpop.f32.mrf.mxu0
        %v829 = vadd.f32 %v716, %v828
        %830 = vmatmul.f32.gmra.mxu0 %v562
        %v831 = vpop.f32.mrf.mxu0
        %v832 = vadd.f32 %v719, %v831
        %833 = vmatmul.f32.gmra.mxu0 %v564
        %v834 = vpop.f32.mrf.mxu0
        %v835 = vadd.f32 %v722, %v834
        %836 = vmatmul.f32.gmra.mxu0 %v566
        %v837 = vpop.f32.mrf.mxu0
        %v838 = vadd.f32 %v725, %v837
        %839 = vmatmul.f32.gmra.mxu0 %v568
        %v840 = vpop.f32.mrf.mxu0
        %v841 = vadd.f32 %v728, %v840
        %842 = vmatmul.f32.gmra.mxu0 %v570
        %v843 = vpop.f32.mrf.mxu0
        %v844 = vadd.f32 %v731, %v843
        %845 = vmatmul.f32.gmra.mxu0 %v572
        %v846 = vpop.f32.mrf.mxu0
        %v847 = vadd.f32 %v734, %v846
        %848 = vmatmul.f32.gmra.mxu0 %v574
        %v849 = vpop.f32.mrf.mxu0
        %v850 = vadd.f32 %v737, %v849
        %851 = vmatmul.f32.gmra.mxu0 %v576
        %v852 = vpop.f32.mrf.mxu0
        %v853 = vadd.f32 %v740, %v852
        %854 = vmatmul.f32.gmra.mxu0 %v578
        %v855 = vpop.f32.mrf.mxu0
        %v856 = vadd.f32 %v743, %v855
        %857 = vmatmul.f32.gmra.mxu0 %v580
        %v858 = vpop.f32.mrf.mxu0
        %v859 = vadd.f32 %v746, %v858
        %860 = vmatmul.f32.gmra.mxu0 %v582
        %v861 = vpop.f32.mrf.mxu0
        %v862 = vadd.f32 %v749, %v861
        %863 = vmatmul.f32.gmra.mxu0 %v584
        %v864 = vpop.f32.mrf.mxu0
        %v865 = vadd.f32 %v752, %v864
        %866 = vmatmul.f32.gmra.mxu0 %v586
        %v867 = vpop.f32.mrf.mxu0
        %v868 = vadd.f32 %v755, %v867
        %869 = vmatmul.f32.gmra.mxu0 %v588
        %v870 = vpop.f32.mrf.mxu0
        %v871 = vadd.f32 %v758, %v870
        %872 = vmatmul.f32.gmra.mxu0 %v590
        %v873 = vpop.f32.mrf.mxu0
        %v874 = vadd.f32 %v761, %v873
        %875 = vmatmul.f32.gmra.mxu0 %v592
        %v876 = vpop.f32.mrf.mxu0
        %v877 = vadd.f32 %v764, %v876
        %878 = vmatmul.f32.gmra.mxu0 %v594
        %v879 = vpop.f32.mrf.mxu0
        %v880 = vadd.f32 %v767, %v879
        %881 = vmatmul.f32.gmra.mxu0 %v596
        %v882 = vpop.f32.mrf.mxu0
        %v883 = vadd.f32 %v770, %v882
        %884 = vmatmul.f32.gmra.mxu0 %v598
        %v885 = vpop.f32.mrf.mxu0
        %v886 = vadd.f32 %v773, %v885
        %887 = vmatmul.f32.gmra.mxu0 %v600
        %v888 = vpop.f32.mrf.mxu0
        %v889 = vadd.f32 %v776, %v888
        %890 = vdwg.mxu0
        %891 = vmatpush.msra.mxu0 %v632
        %892 = vmatpush.msra.mxu0 %v630
        %893 = vmatpush.msra.mxu0 %v628
        %894 = vmatpush.msra.mxu0 %v626
        %895 = vmatpush.msra.mxu0 %v624
        %896 = vmatpush.msra.mxu0 %v622
        %897 = vmatpush.msra.mxu0 %v620
        %898 = vmatpush.msra.mxu0 %v618
        %899 = vmatpush.msra.mxu0 %v616
        %900 = vmatpush.msra.mxu0 %v614
        %901 = vmatpush.msra.mxu0 %v612
        %902 = vmatpush.msra.mxu0 %v610
        %903 = vmatpush.msra.mxu0 %v608
        %904 = vmatpush.msra.mxu0 %v606
        %905 = vmatpush.msra.mxu0 %v604
        %906 = vmatpush.msra.mxu0 %v602
        %907 = vmatmul.f32.gmra.mxu0 %v537
        %v908 = vpop.f32.mrf.mxu0
        %v909 = vadd.f32 0.0, %v908
        %910 = vmatmul.f32.gmra.mxu0 %v539
        %v911 = vpop.f32.mrf.mxu0
        %v912 = vadd.f32 0.0, %v911
        %913 = vmatmul.f32.gmra.mxu0 %v541
        %v914 = vpop.f32.mrf.mxu0
        %v915 = vadd.f32 0.0, %v914
        %916 = vmatmul.f32.gmra.mxu0 %v543
        %v917 = vpop.f32.mrf.mxu0
        %v918 = vadd.f32 0.0, %v917
        %919 = vmatmul.f32.gmra.mxu0 %v545
        %v920 = vpop.f32.mrf.mxu0
        %v921 = vadd.f32 0.0, %v920
        %922 = vmatmul.f32.gmra.mxu0 %v547
        %v923 = vpop.f32.mrf.mxu0
        %v924 = vadd.f32 0.0, %v923
        %925 = vmatmul.f32.gmra.mxu0 %v549
        %v926 = vpop.f32.mrf.mxu0
        %v927 = vadd.f32 0.0, %v926
        %928 = vmatmul.f32.gmra.mxu0 %v551
        %v929 = vpop.f32.mrf.mxu0
        %v930 = vadd.f32 0.0, %v929
        %931 = vmatmul.f32.gmra.mxu0 %v553
        %v932 = vpop.f32.mrf.mxu0
        %v933 = vadd.f32 0.0, %v932
        %934 = vmatmul.f32.gmra.mxu0 %v555
        %v935 = vpop.f32.mrf.mxu0
        %v936 = vadd.f32 0.0, %v935
        %937 = vmatmul.f32.gmra.mxu0 %v557
        %v938 = vpop.f32.mrf.mxu0
        %v939 = vadd.f32 0.0, %v938
        %940 = vmatmul.f32.gmra.mxu0 %v559
        %v941 = vpop.f32.mrf.mxu0
        %v942 = vadd.f32 0.0, %v941
        %943 = vmatmul.f32.gmra.mxu0 %v561
        %v944 = vpop.f32.mrf.mxu0
        %v945 = vadd.f32 0.0, %v944
        %946 = vmatmul.f32.gmra.mxu0 %v563
        %v947 = vpop.f32.mrf.mxu0
        %v948 = vadd.f32 0.0, %v947
        %949 = vmatmul.f32.gmra.mxu0 %v565
        %v950 = vpop.f32.mrf.mxu0
        %v951 = vadd.f32 0.0, %v950
        %952 = vmatmul.f32.gmra.mxu0 %v567
        %v953 = vpop.f32.mrf.mxu0
        %v954 = vadd.f32 0.0, %v953
        %955 = vmatmul.f32.gmra.mxu0 %v569
        %v956 = vpop.f32.mrf.mxu0
        %v957 = vadd.f32 0.0, %v956
        %958 = vmatmul.f32.gmra.mxu0 %v571
        %v959 = vpop.f32.mrf.mxu0
        %v960 = vadd.f32 0.0, %v959
        %961 = vmatmul.f32.gmra.mxu0 %v573
        %v962 = vpop.f32.mrf.mxu0
        %v963 = vadd.f32 0.0, %v962
        %964 = vmatmul.f32.gmra.mxu0 %v575
        %v965 = vpop.f32.mrf.mxu0
        %v966 = vadd.f32 0.0, %v965
        %967 = vmatmul.f32.gmra.mxu0 %v577
        %v968 = vpop.f32.mrf.mxu0
        %v969 = vadd.f32 0.0, %v968
        %970 = vmatmul.f32.gmra.mxu0 %v579
        %v971 = vpop.f32.mrf.mxu0
        %v972 = vadd.f32 0.0, %v971
        %973 = vmatmul.f32.gmra.mxu0 %v581
        %v974 = vpop.f32.mrf.mxu0
        %v975 = vadd.f32 0.0, %v974
        %976 = vmatmul.f32.gmra.mxu0 %v583
        %v977 = vpop.f32.mrf.mxu0
        %v978 = vadd.f32 0.0, %v977
        %979 = vmatmul.f32.gmra.mxu0 %v585
        %v980 = vpop.f32.mrf.mxu0
        %v981 = vadd.f32 0.0, %v980
        %982 = vmatmul.f32.gmra.mxu0 %v587
        %v983 = vpop.f32.mrf.mxu0
        %v984 = vadd.f32 0.0, %v983
        %985 = vmatmul.f32.gmra.mxu0 %v589
        %v986 = vpop.f32.mrf.mxu0
        %v987 = vadd.f32 0.0, %v986
        %988 = vmatmul.f32.gmra.mxu0 %v591
        %v989 = vpop.f32.mrf.mxu0
        %v990 = vadd.f32 0.0, %v989
        %991 = vmatmul.f32.gmra.mxu0 %v593
        %v992 = vpop.f32.mrf.mxu0
        %v993 = vadd.f32 0.0, %v992
        %994 = vmatmul.f32.gmra.mxu0 %v595
        %v995 = vpop.f32.mrf.mxu0
        %v996 = vadd.f32 0.0, %v995
        %997 = vmatmul.f32.gmra.mxu0 %v597
        %v998 = vpop.f32.mrf.mxu0
        %v999 = vadd.f32 0.0, %v998
        %1000 = vmatmul.f32.gmra.mxu0 %v599
        %v1001 = vpop.f32.mrf.mxu0
        %v1002 = vadd.f32 0.0, %v1001
        %1003 = vdwg.mxu0
        %1004 = vmatpush.msra.mxu0 %v664
        %1005 = vmatpush.msra.mxu0 %v662
        %1006 = vmatpush.msra.mxu0 %v660
        %1007 = vmatpush.msra.mxu0 %v658
        %1008 = vmatpush.msra.mxu0 %v656
        %1009 = vmatpush.msra.mxu0 %v654
        %1010 = vmatpush.msra.mxu0 %v652
        %1011 = vmatpush.msra.mxu0 %v650
        %1012 = vmatpush.msra.mxu0 %v648
        %1013 = vmatpush.msra.mxu0 %v646
        %1014 = vmatpush.msra.mxu0 %v644
        %1015 = vmatpush.msra.mxu0 %v642
        %1016 = vmatpush.msra.mxu0 %v640
        %1017 = vmatpush.msra.mxu0 %v638
        %1018 = vmatpush.msra.mxu0 %v636
        %1019 = vmatpush.msra.mxu0 %v634
        %1020 = vmatmul.f32.gmra.mxu0 %v538
        %v1021 = vpop.f32.mrf.mxu0
        %v1022 = vadd.f32 %v909, %v1021
        %1023 = vmatmul.f32.gmra.mxu0 %v540
        %v1024 = vpop.f32.mrf.mxu0
        %v1025 = vadd.f32 %v912, %v1024
        %1026 = vmatmul.f32.gmra.mxu0 %v542
        %v1027 = vpop.f32.mrf.mxu0
        %v1028 = vadd.f32 %v915, %v1027
        %1029 = vmatmul.f32.gmra.mxu0 %v544
        %v1030 = vpop.f32.mrf.mxu0
        %v1031 = vadd.f32 %v918, %v1030
        %1032 = vmatmul.f32.gmra.mxu0 %v546
        %v1033 = vpop.f32.mrf.mxu0
        %v1034 = vadd.f32 %v921, %v1033
        %1035 = vmatmul.f32.gmra.mxu0 %v548
        %v1036 = vpop.f32.mrf.mxu0
        %v1037 = vadd.f32 %v924, %v1036
        %1038 = vmatmul.f32.gmra.mxu0 %v550
        %v1039 = vpop.f32.mrf.mxu0
        %v1040 = vadd.f32 %v927, %v1039
        %1041 = vmatmul.f32.gmra.mxu0 %v552
        %v1042 = vpop.f32.mrf.mxu0
        %v1043 = vadd.f32 %v930, %v1042
        %1044 = vmatmul.f32.gmra.mxu0 %v554
        %v1045 = vpop.f32.mrf.mxu0
        %v1046 = vadd.f32 %v933, %v1045
        %1047 = vmatmul.f32.gmra.mxu0 %v556
        %v1048 = vpop.f32.mrf.mxu0
        %v1049 = vadd.f32 %v936, %v1048
        %1050 = vmatmul.f32.gmra.mxu0 %v558
        %v1051 = vpop.f32.mrf.mxu0
        %v1052 = vadd.f32 %v939, %v1051
        %1053 = vmatmul.f32.gmra.mxu0 %v560
        %v1054 = vpop.f32.mrf.mxu0
        %v1055 = vadd.f32 %v942, %v1054
        %1056 = vmatmul.f32.gmra.mxu0 %v562
        %v1057 = vpop.f32.mrf.mxu0
        %v1058 = vadd.f32 %v945, %v1057
        %1059 = vmatmul.f32.gmra.mxu0 %v564
        %v1060 = vpop.f32.mrf.mxu0
        %v1061 = vadd.f32 %v948, %v1060
        %1062 = vmatmul.f32.gmra.mxu0 %v566
        %v1063 = vpop.f32.mrf.mxu0
        %v1064 = vadd.f32 %v951, %v1063
        %1065 = vmatmul.f32.gmra.mxu0 %v568
        %v1066 = vpop.f32.mrf.mxu0
        %v1067 = vadd.f32 %v954, %v1066
        %1068 = vmatmul.f32.gmra.mxu0 %v570
        %v1069 = vpop.f32.mrf.mxu0
        %v1070 = vadd.f32 %v957, %v1069
        %1071 = vmatmul.f32.gmra.mxu0 %v572
        %v1072 = vpop.f32.mrf.mxu0
        %v1073 = vadd.f32 %v960, %v1072
        %1074 = vmatmul.f32.gmra.mxu0 %v574
        %v1075 = vpop.f32.mrf.mxu0
        %v1076 = vadd.f32 %v963, %v1075
        %1077 = vmatmul.f32.gmra.mxu0 %v576
        %v1078 = vpop.f32.mrf.mxu0
        %v1079 = vadd.f32 %v966, %v1078
        %1080 = vmatmul.f32.gmra.mxu0 %v578
        %v1081 = vpop.f32.mrf.mxu0
        %v1082 = vadd.f32 %v969, %v1081
        %1083 = vmatmul.f32.gmra.mxu0 %v580
        %v1084 = vpop.f32.mrf.mxu0
        %v1085 = vadd.f32 %v972, %v1084
        %1086 = vmatmul.f32.gmra.mxu0 %v582
        %v1087 = vpop.f32.mrf.mxu0
        %v1088 = vadd.f32 %v975, %v1087
        %1089 = vmatmul.f32.gmra.mxu0 %v584
        %v1090 = vpop.f32.mrf.mxu0
        %v1091 = vadd.f32 %v978, %v1090
        %1092 = vmatmul.f32.gmra.mxu0 %v586
        %v1093 = vpop.f32.mrf.mxu0
        %v1094 = vadd.f32 %v981, %v1093
        %1095 = vmatmul.f32.gmra.mxu0 %v588
        %v1096 = vpop.f32.mrf.mxu0
        %v1097 = vadd.f32 %v984, %v1096
        %1098 = vmatmul.f32.gmra.mxu0 %v590
        %v1099 = vpop.f32.mrf.mxu0
        %v1100 = vadd.f32 %v987, %v1099
        %1101 = vmatmul.f32.gmra.mxu0 %v592
        %v1102 = vpop.f32.mrf.mxu0
        %v1103 = vadd.f32 %v990, %v1102
        %1104 = vmatmul.f32.gmra.mxu0 %v594
        %v1105 = vpop.f32.mrf.mxu0
        %v1106 = vadd.f32 %v993, %v1105
        %1107 = vmatmul.f32.gmra.mxu0 %v596
        %v1108 = vpop.f32.mrf.mxu0
        %v1109 = vadd.f32 %v996, %v1108
        %1110 = vmatmul.f32.gmra.mxu0 %v598
        %v1111 = vpop.f32.mrf.mxu0
        %v1112 = vadd.f32 %v999, %v1111
        %1113 = vmatmul.f32.gmra.mxu0 %v600
        %v1114 = vpop.f32.mrf.mxu0
        %v1115 = vadd.f32 %v1002, %v1114
        %1116 = vdwg.mxu0
        %1117 = vmatpush.msra.mxu0 %v503
        %1118 = vmatpush.msra.mxu0 %v501
        %1119 = vmatpush.msra.mxu0 %v499
        %1120 = vmatpush.msra.mxu0 %v497
        %1121 = vmatpush.msra.mxu0 %v495
        %1122 = vmatpush.msra.mxu0 %v493
        %1123 = vmatpush.msra.mxu0 %v491
        %1124 = vmatpush.msra.mxu0 %v489
        %1125 = vmatpush.msra.mxu0 %v487
        %1126 = vmatpush.msra.mxu0 %v485
        %1127 = vmatpush.msra.mxu0 %v483
        %1128 = vmatpush.msra.mxu0 %v481
        %1129 = vmatpush.msra.mxu0 %v479
        %1130 = vmatpush.msra.mxu0 %v477
        %1131 = vmatpush.msra.mxu0 %v475
        %1132 = vmatpush.msra.mxu0 %v473
        %1133 = vmatmul.f32.gmra.mxu0 %v409
        %v1134 = vpop.f32.mrf.mxu0
        %v1135 = vadd.f32 %v796, %v1134
        %1136 = vmatmul.f32.gmra.mxu0 %v411
        %v1137 = vpop.f32.mrf.mxu0
        %v1138 = vadd.f32 %v799, %v1137
        %1139 = vmatmul.f32.gmra.mxu0 %v413
        %v1140 = vpop.f32.mrf.mxu0
        %v1141 = vadd.f32 %v802, %v1140
        %1142 = vmatmul.f32.gmra.mxu0 %v415
        %v1143 = vpop.f32.mrf.mxu0
        %v1144 = vadd.f32 %v805, %v1143
        %1145 = vmatmul.f32.gmra.mxu0 %v417
        %v1146 = vpop.f32.mrf.mxu0
        %v1147 = vadd.f32 %v808, %v1146
        %1148 = vmatmul.f32.gmra.mxu0 %v419
        %v1149 = vpop.f32.mrf.mxu0
        %v1150 = vadd.f32 %v811, %v1149
        %1151 = vmatmul.f32.gmra.mxu0 %v421
        %v1152 = vpop.f32.mrf.mxu0
        %v1153 = vadd.f32 %v814, %v1152
        %1154 = vmatmul.f32.gmra.mxu0 %v423
        %v1155 = vpop.f32.mrf.mxu0
        %v1156 = vadd.f32 %v817, %v1155
        %1157 = vmatmul.f32.gmra.mxu0 %v425
        %v1158 = vpop.f32.mrf.mxu0
        %v1159 = vadd.f32 %v820, %v1158
        %1160 = vmatmul.f32.gmra.mxu0 %v427
        %v1161 = vpop.f32.mrf.mxu0
        %v1162 = vadd.f32 %v823, %v1161
        %1163 = vmatmul.f32.gmra.mxu0 %v429
        %v1164 = vpop.f32.mrf.mxu0
        %v1165 = vadd.f32 %v826, %v1164
        %1166 = vmatmul.f32.gmra.mxu0 %v431
        %v1167 = vpop.f32.mrf.mxu0
        %v1168 = vadd.f32 %v829, %v1167
        %1169 = vmatmul.f32.gmra.mxu0 %v433
        %v1170 = vpop.f32.mrf.mxu0
        %v1171 = vadd.f32 %v832, %v1170
        %1172 = vmatmul.f32.gmra.mxu0 %v435
        %v1173 = vpop.f32.mrf.mxu0
        %v1174 = vadd.f32 %v835, %v1173
        %1175 = vmatmul.f32.gmra.mxu0 %v437
        %v1176 = vpop.f32.mrf.mxu0
        %v1177 = vadd.f32 %v838, %v1176
        %1178 = vmatmul.f32.gmra.mxu0 %v439
        %v1179 = vpop.f32.mrf.mxu0
        %v1180 = vadd.f32 %v841, %v1179
        %1181 = vmatmul.f32.gmra.mxu0 %v441
        %v1182 = vpop.f32.mrf.mxu0
        %v1183 = vadd.f32 %v844, %v1182
        %1184 = vmatmul.f32.gmra.mxu0 %v443
        %v1185 = vpop.f32.mrf.mxu0
        %v1186 = vadd.f32 %v847, %v1185
        %1187 = vmatmul.f32.gmra.mxu0 %v445
        %v1188 = vpop.f32.mrf.mxu0
        %v1189 = vadd.f32 %v850, %v1188
        %1190 = vmatmul.f32.gmra.mxu0 %v447
        %v1191 = vpop.f32.mrf.mxu0
        %v1192 = vadd.f32 %v853, %v1191
        %1193 = vmatmul.f32.gmra.mxu0 %v449
        %v1194 = vpop.f32.mrf.mxu0
        %v1195 = vadd.f32 %v856, %v1194
        %1196 = vmatmul.f32.gmra.mxu0 %v451
        %v1197 = vpop.f32.mrf.mxu0
        %v1198 = vadd.f32 %v859, %v1197
        %1199 = vmatmul.f32.gmra.mxu0 %v453
        %v1200 = vpop.f32.mrf.mxu0
        %v1201 = vadd.f32 %v862, %v1200
        %1202 = vmatmul.f32.gmra.mxu0 %v455
        %v1203 = vpop.f32.mrf.mxu0
        %v1204 = vadd.f32 %v865, %v1203
        %1205 = vmatmul.f32.gmra.mxu0 %v457
        %v1206 = vpop.f32.mrf.mxu0
        %v1207 = vadd.f32 %v868, %v1206
        %1208 = vmatmul.f32.gmra.mxu0 %v459
        %v1209 = vpop.f32.mrf.mxu0
        %v1210 = vadd.f32 %v871, %v1209
        %1211 = vmatmul.f32.gmra.mxu0 %v461
        %v1212 = vpop.f32.mrf.mxu0
        %v1213 = vadd.f32 %v874, %v1212
        %1214 = vmatmul.f32.gmra.mxu0 %v463
        %v1215 = vpop.f32.mrf.mxu0
        %v1216 = vadd.f32 %v877, %v1215
        %1217 = vmatmul.f32.gmra.mxu0 %v465
        %v1218 = vpop.f32.mrf.mxu0
        %v1219 = vadd.f32 %v880, %v1218
        %1220 = vmatmul.f32.gmra.mxu0 %v467
        %v1221 = vpop.f32.mrf.mxu0
        %v1222 = vadd.f32 %v883, %v1221
        %1223 = vmatmul.f32.gmra.mxu0 %v469
        %v1224 = vpop.f32.mrf.mxu0
        %v1225 = vadd.f32 %v886, %v1224
        %1226 = vmatmul.f32.gmra.mxu0 %v471
        %v1227 = vpop.f32.mrf.mxu0
        %v1228 = vadd.f32 %v889, %v1227
        %1229 = vdwg.mxu0
        %1230 = vmatpush.msra.mxu0 %v535
        %1231 = vmatpush.msra.mxu0 %v533
        %1232 = vmatpush.msra.mxu0 %v531
        %1233 = vmatpush.msra.mxu0 %v529
        %1234 = vmatpush.msra.mxu0 %v527
        %1235 = vmatpush.msra.mxu0 %v525
        %1236 = vmatpush.msra.mxu0 %v523
        %1237 = vmatpush.msra.mxu0 %v521
        %1238 = vmatpush.msra.mxu0 %v519
        %1239 = vmatpush.msra.mxu0 %v517
        %1240 = vmatpush.msra.mxu0 %v515
        %1241 = vmatpush.msra.mxu0 %v513
        %1242 = vmatpush.msra.mxu0 %v511
        %1243 = vmatpush.msra.mxu0 %v509
        %1244 = vmatpush.msra.mxu0 %v507
        %1245 = vmatpush.msra.mxu0 %v505
        %1246 = vmatmul.f32.gmra.mxu0 %v410
        %v1247 = vpop.f32.mrf.mxu0
        %v1248 = vadd.f32 %v1135, %v1247
        %1249 = vmatmul.f32.gmra.mxu0 %v412
        %v1250 = vpop.f32.mrf.mxu0
        %v1251 = vadd.f32 %v1138, %v1250
        %1252 = vmatmul.f32.gmra.mxu0 %v414
        %v1253 = vpop.f32.mrf.mxu0
        %v1254 = vadd.f32 %v1141, %v1253
        %1255 = vmatmul.f32.gmra.mxu0 %v416
        %v1256 = vpop.f32.mrf.mxu0
        %v1257 = vadd.f32 %v1144, %v1256
        %1258 = vmatmul.f32.gmra.mxu0 %v418
        %v1259 = vpop.f32.mrf.mxu0
        %v1260 = vadd.f32 %v1147, %v1259
        %1261 = vmatmul.f32.gmra.mxu0 %v420
        %v1262 = vpop.f32.mrf.mxu0
        %v1263 = vadd.f32 %v1150, %v1262
        %1264 = vmatmul.f32.gmra.mxu0 %v422
        %v1265 = vpop.f32.mrf.mxu0
        %v1266 = vadd.f32 %v1153, %v1265
        %1267 = vmatmul.f32.gmra.mxu0 %v424
        %v1268 = vpop.f32.mrf.mxu0
        %v1269 = vadd.f32 %v1156, %v1268
        %1270 = vmatmul.f32.gmra.mxu0 %v426
        %v1271 = vpop.f32.mrf.mxu0
        %v1272 = vadd.f32 %v1159, %v1271
        %1273 = vmatmul.f32.gmra.mxu0 %v428
        %v1274 = vpop.f32.mrf.mxu0
        %v1275 = vadd.f32 %v1162, %v1274
        %1276 = vmatmul.f32.gmra.mxu0 %v430
        %v1277 = vpop.f32.mrf.mxu0
        %v1278 = vadd.f32 %v1165, %v1277
        %1279 = vmatmul.f32.gmra.mxu0 %v432
        %v1280 = vpop.f32.mrf.mxu0
        %v1281 = vadd.f32 %v1168, %v1280
        %1282 = vmatmul.f32.gmra.mxu0 %v434
        %v1283 = vpop.f32.mrf.mxu0
        %v1284 = vadd.f32 %v1171, %v1283
        %1285 = vmatmul.f32.gmra.mxu0 %v436
        %v1286 = vpop.f32.mrf.mxu0
        %v1287 = vadd.f32 %v1174, %v1286
        %1288 = vmatmul.f32.gmra.mxu0 %v438
        %v1289 = vpop.f32.mrf.mxu0
        %v1290 = vadd.f32 %v1177, %v1289
        %1291 = vmatmul.f32.gmra.mxu0 %v440
        %v1292 = vpop.f32.mrf.mxu0
        %v1293 = vadd.f32 %v1180, %v1292
        %1294 = vmatmul.f32.gmra.mxu0 %v442
        %v1295 = vpop.f32.mrf.mxu0
        %v1296 = vadd.f32 %v1183, %v1295
        %1297 = vmatmul.f32.gmra.mxu0 %v444
        %v1298 = vpop.f32.mrf.mxu0
        %v1299 = vadd.f32 %v1186, %v1298
        %1300 = vmatmul.f32.gmra.mxu0 %v446
        %v1301 = vpop.f32.mrf.mxu0
        %v1302 = vadd.f32 %v1189, %v1301
        %1303 = vmatmul.f32.gmra.mxu0 %v448
        %v1304 = vpop.f32.mrf.mxu0
        %v1305 = vadd.f32 %v1192, %v1304
        %1306 = vmatmul.f32.gmra.mxu0 %v450
        %v1307 = vpop.f32.mrf.mxu0
        %v1308 = vadd.f32 %v1195, %v1307
        %1309 = vmatmul.f32.gmra.mxu0 %v452
        %v1310 = vpop.f32.mrf.mxu0
        %v1311 = vadd.f32 %v1198, %v1310
        %1312 = vmatmul.f32.gmra.mxu0 %v454
        %v1313 = vpop.f32.mrf.mxu0
        %v1314 = vadd.f32 %v1201, %v1313
        %1315 = vmatmul.f32.gmra.mxu0 %v456
        %v1316 = vpop.f32.mrf.mxu0
        %v1317 = vadd.f32 %v1204, %v1316
        %1318 = vmatmul.f32.gmra.mxu0 %v458
        %v1319 = vpop.f32.mrf.mxu0
        %v1320 = vadd.f32 %v1207, %v1319
        %1321 = vmatmul.f32.gmra.mxu0 %v460
        %v1322 = vpop.f32.mrf.mxu0
        %v1323 = vadd.f32 %v1210, %v1322
        %1324 = vmatmul.f32.gmra.mxu0 %v462
        %v1325 = vpop.f32.mrf.mxu0
        %v1326 = vadd.f32 %v1213, %v1325
        %1327 = vmatmul.f32.gmra.mxu0 %v464
        %v1328 = vpop.f32.mrf.mxu0
        %v1329 = vadd.f32 %v1216, %v1328
        %1330 = vmatmul.f32.gmra.mxu0 %v466
        %v1331 = vpop.f32.mrf.mxu0
        %v1332 = vadd.f32 %v1219, %v1331
        %1333 = vmatmul.f32.gmra.mxu0 %v468
        %v1334 = vpop.f32.mrf.mxu0
        %v1335 = vadd.f32 %v1222, %v1334
        %1336 = vmatmul.f32.gmra.mxu0 %v470
        %v1337 = vpop.f32.mrf.mxu0
        %v1338 = vadd.f32 %v1225, %v1337
        %1339 = vmatmul.f32.gmra.mxu0 %v472
        %v1340 = vpop.f32.mrf.mxu0
        %v1341 = vadd.f32 %v1228, %v1340
        %1342 = vdwg.mxu0
        %1343 = vmatpush.msra.mxu0 %v504
        %1344 = vmatpush.msra.mxu0 %v502
        %1345 = vmatpush.msra.mxu0 %v500
        %1346 = vmatpush.msra.mxu0 %v498
        %1347 = vmatpush.msra.mxu0 %v496
        %1348 = vmatpush.msra.mxu0 %v494
        %1349 = vmatpush.msra.mxu0 %v492
        %1350 = vmatpush.msra.mxu0 %v490
        %1351 = vmatpush.msra.mxu0 %v488
        %1352 = vmatpush.msra.mxu0 %v486
        %1353 = vmatpush.msra.mxu0 %v484
        %1354 = vmatpush.msra.mxu0 %v482
        %1355 = vmatpush.msra.mxu0 %v480
        %1356 = vmatpush.msra.mxu0 %v478
        %1357 = vmatpush.msra.mxu0 %v476
        %1358 = vmatpush.msra.mxu0 %v474
        %1359 = vmatmul.f32.gmra.mxu0 %v409
        %v1360 = vpop.f32.mrf.mxu0
        %v1361 = vadd.f32 %v1022, %v1360
        %1362 = vmatmul.f32.gmra.mxu0 %v411
        %v1363 = vpop.f32.mrf.mxu0
        %v1364 = vadd.f32 %v1025, %v1363
        %1365 = vmatmul.f32.gmra.mxu0 %v413
        %v1366 = vpop.f32.mrf.mxu0
        %v1367 = vadd.f32 %v1028, %v1366
        %1368 = vmatmul.f32.gmra.mxu0 %v415
        %v1369 = vpop.f32.mrf.mxu0
        %v1370 = vadd.f32 %v1031, %v1369
        %1371 = vmatmul.f32.gmra.mxu0 %v417
        %v1372 = vpop.f32.mrf.mxu0
        %v1373 = vadd.f32 %v1034, %v1372
        %1374 = vmatmul.f32.gmra.mxu0 %v419
        %v1375 = vpop.f32.mrf.mxu0
        %v1376 = vadd.f32 %v1037, %v1375
        %1377 = vmatmul.f32.gmra.mxu0 %v421
        %v1378 = vpop.f32.mrf.mxu0
        %v1379 = vadd.f32 %v1040, %v1378
        %1380 = vmatmul.f32.gmra.mxu0 %v423
        %v1381 = vpop.f32.mrf.mxu0
        %v1382 = vadd.f32 %v1043, %v1381
        %1383 = vmatmul.f32.gmra.mxu0 %v425
        %v1384 = vpop.f32.mrf.mxu0
        %v1385 = vadd.f32 %v1046, %v1384
        %1386 = vmatmul.f32.gmra.mxu0 %v427
        %v1387 = vpop.f32.mrf.mxu0
        %v1388 = vadd.f32 %v1049, %v1387
        %1389 = vmatmul.f32.gmra.mxu0 %v429
        %v1390 = vpop.f32.mrf.mxu0
        %v1391 = vadd.f32 %v1052, %v1390
        %1392 = vmatmul.f32.gmra.mxu0 %v431
        %v1393 = vpop.f32.mrf.mxu0
        %v1394 = vadd.f32 %v1055, %v1393
        %1395 = vmatmul.f32.gmra.mxu0 %v433
        %v1396 = vpop.f32.mrf.mxu0
        %v1397 = vadd.f32 %v1058, %v1396
        %1398 = vmatmul.f32.gmra.mxu0 %v435
        %v1399 = vpop.f32.mrf.mxu0
        %v1400 = vadd.f32 %v1061, %v1399
        %1401 = vmatmul.f32.gmra.mxu0 %v437
        %v1402 = vpop.f32.mrf.mxu0
        %v1403 = vadd.f32 %v1064, %v1402
        %1404 = vmatmul.f32.gmra.mxu0 %v439
        %v1405 = vpop.f32.mrf.mxu0
        %v1406 = vadd.f32 %v1067, %v1405
        %1407 = vmatmul.f32.gmra.mxu0 %v441
        %v1408 = vpop.f32.mrf.mxu0
        %v1409 = vadd.f32 %v1070, %v1408
        %1410 = vmatmul.f32.gmra.mxu0 %v443
        %v1411 = vpop.f32.mrf.mxu0
        %v1412 = vadd.f32 %v1073, %v1411
        %1413 = vmatmul.f32.gmra.mxu0 %v445
        %v1414 = vpop.f32.mrf.mxu0
        %v1415 = vadd.f32 %v1076, %v1414
        %1416 = vmatmul.f32.gmra.mxu0 %v447
        %v1417 = vpop.f32.mrf.mxu0
        %v1418 = vadd.f32 %v1079, %v1417
        %1419 = vmatmul.f32.gmra.mxu0 %v449
        %v1420 = vpop.f32.mrf.mxu0
        %v1421 = vadd.f32 %v1082, %v1420
        %1422 = vmatmul.f32.gmra.mxu0 %v451
        %v1423 = vpop.f32.mrf.mxu0
        %v1424 = vadd.f32 %v1085, %v1423
        %1425 = vmatmul.f32.gmra.mxu0 %v453
        %v1426 = vpop.f32.mrf.mxu0
        %v1427 = vadd.f32 %v1088, %v1426
        %1428 = vmatmul.f32.gmra.mxu0 %v455
        %v1429 = vpop.f32.mrf.mxu0
        %v1430 = vadd.f32 %v1091, %v1429
        %1431 = vmatmul.f32.gmra.mxu0 %v457
        %v1432 = vpop.f32.mrf.mxu0
        %v1433 = vadd.f32 %v1094, %v1432
        %1434 = vmatmul.f32.gmra.mxu0 %v459
        %v1435 = vpop.f32.mrf.mxu0
        %v1436 = vadd.f32 %v1097, %v1435
        %1437 = vmatmul.f32.gmra.mxu0 %v461
        %v1438 = vpop.f32.mrf.mxu0
        %v1439 = vadd.f32 %v1100, %v1438
        %1440 = vmatmul.f32.gmra.mxu0 %v463
        %v1441 = vpop.f32.mrf.mxu0
        %v1442 = vadd.f32 %v1103, %v1441
        %1443 = vmatmul.f32.gmra.mxu0 %v465
        %v1444 = vpop.f32.mrf.mxu0
        %v1445 = vadd.f32 %v1106, %v1444
        %1446 = vmatmul.f32.gmra.mxu0 %v467
        %v1447 = vpop.f32.mrf.mxu0
        %v1448 = vadd.f32 %v1109, %v1447
        %1449 = vmatmul.f32.gmra.mxu0 %v469
        %v1450 = vpop.f32.mrf.mxu0
        %v1451 = vadd.f32 %v1112, %v1450
        %1452 = vmatmul.f32.gmra.mxu0 %v471
        %v1453 = vpop.f32.mrf.mxu0
        %v1454 = vadd.f32 %v1115, %v1453
        %1455 = vdwg.mxu0
        %1456 = vmatpush.msra.mxu0 %v536
        %1457 = vmatpush.msra.mxu0 %v534
        %1458 = vmatpush.msra.mxu0 %v532
        %1459 = vmatpush.msra.mxu0 %v530
        %1460 = vmatpush.msra.mxu0 %v528
        %1461 = vmatpush.msra.mxu0 %v526
        %1462 = vmatpush.msra.mxu0 %v524
        %1463 = vmatpush.msra.mxu0 %v522
        %1464 = vmatpush.msra.mxu0 %v520
        %1465 = vmatpush.msra.mxu0 %v518
        %1466 = vmatpush.msra.mxu0 %v516
        %1467 = vmatpush.msra.mxu0 %v514
        %1468 = vmatpush.msra.mxu0 %v512
        %1469 = vmatpush.msra.mxu0 %v510
        %1470 = vmatpush.msra.mxu0 %v508
        %1471 = vmatpush.msra.mxu0 %v506
        %1472 = vmatmul.f32.gmra.mxu0 %v410
        %v1473 = vpop.f32.mrf.mxu0
        %v1474 = vadd.f32 %v1361, %v1473
        %1475 = vmatmul.f32.gmra.mxu0 %v412
        %v1476 = vpop.f32.mrf.mxu0
        %v1477 = vadd.f32 %v1364, %v1476
        %1478 = vmatmul.f32.gmra.mxu0 %v414
        %v1479 = vpop.f32.mrf.mxu0
        %v1480 = vadd.f32 %v1367, %v1479
        %1481 = vmatmul.f32.gmra.mxu0 %v416
        %v1482 = vpop.f32.mrf.mxu0
        %v1483 = vadd.f32 %v1370, %v1482
        %1484 = vmatmul.f32.gmra.mxu0 %v418
        %v1485 = vpop.f32.mrf.mxu0
        %v1486 = vadd.f32 %v1373, %v1485
        %1487 = vmatmul.f32.gmra.mxu0 %v420
        %v1488 = vpop.f32.mrf.mxu0
        %v1489 = vadd.f32 %v1376, %v1488
        %1490 = vmatmul.f32.gmra.mxu0 %v422
        %v1491 = vpop.f32.mrf.mxu0
        %v1492 = vadd.f32 %v1379, %v1491
        %1493 = vmatmul.f32.gmra.mxu0 %v424
        %v1494 = vpop.f32.mrf.mxu0
        %v1495 = vadd.f32 %v1382, %v1494
        %1496 = vmatmul.f32.gmra.mxu0 %v426
        %v1497 = vpop.f32.mrf.mxu0
        %v1498 = vadd.f32 %v1385, %v1497
        %1499 = vmatmul.f32.gmra.mxu0 %v428
        %v1500 = vpop.f32.mrf.mxu0
        %v1501 = vadd.f32 %v1388, %v1500
        %1502 = vmatmul.f32.gmra.mxu0 %v430
        %v1503 = vpop.f32.mrf.mxu0
        %v1504 = vadd.f32 %v1391, %v1503
        %1505 = vmatmul.f32.gmra.mxu0 %v432
        %v1506 = vpop.f32.mrf.mxu0
        %v1507 = vadd.f32 %v1394, %v1506
        %1508 = vmatmul.f32.gmra.mxu0 %v434
        %v1509 = vpop.f32.mrf.mxu0
        %v1510 = vadd.f32 %v1397, %v1509
        %1511 = vmatmul.f32.gmra.mxu0 %v436
        %v1512 = vpop.f32.mrf.mxu0
        %v1513 = vadd.f32 %v1400, %v1512
        %1514 = vmatmul.f32.gmra.mxu0 %v438
        %v1515 = vpop.f32.mrf.mxu0
        %v1516 = vadd.f32 %v1403, %v1515
        %1517 = vmatmul.f32.gmra.mxu0 %v440
        %v1518 = vpop.f32.mrf.mxu0
        %v1519 = vadd.f32 %v1406, %v1518
        %1520 = vmatmul.f32.gmra.mxu0 %v442
        %v1521 = vpop.f32.mrf.mxu0
        %v1522 = vadd.f32 %v1409, %v1521
        %1523 = vmatmul.f32.gmra.mxu0 %v444
        %v1524 = vpop.f32.mrf.mxu0
        %v1525 = vadd.f32 %v1412, %v1524
        %1526 = vmatmul.f32.gmra.mxu0 %v446
        %v1527 = vpop.f32.mrf.mxu0
        %v1528 = vadd.f32 %v1415, %v1527
        %1529 = vmatmul.f32.gmra.mxu0 %v448
        %v1530 = vpop.f32.mrf.mxu0
        %v1531 = vadd.f32 %v1418, %v1530
        %1532 = vmatmul.f32.gmra.mxu0 %v450
        %v1533 = vpop.f32.mrf.mxu0
        %v1534 = vadd.f32 %v1421, %v1533
        %1535 = vmatmul.f32.gmra.mxu0 %v452
        %v1536 = vpop.f32.mrf.mxu0
        %v1537 = vadd.f32 %v1424, %v1536
        %1538 = vmatmul.f32.gmra.mxu0 %v454
        %v1539 = vpop.f32.mrf.mxu0
        %v1540 = vadd.f32 %v1427, %v1539
        %1541 = vmatmul.f32.gmra.mxu0 %v456
        %v1542 = vpop.f32.mrf.mxu0
        %v1543 = vadd.f32 %v1430, %v1542
        %1544 = vmatmul.f32.gmra.mxu0 %v458
        %v1545 = vpop.f32.mrf.mxu0
        %v1546 = vadd.f32 %v1433, %v1545
        %1547 = vmatmul.f32.gmra.mxu0 %v460
        %v1548 = vpop.f32.mrf.mxu0
        %v1549 = vadd.f32 %v1436, %v1548
        %1550 = vmatmul.f32.gmra.mxu0 %v462
        %v1551 = vpop.f32.mrf.mxu0
        %v1552 = vadd.f32 %v1439, %v1551
        %1553 = vmatmul.f32.gmra.mxu0 %v464
        %v1554 = vpop.f32.mrf.mxu0
        %v1555 = vadd.f32 %v1442, %v1554
        %1556 = vmatmul.f32.gmra.mxu0 %v466
        %v1557 = vpop.f32.mrf.mxu0
        %v1558 = vadd.f32 %v1445, %v1557
        %1559 = vmatmul.f32.gmra.mxu0 %v468
        %v1560 = vpop.f32.mrf.mxu0
        %v1561 = vadd.f32 %v1448, %v1560
        %1562 = vmatmul.f32.gmra.mxu0 %v470
        %v1563 = vpop.f32.mrf.mxu0
        %v1564 = vadd.f32 %v1451, %v1563
        %1565 = vmatmul.f32.gmra.mxu0 %v472
        %v1566 = vpop.f32.mrf.mxu0
        %v1567 = vadd.f32 %v1454, %v1566
        %1568 = vdwg.mxu0
        %v1569 = vld [vmem:[%s4] sm:$0x3]
        %v1571 = vperm.slane %v1569, 0
        %v1572 = vperm.slane %v1569, 1
        %v1575 = vadd.f32 %v1248, %v1571
        %v1576 = vadd.f32 %v1474, %v1572
        %v1577 = vadd.f32 %v1251, %v1571
        %v1578 = vadd.f32 %v1477, %v1572
        %v1579 = vadd.f32 %v1254, %v1571
        %v1580 = vadd.f32 %v1480, %v1572
        %v1581 = vadd.f32 %v1257, %v1571
        %v1582 = vadd.f32 %v1483, %v1572
        %v1583 = vadd.f32 %v1260, %v1571
        %v1584 = vadd.f32 %v1486, %v1572
        %v1585 = vadd.f32 %v1263, %v1571
        %v1586 = vadd.f32 %v1489, %v1572
        %v1587 = vadd.f32 %v1266, %v1571
        %v1588 = vadd.f32 %v1492, %v1572
        %v1589 = vadd.f32 %v1269, %v1571
        %v1590 = vadd.f32 %v1495, %v1572
        %v1591 = vadd.f32 %v1272, %v1571
        %v1592 = vadd.f32 %v1498, %v1572
        %v1593 = vadd.f32 %v1275, %v1571
        %v1594 = vadd.f32 %v1501, %v1572
        %v1595 = vadd.f32 %v1278, %v1571
        %v1596 = vadd.f32 %v1504, %v1572
        %v1597 = vadd.f32 %v1281, %v1571
        %v1598 = vadd.f32 %v1507, %v1572
        %v1599 = vadd.f32 %v1284, %v1571
        %v1600 = vadd.f32 %v1510, %v1572
        %v1601 = vadd.f32 %v1287, %v1571
        %v1602 = vadd.f32 %v1513, %v1572
        %v1603 = vadd.f32 %v1290, %v1571
        %v1604 = vadd.f32 %v1516, %v1572
        %v1605 = vadd.f32 %v1293, %v1571
        %v1606 = vadd.f32 %v1519, %v1572
        %v1607 = vadd.f32 %v1296, %v1571
        %v1608 = vadd.f32 %v1522, %v1572
        %v1609 = vadd.f32 %v1299, %v1571
        %v1610 = vadd.f32 %v1525, %v1572
        %v1611 = vadd.f32 %v1302, %v1571
        %v1612 = vadd.f32 %v1528, %v1572
        %v1613 = vadd.f32 %v1305, %v1571
        %v1614 = vadd.f32 %v1531, %v1572
        %v1615 = vadd.f32 %v1308, %v1571
        %v1616 = vadd.f32 %v1534, %v1572
        %v1617 = vadd.f32 %v1311, %v1571
        %v1618 = vadd.f32 %v1537, %v1572
        %v1619 = vadd.f32 %v1314, %v1571
        %v1620 = vadd.f32 %v1540, %v1572
        %v1621 = vadd.f32 %v1317, %v1571
        %v1622 = vadd.f32 %v1543, %v1572
        %v1623 = vadd.f32 %v1320, %v1571
        %v1624 = vadd.f32 %v1546, %v1572
        %v1625 = vadd.f32 %v1323, %v1571
        %v1626 = vadd.f32 %v1549, %v1572
        %v1627 = vadd.f32 %v1326, %v1571
        %v1628 = vadd.f32 %v1552, %v1572
        %v1629 = vadd.f32 %v1329, %v1571
        %v1630 = vadd.f32 %v1555, %v1572
        %v1631 = vadd.f32 %v1332, %v1571
        %v1632 = vadd.f32 %v1558, %v1572
        %v1633 = vadd.f32 %v1335, %v1571
        %v1634 = vadd.f32 %v1561, %v1572
        %v1635 = vadd.f32 %v1338, %v1571
        %v1636 = vadd.f32 %v1564, %v1572
        %v1637 = vadd.f32 %v1341, %v1571
        %v1638 = vadd.f32 %v1567, %v1572
        %v1639 = vmax.f32 %v1575, 0.0
        %v1640 = vmax.f32 %v1576, 0.0
        %v1641 = vmax.f32 %v1577, 0.0
        %v1642 = vmax.f32 %v1578, 0.0
        %v1643 = vmax.f32 %v1579, 0.0
        %v1644 = vmax.f32 %v1580, 0.0
        %v1645 = vmax.f32 %v1581, 0.0
        %v1646 = vmax.f32 %v1582, 0.0
        %v1647 = vmax.f32 %v1583, 0.0
        %v1648 = vmax.f32 %v1584, 0.0
        %v1649 = vmax.f32 %v1585, 0.0
        %v1650 = vmax.f32 %v1586, 0.0
        %v1651 = vmax.f32 %v1587, 0.0
        %v1652 = vmax.f32 %v1588, 0.0
        %v1653 = vmax.f32 %v1589, 0.0
        %v1654 = vmax.f32 %v1590, 0.0
        %v1655 = vmax.f32 %v1591, 0.0
        %v1656 = vmax.f32 %v1592, 0.0
        %v1657 = vmax.f32 %v1593, 0.0
        %v1658 = vmax.f32 %v1594, 0.0
        %v1659 = vmax.f32 %v1595, 0.0
        %v1660 = vmax.f32 %v1596, 0.0
        %v1661 = vmax.f32 %v1597, 0.0
        %v1662 = vmax.f32 %v1598, 0.0
        %v1663 = vmax.f32 %v1599, 0.0
        %v1664 = vmax.f32 %v1600, 0.0
        %v1665 = vmax.f32 %v1601, 0.0
        %v1666 = vmax.f32 %v1602, 0.0
        %v1667 = vmax.f32 %v1603, 0.0
        %v1668 = vmax.f32 %v1604, 0.0
        %v1669 = vmax.f32 %v1605, 0.0
        %v1670 = vmax.f32 %v1606, 0.0
        %v1671 = vmax.f32 %v1607, 0.0
        %v1672 = vmax.f32 %v1608, 0.0
        %v1673 = vmax.f32 %v1609, 0.0
        %v1674 = vmax.f32 %v1610, 0.0
        %v1675 = vmax.f32 %v1611, 0.0
        %v1676 = vmax.f32 %v1612, 0.0
        %v1677 = vmax.f32 %v1613, 0.0
        %v1678 = vmax.f32 %v1614, 0.0
        %v1679 = vmax.f32 %v1615, 0.0
        %v1680 = vmax.f32 %v1616, 0.0
        %v1681 = vmax.f32 %v1617, 0.0
        %v1682 = vmax.f32 %v1618, 0.0
        %v1683 = vmax.f32 %v1619, 0.0
        %v1684 = vmax.f32 %v1620, 0.0
        %v1685 = vmax.f32 %v1621, 0.0
        %v1686 = vmax.f32 %v1622, 0.0
        %v1687 = vmax.f32 %v1623, 0.0
        %v1688 = vmax.f32 %v1624, 0.0
        %v1689 = vmax.f32 %v1625, 0.0
        %v1690 = vmax.f32 %v1626, 0.0
        %v1691 = vmax.f32 %v1627, 0.0
        %v1692 = vmax.f32 %v1628, 0.0
        %v1693 = vmax.f32 %v1629, 0.0
        %v1694 = vmax.f32 %v1630, 0.0
        %v1695 = vmax.f32 %v1631, 0.0
        %v1696 = vmax.f32 %v1632, 0.0
        %v1697 = vmax.f32 %v1633, 0.0
        %v1698 = vmax.f32 %v1634, 0.0
        %v1699 = vmax.f32 %v1635, 0.0
        %v1700 = vmax.f32 %v1636, 0.0
        %v1701 = vmax.f32 %v1637, 0.0
        %v1702 = vmax.f32 %v1638, 0.0
        %v1703 = vld [vmem:[%s5] sm:$0x3]
        %v1705 = vperm.slane %v1703, 0
        %v1706 = vperm.slane %v1703, 1
        %v1709 = vmul.f32 %v1639, %v1705
        %v1710 = vmul.f32 %v1640, %v1706
        %v1711 = vmul.f32 %v1641, %v1705
        %v1712 = vmul.f32 %v1642, %v1706
        %v1713 = vmul.f32 %v1643, %v1705
        %v1714 = vmul.f32 %v1644, %v1706
        %v1715 = vmul.f32 %v1645, %v1705
        %v1716 = vmul.f32 %v1646, %v1706
        %v1717 = vmul.f32 %v1647, %v1705
        %v1718 = vmul.f32 %v1648, %v1706
        %v1719 = vmul.f32 %v1649, %v1705
        %v1720 = vmul.f32 %v1650, %v1706
        %v1721 = vmul.f32 %v1651, %v1705
        %v1722 = vmul.f32 %v1652, %v1706
        %v1723 = vmul.f32 %v1653, %v1705
        %v1724 = vmul.f32 %v1654, %v1706
        %v1725 = vmul.f32 %v1655, %v1705
        %v1726 = vmul.f32 %v1656, %v1706
        %v1727 = vmul.f32 %v1657, %v1705
        %v1728 = vmul.f32 %v1658, %v1706
        %v1729 = vmul.f32 %v1659, %v1705
        %v1730 = vmul.f32 %v1660, %v1706
        %v1731 = vmul.f32 %v1661, %v1705
        %v1732 = vmul.f32 %v1662, %v1706
        %v1733 = vmul.f32 %v1663, %v1705
        %v1734 = vmul.f32 %v1664, %v1706
        %v1735 = vmul.f32 %v1665, %v1705
        %v1736 = vmul.f32 %v1666, %v1706
        %v1737 = vmul.f32 %v1667, %v1705
        %v1738 = vmul.f32 %v1668, %v1706
        %v1739 = vmul.f32 %v1669, %v1705
        %v1740 = vmul.f32 %v1670, %v1706
        %v1741 = vmul.f32 %v1671, %v1705
        %v1742 = vmul.f32 %v1672, %v1706
        %v1743 = vmul.f32 %v1673, %v1705
        %v1744 = vmul.f32 %v1674, %v1706
        %v1745 = vmul.f32 %v1675, %v1705
        %v1746 = vmul.f32 %v1676, %v1706
        %v1747 = vmul.f32 %v1677, %v1705
        %v1748 = vmul.f32 %v1678, %v1706
        %v1749 = vmul.f32 %v1679, %v1705
        %v1750 = vmul.f32 %v1680, %v1706
        %v1751 = vmul.f32 %v1681, %v1705
        %v1752 = vmul.f32 %v1682, %v1706
        %v1753 = vmul.f32 %v1683, %v1705
        %v1754 = vmul.f32 %v1684, %v1706
        %v1755 = vmul.f32 %v1685, %v1705
        %v1756 = vmul.f32 %v1686, %v1706
        %v1757 = vmul.f32 %v1687, %v1705
        %v1758 = vmul.f32 %v1688, %v1706
        %v1759 = vmul.f32 %v1689, %v1705
        %v1760 = vmul.f32 %v1690, %v1706
        %v1761 = vmul.f32 %v1691, %v1705
        %v1762 = vmul.f32 %v1692, %v1706
        %v1763 = vmul.f32 %v1693, %v1705
        %v1764 = vmul.f32 %v1694, %v1706
        %v1765 = vmul.f32 %v1695, %v1705
        %v1766 = vmul.f32 %v1696, %v1706
        %v1767 = vmul.f32 %v1697, %v1705
        %v1768 = vmul.f32 %v1698, %v1706
        %v1769 = vmul.f32 %v1699, %v1705
        %v1770 = vmul.f32 %v1700, %v1706
        %v1771 = vmul.f32 %v1701, %v1705
        %v1772 = vmul.f32 %v1702, %v1706
        %v1773 = vadd.f32 %v1709, %v1710
        %1774 = vadd.xlane.f32.xlu0 %v1773
        %v1775 = vpop.xlane.xlu0 %1774
        %v1776 = vadd.f32 %v1711, %v1712
        %1777 = vadd.xlane.f32.xlu0 %v1776
        %v1778 = vpop.xlane.xlu0 %1777
        %v1779 = vadd.f32 %v1713, %v1714
        %1780 = vadd.xlane.f32.xlu0 %v1779
        %v1781 = vpop.xlane.xlu0 %1780
        %v1782 = vadd.f32 %v1715, %v1716
        %1783 = vadd.xlane.f32.xlu0 %v1782
        %v1784 = vpop.xlane.xlu0 %1783
        %v1785 = vadd.f32 %v1717, %v1718
        %1786 = vadd.xlane.f32.xlu0 %v1785
        %v1787 = vpop.xlane.xlu0 %1786
        %v1788 = vadd.f32 %v1719, %v1720
        %1789 = vadd.xlane.f32.xlu0 %v1788
        %v1790 = vpop.xlane.xlu0 %1789
        %v1791 = vadd.f32 %v1721, %v1722
        %1792 = vadd.xlane.f32.xlu0 %v1791
        %v1793 = vpop.xlane.xlu0 %1792
        %v1794 = vadd.f32 %v1723, %v1724
        %1795 = vadd.xlane.f32.xlu0 %v1794
        %v1796 = vpop.xlane.xlu0 %1795
        %v1797 = vadd.f32 %v1725, %v1726
        %1798 = vadd.xlane.f32.xlu0 %v1797
        %v1799 = vpop.xlane.xlu0 %1798
        %v1800 = vadd.f32 %v1727, %v1728
        %1801 = vadd.xlane.f32.xlu0 %v1800
        %v1802 = vpop.xlane.xlu0 %1801
        %v1803 = vadd.f32 %v1729, %v1730
        %1804 = vadd.xlane.f32.xlu0 %v1803
        %v1805 = vpop.xlane.xlu0 %1804
        %v1806 = vadd.f32 %v1731, %v1732
        %1807 = vadd.xlane.f32.xlu0 %v1806
        %v1808 = vpop.xlane.xlu0 %1807
        %v1809 = vadd.f32 %v1733, %v1734
        %1810 = vadd.xlane.f32.xlu0 %v1809
        %v1811 = vpop.xlane.xlu0 %1810
        %v1812 = vadd.f32 %v1735, %v1736
        %1813 = vadd.xlane.f32.xlu0 %v1812
        %v1814 = vpop.xlane.xlu0 %1813
        %v1815 = vadd.f32 %v1737, %v1738
        %1816 = vadd.xlane.f32.xlu0 %v1815
        %v1817 = vpop.xlane.xlu0 %1816
        %v1818 = vadd.f32 %v1739, %v1740
        %1819 = vadd.xlane.f32.xlu0 %v1818
        %v1820 = vpop.xlane.xlu0 %1819
        %v1821 = vadd.f32 %v1741, %v1742
        %1822 = vadd.xlane.f32.xlu0 %v1821
        %v1823 = vpop.xlane.xlu0 %1822
        %v1824 = vadd.f32 %v1743, %v1744
        %1825 = vadd.xlane.f32.xlu0 %v1824
        %v1826 = vpop.xlane.xlu0 %1825
        %v1827 = vadd.f32 %v1745, %v1746
        %1828 = vadd.xlane.f32.xlu0 %v1827
        %v1829 = vpop.xlane.xlu0 %1828
        %v1830 = vadd.f32 %v1747, %v1748
        %1831 = vadd.xlane.f32.xlu0 %v1830
        %v1832 = vpop.xlane.xlu0 %1831
        %v1833 = vadd.f32 %v1749, %v1750
        %1834 = vadd.xlane.f32.xlu0 %v1833
        %v1835 = vpop.xlane.xlu0 %1834
        %v1836 = vadd.f32 %v1751, %v1752
        %1837 = vadd.xlane.f32.xlu0 %v1836
        %v1838 = vpop.xlane.xlu0 %1837
        %v1839 = vadd.f32 %v1753, %v1754
        %1840 = vadd.xlane.f32.xlu0 %v1839
        %v1841 = vpop.xlane.xlu0 %1840
        %v1842 = vadd.f32 %v1755, %v1756
        %1843 = vadd.xlane.f32.xlu0 %v1842
        %v1844 = vpop.xlane.xlu0 %1843
        %v1845 = vadd.f32 %v1757, %v1758
        %1846 = vadd.xlane.f32.xlu0 %v1845
        %v1847 = vpop.xlane.xlu0 %1846
        %v1848 = vadd.f32 %v1759, %v1760
        %1849 = vadd.xlane.f32.xlu0 %v1848
        %v1850 = vpop.xlane.xlu0 %1849
        %v1851 = vadd.f32 %v1761, %v1762
        %1852 = vadd.xlane.f32.xlu0 %v1851
        %v1853 = vpop.xlane.xlu0 %1852
        %v1854 = vadd.f32 %v1763, %v1764
        %1855 = vadd.xlane.f32.xlu0 %v1854
        %v1856 = vpop.xlane.xlu0 %1855
        %v1857 = vadd.f32 %v1765, %v1766
        %1858 = vadd.xlane.f32.xlu0 %v1857
        %v1859 = vpop.xlane.xlu0 %1858
        %v1860 = vadd.f32 %v1767, %v1768
        %1861 = vadd.xlane.f32.xlu0 %v1860
        %v1862 = vpop.xlane.xlu0 %1861
        %v1863 = vadd.f32 %v1769, %v1770
        %1864 = vadd.xlane.f32.xlu0 %v1863
        %v1865 = vpop.xlane.xlu0 %1864
        %v1866 = vadd.f32 %v1771, %v1772
        %1867 = vadd.xlane.f32.xlu0 %v1866
        %v1868 = vpop.xlane.xlu0 %1867
        %s1869 = sld [smem:[#allocation2]]
        %v1870 = vstv %s1869
        %v1871 = vadd.f32 %v1775, %v1870
        %v1872 = vadd.f32 %v1778, %v1870
        %v1873 = vadd.f32 %v1781, %v1870
        %v1874 = vadd.f32 %v1784, %v1870
        %v1875 = vadd.f32 %v1787, %v1870
        %v1876 = vadd.f32 %v1790, %v1870
        %v1877 = vadd.f32 %v1793, %v1870
        %v1878 = vadd.f32 %v1796, %v1870
        %v1879 = vadd.f32 %v1799, %v1870
        %v1880 = vadd.f32 %v1802, %v1870
        %v1881 = vadd.f32 %v1805, %v1870
        %v1882 = vadd.f32 %v1808, %v1870
        %v1883 = vadd.f32 %v1811, %v1870
        %v1884 = vadd.f32 %v1814, %v1870
        %v1885 = vadd.f32 %v1817, %v1870
        %v1886 = vadd.f32 %v1820, %v1870
        %v1887 = vadd.f32 %v1823, %v1870
        %v1888 = vadd.f32 %v1826, %v1870
        %v1889 = vadd.f32 %v1829, %v1870
        %v1890 = vadd.f32 %v1832, %v1870
        %v1891 = vadd.f32 %v1835, %v1870
        %v1892 = vadd.f32 %v1838, %v1870
        %v1893 = vadd.f32 %v1841, %v1870
        %v1894 = vadd.f32 %v1844, %v1870
        %v1895 = vadd.f32 %v1847, %v1870
        %v1896 = vadd.f32 %v1850, %v1870
        %v1897 = vadd.f32 %v1853, %v1870
        %v1898 = vadd.f32 %v1856, %v1870
        %v1899 = vadd.f32 %v1859, %v1870
        %v1900 = vadd.f32 %v1862, %v1870
        %v1901 = vadd.f32 %v1865, %v1870
        %v1902 = vadd.f32 %v1868, %v1870
        %v1903 = vxor.u32 %v1871, 2147483648
        %v1904 = vxor.u32 %v1872, 2147483648
        %v1905 = vxor.u32 %v1873, 2147483648
        %v1906 = vxor.u32 %v1874, 2147483648
        %v1907 = vxor.u32 %v1875, 2147483648
        %v1908 = vxor.u32 %v1876, 2147483648
        %v1909 = vxor.u32 %v1877, 2147483648
        %v1910 = vxor.u32 %v1878, 2147483648
        %v1911 = vxor.u32 %v1879, 2147483648
        %v1912 = vxor.u32 %v1880, 2147483648
        %v1913 = vxor.u32 %v1881, 2147483648
        %v1914 = vxor.u32 %v1882, 2147483648
        %v1915 = vxor.u32 %v1883, 2147483648
        %v1916 = vxor.u32 %v1884, 2147483648
        %v1917 = vxor.u32 %v1885, 2147483648
        %v1918 = vxor.u32 %v1886, 2147483648
        %v1919 = vxor.u32 %v1887, 2147483648
        %v1920 = vxor.u32 %v1888, 2147483648
        %v1921 = vxor.u32 %v1889, 2147483648
        %v1922 = vxor.u32 %v1890, 2147483648
        %v1923 = vxor.u32 %v1891, 2147483648
        %v1924 = vxor.u32 %v1892, 2147483648
        %v1925 = vxor.u32 %v1893, 2147483648
        %v1926 = vxor.u32 %v1894, 2147483648
        %v1927 = vxor.u32 %v1895, 2147483648
        %v1928 = vxor.u32 %v1896, 2147483648
        %v1929 = vxor.u32 %v1897, 2147483648
        %v1930 = vxor.u32 %v1898, 2147483648
        %v1931 = vxor.u32 %v1899, 2147483648
        %v1932 = vxor.u32 %v1900, 2147483648
        %v1933 = vxor.u32 %v1901, 2147483648
        %v1934 = vxor.u32 %v1902, 2147483648
        %v1935 = vmul.f32 %v1903, 1.442695
        %v1936 = vpow.pop %v1935
        %v1937 = vmul.f32 %v1904, 1.442695
        %v1938 = vpow.pop %v1937
        %v1939 = vmul.f32 %v1905, 1.442695
        %v1940 = vpow.pop %v1939
        %v1941 = vmul.f32 %v1906, 1.442695
        %v1942 = vpow.pop %v1941
        %v1943 = vmul.f32 %v1907, 1.442695
        %v1944 = vpow.pop %v1943
        %v1945 = vmul.f32 %v1908, 1.442695
        %v1946 = vpow.pop %v1945
        %v1947 = vmul.f32 %v1909, 1.442695
        %v1948 = vpow.pop %v1947
        %v1949 = vmul.f32 %v1910, 1.442695
        %v1950 = vpow.pop %v1949
        %v1951 = vmul.f32 %v1911, 1.442695
        %v1952 = vpow.pop %v1951
        %v1953 = vmul.f32 %v1912, 1.442695
        %v1954 = vpow.pop %v1953
        %v1955 = vmul.f32 %v1913, 1.442695
        %v1956 = vpow.pop %v1955
        %v1957 = vmul.f32 %v1914, 1.442695
        %v1958 = vpow.pop %v1957
        %v1959 = vmul.f32 %v1915, 1.442695
        %v1960 = vpow.pop %v1959
        %v1961 = vmul.f32 %v1916, 1.442695
        %v1962 = vpow.pop %v1961
        %v1963 = vmul.f32 %v1917, 1.442695
        %v1964 = vpow.pop %v1963
        %v1965 = vmul.f32 %v1918, 1.442695
        %v1966 = vpow.pop %v1965
        %v1967 = vmul.f32 %v1919, 1.442695
        %v1968 = vpow.pop %v1967
        %v1969 = vmul.f32 %v1920, 1.442695
        %v1970 = vpow.pop %v1969
        %v1971 = vmul.f32 %v1921, 1.442695
        %v1972 = vpow.pop %v1971
        %v1973 = vmul.f32 %v1922, 1.442695
        %v1974 = vpow.pop %v1973
        %v1975 = vmul.f32 %v1923, 1.442695
        %v1976 = vpow.pop %v1975
        %v1977 = vmul.f32 %v1924, 1.442695
        %v1978 = vpow.pop %v1977
        %v1979 = vmul.f32 %v1925, 1.442695
        %v1980 = vpow.pop %v1979
        %v1981 = vmul.f32 %v1926, 1.442695
        %v1982 = vpow.pop %v1981
        %v1983 = vmul.f32 %v1927, 1.442695
        %v1984 = vpow.pop %v1983
        %v1985 = vmul.f32 %v1928, 1.442695
        %v1986 = vpow.pop %v1985
        %v1987 = vmul.f32 %v1929, 1.442695
        %v1988 = vpow.pop %v1987
        %v1989 = vmul.f32 %v1930, 1.442695
        %v1990 = vpow.pop %v1989
        %v1991 = vmul.f32 %v1931, 1.442695
        %v1992 = vpow.pop %v1991
        %v1993 = vmul.f32 %v1932, 1.442695
        %v1994 = vpow.pop %v1993
        %v1995 = vmul.f32 %v1933, 1.442695
        %v1996 = vpow.pop %v1995
        %v1997 = vmul.f32 %v1934, 1.442695
        %v1998 = vpow.pop %v1997
        %v1999 = vadd.f32 %v1936, 1.0
        %v2000 = vadd.f32 %v1938, 1.0
        %v2001 = vadd.f32 %v1940, 1.0
        %v2002 = vadd.f32 %v1942, 1.0
        %v2003 = vadd.f32 %v1944, 1.0
        %v2004 = vadd.f32 %v1946, 1.0
        %v2005 = vadd.f32 %v1948, 1.0
        %v2006 = vadd.f32 %v1950, 1.0
        %v2007 = vadd.f32 %v1952, 1.0
        %v2008 = vadd.f32 %v1954, 1.0
        %v2009 = vadd.f32 %v1956, 1.0
        %v2010 = vadd.f32 %v1958, 1.0
        %v2011 = vadd.f32 %v1960, 1.0
        %v2012 = vadd.f32 %v1962, 1.0
        %v2013 = vadd.f32 %v1964, 1.0
        %v2014 = vadd.f32 %v1966, 1.0
        %v2015 = vadd.f32 %v1968, 1.0
        %v2016 = vadd.f32 %v1970, 1.0
        %v2017 = vadd.f32 %v1972, 1.0
        %v2018 = vadd.f32 %v1974, 1.0
        %v2019 = vadd.f32 %v1976, 1.0
        %v2020 = vadd.f32 %v1978, 1.0
        %v2021 = vadd.f32 %v1980, 1.0
        %v2022 = vadd.f32 %v1982, 1.0
        %v2023 = vadd.f32 %v1984, 1.0
        %v2024 = vadd.f32 %v1986, 1.0
        %v2025 = vadd.f32 %v1988, 1.0
        %v2026 = vadd.f32 %v1990, 1.0
        %v2027 = vadd.f32 %v1992, 1.0
        %v2028 = vadd.f32 %v1994, 1.0
        %v2029 = vadd.f32 %v1996, 1.0
        %v2030 = vadd.f32 %v1998, 1.0
        %v2031 = vrcp.pop %v1999
        %v2032 = vmul.f32 %v1999, %v2031
        %v2033 = vsub.f32 1.0, %v2032
        %v2034 = vmul.f32 %v2031, %v2033
        %v2035 = vadd.f32 %v2031, %v2034
        %vm2036 = vweird.f32 %v1999
        %vm2037 = vweird.f32 %v2031
        %vm2038 = vmor %vm2036, %vm2037
        %v2039 = vsel %vm2038, %v2031, %v2035
        %v2040 = vand.u32 2147483647, %v1999
        %vm2041 = vcmp.eq.f32.partialorder %v2040, 8.507059e+37
        %v2042 = vand.u32 %v1999, 2147483648
        %v2043 = vor.u32 1.1754944e-38, %v2042
        %v2044 = vsel %vm2041, %v2043, %v2039
        %v2045 = vmul.f32 1.0, %v2044
        %v2046 = vrcp.pop %v2000
        %v2047 = vmul.f32 %v2000, %v2046
        %v2048 = vsub.f32 1.0, %v2047
        %v2049 = vmul.f32 %v2046, %v2048
        %v2050 = vadd.f32 %v2046, %v2049
        %vm2051 = vweird.f32 %v2000
        %vm2052 = vweird.f32 %v2046
        %vm2053 = vmor %vm2051, %vm2052
        %v2054 = vsel %vm2053, %v2046, %v2050
        %v2055 = vand.u32 2147483647, %v2000
        %vm2056 = vcmp.eq.f32.partialorder %v2055, 8.507059e+37
        %v2057 = vand.u32 %v2000, 2147483648
        %v2058 = vor.u32 1.1754944e-38, %v2057
        %v2059 = vsel %vm2056, %v2058, %v2054
        %v2060 = vmul.f32 1.0, %v2059
        %v2061 = vrcp.pop %v2001
        %v2062 = vmul.f32 %v2001, %v2061
        %v2063 = vsub.f32 1.0, %v2062
        %v2064 = vmul.f32 %v2061, %v2063
        %v2065 = vadd.f32 %v2061, %v2064
        %vm2066 = vweird.f32 %v2001
        %vm2067 = vweird.f32 %v2061
        %vm2068 = vmor %vm2066, %vm2067
        %v2069 = vsel %vm2068, %v2061, %v2065
        %v2070 = vand.u32 2147483647, %v2001
        %vm2071 = vcmp.eq.f32.partialorder %v2070, 8.507059e+37
        %v2072 = vand.u32 %v2001, 2147483648
        %v2073 = vor.u32 1.1754944e-38, %v2072
        %v2074 = vsel %vm2071, %v2073, %v2069
        %v2075 = vmul.f32 1.0, %v2074
        %v2076 = vrcp.pop %v2002
        %v2077 = vmul.f32 %v2002, %v2076
        %v2078 = vsub.f32 1.0, %v2077
        %v2079 = vmul.f32 %v2076, %v2078
        %v2080 = vadd.f32 %v2076, %v2079
        %vm2081 = vweird.f32 %v2002
        %vm2082 = vweird.f32 %v2076
        %vm2083 = vmor %vm2081, %vm2082
        %v2084 = vsel %vm2083, %v2076, %v2080
        %v2085 = vand.u32 2147483647, %v2002
        %vm2086 = vcmp.eq.f32.partialorder %v2085, 8.507059e+37
        %v2087 = vand.u32 %v2002, 2147483648
        %v2088 = vor.u32 1.1754944e-38, %v2087
        %v2089 = vsel %vm2086, %v2088, %v2084
        %v2090 = vmul.f32 1.0, %v2089
        %v2091 = vrcp.pop %v2003
        %v2092 = vmul.f32 %v2003, %v2091
        %v2093 = vsub.f32 1.0, %v2092
        %v2094 = vmul.f32 %v2091, %v2093
        %v2095 = vadd.f32 %v2091, %v2094
        %vm2096 = vweird.f32 %v2003
        %vm2097 = vweird.f32 %v2091
        %vm2098 = vmor %vm2096, %vm2097
        %v2099 = vsel %vm2098, %v2091, %v2095
        %v2100 = vand.u32 2147483647, %v2003
        %vm2101 = vcmp.eq.f32.partialorder %v2100, 8.507059e+37
        %v2102 = vand.u32 %v2003, 2147483648
        %v2103 = vor.u32 1.1754944e-38, %v2102
        %v2104 = vsel %vm2101, %v2103, %v2099
        %v2105 = vmul.f32 1.0, %v2104
        %v2106 = vrcp.pop %v2004
        %v2107 = vmul.f32 %v2004, %v2106
        %v2108 = vsub.f32 1.0, %v2107
        %v2109 = vmul.f32 %v2106, %v2108
        %v2110 = vadd.f32 %v2106, %v2109
        %vm2111 = vweird.f32 %v2004
        %vm2112 = vweird.f32 %v2106
        %vm2113 = vmor %vm2111, %vm2112
        %v2114 = vsel %vm2113, %v2106, %v2110
        %v2115 = vand.u32 2147483647, %v2004
        %vm2116 = vcmp.eq.f32.partialorder %v2115, 8.507059e+37
        %v2117 = vand.u32 %v2004, 2147483648
        %v2118 = vor.u32 1.1754944e-38, %v2117
        %v2119 = vsel %vm2116, %v2118, %v2114
        %v2120 = vmul.f32 1.0, %v2119
        %v2121 = vrcp.pop %v2005
        %v2122 = vmul.f32 %v2005, %v2121
        %v2123 = vsub.f32 1.0, %v2122
        %v2124 = vmul.f32 %v2121, %v2123
        %v2125 = vadd.f32 %v2121, %v2124
        %vm2126 = vweird.f32 %v2005
        %vm2127 = vweird.f32 %v2121
        %vm2128 = vmor %vm2126, %vm2127
        %v2129 = vsel %vm2128, %v2121, %v2125
        %v2130 = vand.u32 2147483647, %v2005
        %vm2131 = vcmp.eq.f32.partialorder %v2130, 8.507059e+37
        %v2132 = vand.u32 %v2005, 2147483648
        %v2133 = vor.u32 1.1754944e-38, %v2132
        %v2134 = vsel %vm2131, %v2133, %v2129
        %v2135 = vmul.f32 1.0, %v2134
        %v2136 = vrcp.pop %v2006
        %v2137 = vmul.f32 %v2006, %v2136
        %v2138 = vsub.f32 1.0, %v2137
        %v2139 = vmul.f32 %v2136, %v2138
        %v2140 = vadd.f32 %v2136, %v2139
        %vm2141 = vweird.f32 %v2006
        %vm2142 = vweird.f32 %v2136
        %vm2143 = vmor %vm2141, %vm2142
        %v2144 = vsel %vm2143, %v2136, %v2140
        %v2145 = vand.u32 2147483647, %v2006
        %vm2146 = vcmp.eq.f32.partialorder %v2145, 8.507059e+37
        %v2147 = vand.u32 %v2006, 2147483648
        %v2148 = vor.u32 1.1754944e-38, %v2147
        %v2149 = vsel %vm2146, %v2148, %v2144
        %v2150 = vmul.f32 1.0, %v2149
        %v2151 = vrcp.pop %v2007
        %v2152 = vmul.f32 %v2007, %v2151
        %v2153 = vsub.f32 1.0, %v2152
        %v2154 = vmul.f32 %v2151, %v2153
        %v2155 = vadd.f32 %v2151, %v2154
        %vm2156 = vweird.f32 %v2007
        %vm2157 = vweird.f32 %v2151
        %vm2158 = vmor %vm2156, %vm2157
        %v2159 = vsel %vm2158, %v2151, %v2155
        %v2160 = vand.u32 2147483647, %v2007
        %vm2161 = vcmp.eq.f32.partialorder %v2160, 8.507059e+37
        %v2162 = vand.u32 %v2007, 2147483648
        %v2163 = vor.u32 1.1754944e-38, %v2162
        %v2164 = vsel %vm2161, %v2163, %v2159
        %v2165 = vmul.f32 1.0, %v2164
        %v2166 = vrcp.pop %v2008
        %v2167 = vmul.f32 %v2008, %v2166
        %v2168 = vsub.f32 1.0, %v2167
        %v2169 = vmul.f32 %v2166, %v2168
        %v2170 = vadd.f32 %v2166, %v2169
        %vm2171 = vweird.f32 %v2008
        %vm2172 = vweird.f32 %v2166
        %vm2173 = vmor %vm2171, %vm2172
        %v2174 = vsel %vm2173, %v2166, %v2170
        %v2175 = vand.u32 2147483647, %v2008
        %vm2176 = vcmp.eq.f32.partialorder %v2175, 8.507059e+37
        %v2177 = vand.u32 %v2008, 2147483648
        %v2178 = vor.u32 1.1754944e-38, %v2177
        %v2179 = vsel %vm2176, %v2178, %v2174
        %v2180 = vmul.f32 1.0, %v2179
        %v2181 = vrcp.pop %v2009
        %v2182 = vmul.f32 %v2009, %v2181
        %v2183 = vsub.f32 1.0, %v2182
        %v2184 = vmul.f32 %v2181, %v2183
        %v2185 = vadd.f32 %v2181, %v2184
        %vm2186 = vweird.f32 %v2009
        %vm2187 = vweird.f32 %v2181
        %vm2188 = vmor %vm2186, %vm2187
        %v2189 = vsel %vm2188, %v2181, %v2185
        %v2190 = vand.u32 2147483647, %v2009
        %vm2191 = vcmp.eq.f32.partialorder %v2190, 8.507059e+37
        %v2192 = vand.u32 %v2009, 2147483648
        %v2193 = vor.u32 1.1754944e-38, %v2192
        %v2194 = vsel %vm2191, %v2193, %v2189
        %v2195 = vmul.f32 1.0, %v2194
        %v2196 = vrcp.pop %v2010
        %v2197 = vmul.f32 %v2010, %v2196
        %v2198 = vsub.f32 1.0, %v2197
        %v2199 = vmul.f32 %v2196, %v2198
        %v2200 = vadd.f32 %v2196, %v2199
        %vm2201 = vweird.f32 %v2010
        %vm2202 = vweird.f32 %v2196
        %vm2203 = vmor %vm2201, %vm2202
        %v2204 = vsel %vm2203, %v2196, %v2200
        %v2205 = vand.u32 2147483647, %v2010
        %vm2206 = vcmp.eq.f32.partialorder %v2205, 8.507059e+37
        %v2207 = vand.u32 %v2010, 2147483648
        %v2208 = vor.u32 1.1754944e-38, %v2207
        %v2209 = vsel %vm2206, %v2208, %v2204
        %v2210 = vmul.f32 1.0, %v2209
        %v2211 = vrcp.pop %v2011
        %v2212 = vmul.f32 %v2011, %v2211
        %v2213 = vsub.f32 1.0, %v2212
        %v2214 = vmul.f32 %v2211, %v2213
        %v2215 = vadd.f32 %v2211, %v2214
        %vm2216 = vweird.f32 %v2011
        %vm2217 = vweird.f32 %v2211
        %vm2218 = vmor %vm2216, %vm2217
        %v2219 = vsel %vm2218, %v2211, %v2215
        %v2220 = vand.u32 2147483647, %v2011
        %vm2221 = vcmp.eq.f32.partialorder %v2220, 8.507059e+37
        %v2222 = vand.u32 %v2011, 2147483648
        %v2223 = vor.u32 1.1754944e-38, %v2222
        %v2224 = vsel %vm2221, %v2223, %v2219
        %v2225 = vmul.f32 1.0, %v2224
        %v2226 = vrcp.pop %v2012
        %v2227 = vmul.f32 %v2012, %v2226
        %v2228 = vsub.f32 1.0, %v2227
        %v2229 = vmul.f32 %v2226, %v2228
        %v2230 = vadd.f32 %v2226, %v2229
        %vm2231 = vweird.f32 %v2012
        %vm2232 = vweird.f32 %v2226
        %vm2233 = vmor %vm2231, %vm2232
        %v2234 = vsel %vm2233, %v2226, %v2230
        %v2235 = vand.u32 2147483647, %v2012
        %vm2236 = vcmp.eq.f32.partialorder %v2235, 8.507059e+37
        %v2237 = vand.u32 %v2012, 2147483648
        %v2238 = vor.u32 1.1754944e-38, %v2237
        %v2239 = vsel %vm2236, %v2238, %v2234
        %v2240 = vmul.f32 1.0, %v2239
        %v2241 = vrcp.pop %v2013
        %v2242 = vmul.f32 %v2013, %v2241
        %v2243 = vsub.f32 1.0, %v2242
        %v2244 = vmul.f32 %v2241, %v2243
        %v2245 = vadd.f32 %v2241, %v2244
        %vm2246 = vweird.f32 %v2013
        %vm2247 = vweird.f32 %v2241
        %vm2248 = vmor %vm2246, %vm2247
        %v2249 = vsel %vm2248, %v2241, %v2245
        %v2250 = vand.u32 2147483647, %v2013
        %vm2251 = vcmp.eq.f32.partialorder %v2250, 8.507059e+37
        %v2252 = vand.u32 %v2013, 2147483648
        %v2253 = vor.u32 1.1754944e-38, %v2252
        %v2254 = vsel %vm2251, %v2253, %v2249
        %v2255 = vmul.f32 1.0, %v2254
        %v2256 = vrcp.pop %v2014
        %v2257 = vmul.f32 %v2014, %v2256
        %v2258 = vsub.f32 1.0, %v2257
        %v2259 = vmul.f32 %v2256, %v2258
        %v2260 = vadd.f32 %v2256, %v2259
        %vm2261 = vweird.f32 %v2014
        %vm2262 = vweird.f32 %v2256
        %vm2263 = vmor %vm2261, %vm2262
        %v2264 = vsel %vm2263, %v2256, %v2260
        %v2265 = vand.u32 2147483647, %v2014
        %vm2266 = vcmp.eq.f32.partialorder %v2265, 8.507059e+37
        %v2267 = vand.u32 %v2014, 2147483648
        %v2268 = vor.u32 1.1754944e-38, %v2267
        %v2269 = vsel %vm2266, %v2268, %v2264
        %v2270 = vmul.f32 1.0, %v2269
        %v2271 = vrcp.pop %v2015
        %v2272 = vmul.f32 %v2015, %v2271
        %v2273 = vsub.f32 1.0, %v2272
        %v2274 = vmul.f32 %v2271, %v2273
        %v2275 = vadd.f32 %v2271, %v2274
        %vm2276 = vweird.f32 %v2015
        %vm2277 = vweird.f32 %v2271
        %vm2278 = vmor %vm2276, %vm2277
        %v2279 = vsel %vm2278, %v2271, %v2275
        %v2280 = vand.u32 2147483647, %v2015
        %vm2281 = vcmp.eq.f32.partialorder %v2280, 8.507059e+37
        %v2282 = vand.u32 %v2015, 2147483648
        %v2283 = vor.u32 1.1754944e-38, %v2282
        %v2284 = vsel %vm2281, %v2283, %v2279
        %v2285 = vmul.f32 1.0, %v2284
        %v2286 = vrcp.pop %v2016
        %v2287 = vmul.f32 %v2016, %v2286
        %v2288 = vsub.f32 1.0, %v2287
        %v2289 = vmul.f32 %v2286, %v2288
        %v2290 = vadd.f32 %v2286, %v2289
        %vm2291 = vweird.f32 %v2016
        %vm2292 = vweird.f32 %v2286
        %vm2293 = vmor %vm2291, %vm2292
        %v2294 = vsel %vm2293, %v2286, %v2290
        %v2295 = vand.u32 2147483647, %v2016
        %vm2296 = vcmp.eq.f32.partialorder %v2295, 8.507059e+37
        %v2297 = vand.u32 %v2016, 2147483648
        %v2298 = vor.u32 1.1754944e-38, %v2297
        %v2299 = vsel %vm2296, %v2298, %v2294
        %v2300 = vmul.f32 1.0, %v2299
        %v2301 = vrcp.pop %v2017
        %v2302 = vmul.f32 %v2017, %v2301
        %v2303 = vsub.f32 1.0, %v2302
        %v2304 = vmul.f32 %v2301, %v2303
        %v2305 = vadd.f32 %v2301, %v2304
        %vm2306 = vweird.f32 %v2017
        %vm2307 = vweird.f32 %v2301
        %vm2308 = vmor %vm2306, %vm2307
        %v2309 = vsel %vm2308, %v2301, %v2305
        %v2310 = vand.u32 2147483647, %v2017
        %vm2311 = vcmp.eq.f32.partialorder %v2310, 8.507059e+37
        %v2312 = vand.u32 %v2017, 2147483648
        %v2313 = vor.u32 1.1754944e-38, %v2312
        %v2314 = vsel %vm2311, %v2313, %v2309
        %v2315 = vmul.f32 1.0, %v2314
        %v2316 = vrcp.pop %v2018
        %v2317 = vmul.f32 %v2018, %v2316
        %v2318 = vsub.f32 1.0, %v2317
        %v2319 = vmul.f32 %v2316, %v2318
        %v2320 = vadd.f32 %v2316, %v2319
        %vm2321 = vweird.f32 %v2018
        %vm2322 = vweird.f32 %v2316
        %vm2323 = vmor %vm2321, %vm2322
        %v2324 = vsel %vm2323, %v2316, %v2320
        %v2325 = vand.u32 2147483647, %v2018
        %vm2326 = vcmp.eq.f32.partialorder %v2325, 8.507059e+37
        %v2327 = vand.u32 %v2018, 2147483648
        %v2328 = vor.u32 1.1754944e-38, %v2327
        %v2329 = vsel %vm2326, %v2328, %v2324
        %v2330 = vmul.f32 1.0, %v2329
        %v2331 = vrcp.pop %v2019
        %v2332 = vmul.f32 %v2019, %v2331
        %v2333 = vsub.f32 1.0, %v2332
        %v2334 = vmul.f32 %v2331, %v2333
        %v2335 = vadd.f32 %v2331, %v2334
        %vm2336 = vweird.f32 %v2019
        %vm2337 = vweird.f32 %v2331
        %vm2338 = vmor %vm2336, %vm2337
        %v2339 = vsel %vm2338, %v2331, %v2335
        %v2340 = vand.u32 2147483647, %v2019
        %vm2341 = vcmp.eq.f32.partialorder %v2340, 8.507059e+37
        %v2342 = vand.u32 %v2019, 2147483648
        %v2343 = vor.u32 1.1754944e-38, %v2342
        %v2344 = vsel %vm2341, %v2343, %v2339
        %v2345 = vmul.f32 1.0, %v2344
        %v2346 = vrcp.pop %v2020
        %v2347 = vmul.f32 %v2020, %v2346
        %v2348 = vsub.f32 1.0, %v2347
        %v2349 = vmul.f32 %v2346, %v2348
        %v2350 = vadd.f32 %v2346, %v2349
        %vm2351 = vweird.f32 %v2020
        %vm2352 = vweird.f32 %v2346
        %vm2353 = vmor %vm2351, %vm2352
        %v2354 = vsel %vm2353, %v2346, %v2350
        %v2355 = vand.u32 2147483647, %v2020
        %vm2356 = vcmp.eq.f32.partialorder %v2355, 8.507059e+37
        %v2357 = vand.u32 %v2020, 2147483648
        %v2358 = vor.u32 1.1754944e-38, %v2357
        %v2359 = vsel %vm2356, %v2358, %v2354
        %v2360 = vmul.f32 1.0, %v2359
        %v2361 = vrcp.pop %v2021
        %v2362 = vmul.f32 %v2021, %v2361
        %v2363 = vsub.f32 1.0, %v2362
        %v2364 = vmul.f32 %v2361, %v2363
        %v2365 = vadd.f32 %v2361, %v2364
        %vm2366 = vweird.f32 %v2021
        %vm2367 = vweird.f32 %v2361
        %vm2368 = vmor %vm2366, %vm2367
        %v2369 = vsel %vm2368, %v2361, %v2365
        %v2370 = vand.u32 2147483647, %v2021
        %vm2371 = vcmp.eq.f32.partialorder %v2370, 8.507059e+37
        %v2372 = vand.u32 %v2021, 2147483648
        %v2373 = vor.u32 1.1754944e-38, %v2372
        %v2374 = vsel %vm2371, %v2373, %v2369
        %v2375 = vmul.f32 1.0, %v2374
        %v2376 = vrcp.pop %v2022
        %v2377 = vmul.f32 %v2022, %v2376
        %v2378 = vsub.f32 1.0, %v2377
        %v2379 = vmul.f32 %v2376, %v2378
        %v2380 = vadd.f32 %v2376, %v2379
        %vm2381 = vweird.f32 %v2022
        %vm2382 = vweird.f32 %v2376
        %vm2383 = vmor %vm2381, %vm2382
        %v2384 = vsel %vm2383, %v2376, %v2380
        %v2385 = vand.u32 2147483647, %v2022
        %vm2386 = vcmp.eq.f32.partialorder %v2385, 8.507059e+37
        %v2387 = vand.u32 %v2022, 2147483648
        %v2388 = vor.u32 1.1754944e-38, %v2387
        %v2389 = vsel %vm2386, %v2388, %v2384
        %v2390 = vmul.f32 1.0, %v2389
        %v2391 = vrcp.pop %v2023
        %v2392 = vmul.f32 %v2023, %v2391
        %v2393 = vsub.f32 1.0, %v2392
        %v2394 = vmul.f32 %v2391, %v2393
        %v2395 = vadd.f32 %v2391, %v2394
        %vm2396 = vweird.f32 %v2023
        %vm2397 = vweird.f32 %v2391
        %vm2398 = vmor %vm2396, %vm2397
        %v2399 = vsel %vm2398, %v2391, %v2395
        %v2400 = vand.u32 2147483647, %v2023
        %vm2401 = vcmp.eq.f32.partialorder %v2400, 8.507059e+37
        %v2402 = vand.u32 %v2023, 2147483648
        %v2403 = vor.u32 1.1754944e-38, %v2402
        %v2404 = vsel %vm2401, %v2403, %v2399
        %v2405 = vmul.f32 1.0, %v2404
        %v2406 = vrcp.pop %v2024
        %v2407 = vmul.f32 %v2024, %v2406
        %v2408 = vsub.f32 1.0, %v2407
        %v2409 = vmul.f32 %v2406, %v2408
        %v2410 = vadd.f32 %v2406, %v2409
        %vm2411 = vweird.f32 %v2024
        %vm2412 = vweird.f32 %v2406
        %vm2413 = vmor %vm2411, %vm2412
        %v2414 = vsel %vm2413, %v2406, %v2410
        %v2415 = vand.u32 2147483647, %v2024
        %vm2416 = vcmp.eq.f32.partialorder %v2415, 8.507059e+37
        %v2417 = vand.u32 %v2024, 2147483648
        %v2418 = vor.u32 1.1754944e-38, %v2417
        %v2419 = vsel %vm2416, %v2418, %v2414
        %v2420 = vmul.f32 1.0, %v2419
        %v2421 = vrcp.pop %v2025
        %v2422 = vmul.f32 %v2025, %v2421
        %v2423 = vsub.f32 1.0, %v2422
        %v2424 = vmul.f32 %v2421, %v2423
        %v2425 = vadd.f32 %v2421, %v2424
        %vm2426 = vweird.f32 %v2025
        %vm2427 = vweird.f32 %v2421
        %vm2428 = vmor %vm2426, %vm2427
        %v2429 = vsel %vm2428, %v2421, %v2425
        %v2430 = vand.u32 2147483647, %v2025
        %vm2431 = vcmp.eq.f32.partialorder %v2430, 8.507059e+37
        %v2432 = vand.u32 %v2025, 2147483648
        %v2433 = vor.u32 1.1754944e-38, %v2432
        %v2434 = vsel %vm2431, %v2433, %v2429
        %v2435 = vmul.f32 1.0, %v2434
        %v2436 = vrcp.pop %v2026
        %v2437 = vmul.f32 %v2026, %v2436
        %v2438 = vsub.f32 1.0, %v2437
        %v2439 = vmul.f32 %v2436, %v2438
        %v2440 = vadd.f32 %v2436, %v2439
        %vm2441 = vweird.f32 %v2026
        %vm2442 = vweird.f32 %v2436
        %vm2443 = vmor %vm2441, %vm2442
        %v2444 = vsel %vm2443, %v2436, %v2440
        %v2445 = vand.u32 2147483647, %v2026
        %vm2446 = vcmp.eq.f32.partialorder %v2445, 8.507059e+37
        %v2447 = vand.u32 %v2026, 2147483648
        %v2448 = vor.u32 1.1754944e-38, %v2447
        %v2449 = vsel %vm2446, %v2448, %v2444
        %v2450 = vmul.f32 1.0, %v2449
        %v2451 = vrcp.pop %v2027
        %v2452 = vmul.f32 %v2027, %v2451
        %v2453 = vsub.f32 1.0, %v2452
        %v2454 = vmul.f32 %v2451, %v2453
        %v2455 = vadd.f32 %v2451, %v2454
        %vm2456 = vweird.f32 %v2027
        %vm2457 = vweird.f32 %v2451
        %vm2458 = vmor %vm2456, %vm2457
        %v2459 = vsel %vm2458, %v2451, %v2455
        %v2460 = vand.u32 2147483647, %v2027
        %vm2461 = vcmp.eq.f32.partialorder %v2460, 8.507059e+37
        %v2462 = vand.u32 %v2027, 2147483648
        %v2463 = vor.u32 1.1754944e-38, %v2462
        %v2464 = vsel %vm2461, %v2463, %v2459
        %v2465 = vmul.f32 1.0, %v2464
        %v2466 = vrcp.pop %v2028
        %v2467 = vmul.f32 %v2028, %v2466
        %v2468 = vsub.f32 1.0, %v2467
        %v2469 = vmul.f32 %v2466, %v2468
        %v2470 = vadd.f32 %v2466, %v2469
        %vm2471 = vweird.f32 %v2028
        %vm2472 = vweird.f32 %v2466
        %vm2473 = vmor %vm2471, %vm2472
        %v2474 = vsel %vm2473, %v2466, %v2470
        %v2475 = vand.u32 2147483647, %v2028
        %vm2476 = vcmp.eq.f32.partialorder %v2475, 8.507059e+37
        %v2477 = vand.u32 %v2028, 2147483648
        %v2478 = vor.u32 1.1754944e-38, %v2477
        %v2479 = vsel %vm2476, %v2478, %v2474
        %v2480 = vmul.f32 1.0, %v2479
        %v2481 = vrcp.pop %v2029
        %v2482 = vmul.f32 %v2029, %v2481
        %v2483 = vsub.f32 1.0, %v2482
        %v2484 = vmul.f32 %v2481, %v2483
        %v2485 = vadd.f32 %v2481, %v2484
        %vm2486 = vweird.f32 %v2029
        %vm2487 = vweird.f32 %v2481
        %vm2488 = vmor %vm2486, %vm2487
        %v2489 = vsel %vm2488, %v2481, %v2485
        %v2490 = vand.u32 2147483647, %v2029
        %vm2491 = vcmp.eq.f32.partialorder %v2490, 8.507059e+37
        %v2492 = vand.u32 %v2029, 2147483648
        %v2493 = vor.u32 1.1754944e-38, %v2492
        %v2494 = vsel %vm2491, %v2493, %v2489
        %v2495 = vmul.f32 1.0, %v2494
        %v2496 = vrcp.pop %v2030
        %v2497 = vmul.f32 %v2030, %v2496
        %v2498 = vsub.f32 1.0, %v2497
        %v2499 = vmul.f32 %v2496, %v2498
        %v2500 = vadd.f32 %v2496, %v2499
        %vm2501 = vweird.f32 %v2030
        %vm2502 = vweird.f32 %v2496
        %vm2503 = vmor %vm2501, %vm2502
        %v2504 = vsel %vm2503, %v2496, %v2500
        %v2505 = vand.u32 2147483647, %v2030
        %vm2506 = vcmp.eq.f32.partialorder %v2505, 8.507059e+37
        %v2507 = vand.u32 %v2030, 2147483648
        %v2508 = vor.u32 1.1754944e-38, %v2507
        %v2509 = vsel %vm2506, %v2508, %v2504
        %v2510 = vmul.f32 1.0, %v2509
        %v2543 = vperm.slane %v2045, 0
        %v2544 = vperm.slane %v2045, 1
        %v2545 = vperm.slane %v2045, 2
        %v2546 = vperm.slane %v2045, 3
        %v2547 = vperm.slane %v2045, 4
        %v2548 = vperm.slane %v2045, 5
        %v2549 = vperm.slane %v2045, 6
        %v2550 = vperm.slane %v2045, 7
        %v2551 = vperm.slane %v2060, 0
        %v2552 = vperm.slane %v2060, 1
        %v2553 = vperm.slane %v2060, 2
        %v2554 = vperm.slane %v2060, 3
        %v2555 = vperm.slane %v2060, 4
        %v2556 = vperm.slane %v2060, 5
        %v2557 = vperm.slane %v2060, 6
        %v2558 = vperm.slane %v2060, 7
        %v2559 = vperm.slane %v2075, 0
        %v2560 = vperm.slane %v2075, 1
        %v2561 = vperm.slane %v2075, 2
        %v2562 = vperm.slane %v2075, 3
        %v2563 = vperm.slane %v2075, 4
        %v2564 = vperm.slane %v2075, 5
        %v2565 = vperm.slane %v2075, 6
        %v2566 = vperm.slane %v2075, 7
        %v2567 = vperm.slane %v2090, 0
        %v2568 = vperm.slane %v2090, 1
        %v2569 = vperm.slane %v2090, 2
        %v2570 = vperm.slane %v2090, 3
        %v2571 = vperm.slane %v2090, 4
        %v2572 = vperm.slane %v2090, 5
        %v2573 = vperm.slane %v2090, 6
        %v2574 = vperm.slane %v2090, 7
        %v2575 = vperm.slane %v2105, 0
        %v2576 = vperm.slane %v2105, 1
        %v2577 = vperm.slane %v2105, 2
        %v2578 = vperm.slane %v2105, 3
        %v2579 = vperm.slane %v2105, 4
        %v2580 = vperm.slane %v2105, 5
        %v2581 = vperm.slane %v2105, 6
        %v2582 = vperm.slane %v2105, 7
        %v2583 = vperm.slane %v2120, 0
        %v2584 = vperm.slane %v2120, 1
        %v2585 = vperm.slane %v2120, 2
        %v2586 = vperm.slane %v2120, 3
        %v2587 = vperm.slane %v2120, 4
        %v2588 = vperm.slane %v2120, 5
        %v2589 = vperm.slane %v2120, 6
        %v2590 = vperm.slane %v2120, 7
        %v2591 = vperm.slane %v2135, 0
        %v2592 = vperm.slane %v2135, 1
        %v2593 = vperm.slane %v2135, 2
        %v2594 = vperm.slane %v2135, 3
        %v2595 = vperm.slane %v2135, 4
        %v2596 = vperm.slane %v2135, 5
        %v2597 = vperm.slane %v2135, 6
        %v2598 = vperm.slane %v2135, 7
        %v2599 = vperm.slane %v2150, 0
        %v2600 = vperm.slane %v2150, 1
        %v2601 = vperm.slane %v2150, 2
        %v2602 = vperm.slane %v2150, 3
        %v2603 = vperm.slane %v2150, 4
        %v2604 = vperm.slane %v2150, 5
        %v2605 = vperm.slane %v2150, 6
        %v2606 = vperm.slane %v2150, 7
        %v2607 = vperm.slane %v2165, 0
        %v2608 = vperm.slane %v2165, 1
        %v2609 = vperm.slane %v2165, 2
        %v2610 = vperm.slane %v2165, 3
        %v2611 = vperm.slane %v2165, 4
        %v2612 = vperm.slane %v2165, 5
        %v2613 = vperm.slane %v2165, 6
        %v2614 = vperm.slane %v2165, 7
        %v2615 = vperm.slane %v2180, 0
        %v2616 = vperm.slane %v2180, 1
        %v2617 = vperm.slane %v2180, 2
        %v2618 = vperm.slane %v2180, 3
        %v2619 = vperm.slane %v2180, 4
        %v2620 = vperm.slane %v2180, 5
        %v2621 = vperm.slane %v2180, 6
        %v2622 = vperm.slane %v2180, 7
        %v2623 = vperm.slane %v2195, 0
        %v2624 = vperm.slane %v2195, 1
        %v2625 = vperm.slane %v2195, 2
        %v2626 = vperm.slane %v2195, 3
        %v2627 = vperm.slane %v2195, 4
        %v2628 = vperm.slane %v2195, 5
        %v2629 = vperm.slane %v2195, 6
        %v2630 = vperm.slane %v2195, 7
        %v2631 = vperm.slane %v2210, 0
        %v2632 = vperm.slane %v2210, 1
        %v2633 = vperm.slane %v2210, 2
        %v2634 = vperm.slane %v2210, 3
        %v2635 = vperm.slane %v2210, 4
        %v2636 = vperm.slane %v2210, 5
        %v2637 = vperm.slane %v2210, 6
        %v2638 = vperm.slane %v2210, 7
        %v2639 = vperm.slane %v2225, 0
        %v2640 = vperm.slane %v2225, 1
        %v2641 = vperm.slane %v2225, 2
        %v2642 = vperm.slane %v2225, 3
        %v2643 = vperm.slane %v2225, 4
        %v2644 = vperm.slane %v2225, 5
        %v2645 = vperm.slane %v2225, 6
        %v2646 = vperm.slane %v2225, 7
        %v2647 = vperm.slane %v2240, 0
        %v2648 = vperm.slane %v2240, 1
        %v2649 = vperm.slane %v2240, 2
        %v2650 = vperm.slane %v2240, 3
        %v2651 = vperm.slane %v2240, 4
        %v2652 = vperm.slane %v2240, 5
        %v2653 = vperm.slane %v2240, 6
        %v2654 = vperm.slane %v2240, 7
        %v2655 = vperm.slane %v2255, 0
        %v2656 = vperm.slane %v2255, 1
        %v2657 = vperm.slane %v2255, 2
        %v2658 = vperm.slane %v2255, 3
        %v2659 = vperm.slane %v2255, 4
        %v2660 = vperm.slane %v2255, 5
        %v2661 = vperm.slane %v2255, 6
        %v2662 = vperm.slane %v2255, 7
        %v2663 = vperm.slane %v2270, 0
        %v2664 = vperm.slane %v2270, 1
        %v2665 = vperm.slane %v2270, 2
        %v2666 = vperm.slane %v2270, 3
        %v2667 = vperm.slane %v2270, 4
        %v2668 = vperm.slane %v2270, 5
        %v2669 = vperm.slane %v2270, 6
        %v2670 = vperm.slane %v2270, 7
        %v2671 = vperm.slane %v2285, 0
        %v2672 = vperm.slane %v2285, 1
        %v2673 = vperm.slane %v2285, 2
        %v2674 = vperm.slane %v2285, 3
        %v2675 = vperm.slane %v2285, 4
        %v2676 = vperm.slane %v2285, 5
        %v2677 = vperm.slane %v2285, 6
        %v2678 = vperm.slane %v2285, 7
        %v2679 = vperm.slane %v2300, 0
        %v2680 = vperm.slane %v2300, 1
        %v2681 = vperm.slane %v2300, 2
        %v2682 = vperm.slane %v2300, 3
        %v2683 = vperm.slane %v2300, 4
        %v2684 = vperm.slane %v2300, 5
        %v2685 = vperm.slane %v2300, 6
        %v2686 = vperm.slane %v2300, 7
        %v2687 = vperm.slane %v2315, 0
        %v2688 = vperm.slane %v2315, 1
        %v2689 = vperm.slane %v2315, 2
        %v2690 = vperm.slane %v2315, 3
        %v2691 = vperm.slane %v2315, 4
        %v2692 = vperm.slane %v2315, 5
        %v2693 = vperm.slane %v2315, 6
        %v2694 = vperm.slane %v2315, 7
        %v2695 = vperm.slane %v2330, 0
        %v2696 = vperm.slane %v2330, 1
        %v2697 = vperm.slane %v2330, 2
        %v2698 = vperm.slane %v2330, 3
        %v2699 = vperm.slane %v2330, 4
        %v2700 = vperm.slane %v2330, 5
        %v2701 = vperm.slane %v2330, 6
        %v2702 = vperm.slane %v2330, 7
        %v2703 = vperm.slane %v2345, 0
        %v2704 = vperm.slane %v2345, 1
        %v2705 = vperm.slane %v2345, 2
        %v2706 = vperm.slane %v2345, 3
        %v2707 = vperm.slane %v2345, 4
        %v2708 = vperm.slane %v2345, 5
        %v2709 = vperm.slane %v2345, 6
        %v2710 = vperm.slane %v2345, 7
        %v2711 = vperm.slane %v2360, 0
        %v2712 = vperm.slane %v2360, 1
        %v2713 = vperm.slane %v2360, 2
        %v2714 = vperm.slane %v2360, 3
        %v2715 = vperm.slane %v2360, 4
        %v2716 = vperm.slane %v2360, 5
        %v2717 = vperm.slane %v2360, 6
        %v2718 = vperm.slane %v2360, 7
        %v2719 = vperm.slane %v2375, 0
        %v2720 = vperm.slane %v2375, 1
        %v2721 = vperm.slane %v2375, 2
        %v2722 = vperm.slane %v2375, 3
        %v2723 = vperm.slane %v2375, 4
        %v2724 = vperm.slane %v2375, 5
        %v2725 = vperm.slane %v2375, 6
        %v2726 = vperm.slane %v2375, 7
        %v2727 = vperm.slane %v2390, 0
        %v2728 = vperm.slane %v2390, 1
        %v2729 = vperm.slane %v2390, 2
        %v2730 = vperm.slane %v2390, 3
        %v2731 = vperm.slane %v2390, 4
        %v2732 = vperm.slane %v2390, 5
        %v2733 = vperm.slane %v2390, 6
        %v2734 = vperm.slane %v2390, 7
        %v2735 = vperm.slane %v2405, 0
        %v2736 = vperm.slane %v2405, 1
        %v2737 = vperm.slane %v2405, 2
        %v2738 = vperm.slane %v2405, 3
        %v2739 = vperm.slane %v2405, 4
        %v2740 = vperm.slane %v2405, 5
        %v2741 = vperm.slane %v2405, 6
        %v2742 = vperm.slane %v2405, 7
        %v2743 = vperm.slane %v2420, 0
        %v2744 = vperm.slane %v2420, 1
        %v2745 = vperm.slane %v2420, 2
        %v2746 = vperm.slane %v2420, 3
        %v2747 = vperm.slane %v2420, 4
        %v2748 = vperm.slane %v2420, 5
        %v2749 = vperm.slane %v2420, 6
        %v2750 = vperm.slane %v2420, 7
        %v2751 = vperm.slane %v2435, 0
        %v2752 = vperm.slane %v2435, 1
        %v2753 = vperm.slane %v2435, 2
        %v2754 = vperm.slane %v2435, 3
        %v2755 = vperm.slane %v2435, 4
        %v2756 = vperm.slane %v2435, 5
        %v2757 = vperm.slane %v2435, 6
        %v2758 = vperm.slane %v2435, 7
        %v2759 = vperm.slane %v2450, 0
        %v2760 = vperm.slane %v2450, 1
        %v2761 = vperm.slane %v2450, 2
        %v2762 = vperm.slane %v2450, 3
        %v2763 = vperm.slane %v2450, 4
        %v2764 = vperm.slane %v2450, 5
        %v2765 = vperm.slane %v2450, 6
        %v2766 = vperm.slane %v2450, 7
        %v2767 = vperm.slane %v2465, 0
        %v2768 = vperm.slane %v2465, 1
        %v2769 = vperm.slane %v2465, 2
        %v2770 = vperm.slane %v2465, 3
        %v2771 = vperm.slane %v2465, 4
        %v2772 = vperm.slane %v2465, 5
        %v2773 = vperm.slane %v2465, 6
        %v2774 = vperm.slane %v2465, 7
        %v2775 = vperm.slane %v2480, 0
        %v2776 = vperm.slane %v2480, 1
        %v2777 = vperm.slane %v2480, 2
        %v2778 = vperm.slane %v2480, 3
        %v2779 = vperm.slane %v2480, 4
        %v2780 = vperm.slane %v2480, 5
        %v2781 = vperm.slane %v2480, 6
        %v2782 = vperm.slane %v2480, 7
        %v2783 = vperm.slane %v2495, 0
        %v2784 = vperm.slane %v2495, 1
        %v2785 = vperm.slane %v2495, 2
        %v2786 = vperm.slane %v2495, 3
        %v2787 = vperm.slane %v2495, 4
        %v2788 = vperm.slane %v2495, 5
        %v2789 = vperm.slane %v2495, 6
        %v2790 = vperm.slane %v2495, 7
        %v2791 = vperm.slane %v2510, 0
        %v2792 = vperm.slane %v2510, 1
        %v2793 = vperm.slane %v2510, 2
        %v2794 = vperm.slane %v2510, 3
        %v2795 = vperm.slane %v2510, 4
        %v2796 = vperm.slane %v2510, 5
        %v2797 = vperm.slane %v2510, 6
        %v2798 = vperm.slane %v2510, 7
        %2799 = vst [vmem:[#allocation1] ss:$9 sm:$0xff] %v2543
        %s2800 = scalar_lea.vmem [#allocation1], 1
        %2801 = vst [vmem:[%s2800] ss:$9 sm:$0xff] %v2544
        %s2802 = scalar_lea.vmem [#allocation1], 2
        %2803 = vst [vmem:[%s2802] ss:$9 sm:$0xff] %v2545
        %s2804 = scalar_lea.vmem [#allocation1], 3
        %2805 = vst [vmem:[%s2804] ss:$9 sm:$0xff] %v2546
        %s2806 = scalar_lea.vmem [#allocation1], 4
        %2807 = vst [vmem:[%s2806] ss:$9 sm:$0xff] %v2547
        %s2808 = scalar_lea.vmem [#allocation1], 5
        %2809 = vst [vmem:[%s2808] ss:$9 sm:$0xff] %v2548
        %s2810 = scalar_lea.vmem [#allocation1], 6
        %2811 = vst [vmem:[%s2810] ss:$9 sm:$0xff] %v2549
        %s2812 = scalar_lea.vmem [#allocation1], 7
        %2813 = vst [vmem:[%s2812] ss:$9 sm:$0xff] %v2550
        %v2814 = vld [vmem:[#allocation1] sm:$0xff]
        %2815 = vst [vmem:[#allocation1] ss:$9 sm:$0xff] %v2551
        %2816 = vst [vmem:[%s2800] ss:$9 sm:$0xff] %v2552
        %2817 = vst [vmem:[%s2802] ss:$9 sm:$0xff] %v2553
        %2818 = vst [vmem:[%s2804] ss:$9 sm:$0xff] %v2554
        %2819 = vst [vmem:[%s2806] ss:$9 sm:$0xff] %v2555
        %2820 = vst [vmem:[%s2808] ss:$9 sm:$0xff] %v2556
        %2821 = vst [vmem:[%s2810] ss:$9 sm:$0xff] %v2557
        %2822 = vst [vmem:[%s2812] ss:$9 sm:$0xff] %v2558
        %v2823 = vld [vmem:[#allocation1] sm:$0xff]
        %2824 = vst [vmem:[#allocation1] ss:$9 sm:$0xff] %v2559
        %2825 = vst [vmem:[%s2800] ss:$9 sm:$0xff] %v2560
        %2826 = vst [vmem:[%s2802] ss:$9 sm:$0xff] %v2561
        %2827 = vst [vmem:[%s2804] ss:$9 sm:$0xff] %v2562
        %2828 = vst [vmem:[%s2806] ss:$9 sm:$0xff] %v2563
        %2829 = vst [vmem:[%s2808] ss:$9 sm:$0xff] %v2564
        %2830 = vst [vmem:[%s2810] ss:$9 sm:$0xff] %v2565
        %2831 = vst [vmem:[%s2812] ss:$9 sm:$0xff] %v2566
        %v2832 = vld [vmem:[#allocation1] sm:$0xff]
        %2833 = vst [vmem:[#allocation1] ss:$9 sm:$0xff] %v2567
        %2834 = vst [vmem:[%s2800] ss:$9 sm:$0xff] %v2568
        %2835 = vst [vmem:[%s2802] ss:$9 sm:$0xff] %v2569
        %2836 = vst [vmem:[%s2804] ss:$9 sm:$0xff] %v2570
        %2837 = vst [vmem:[%s2806] ss:$9 sm:$0xff] %v2571
        %2838 = vst [vmem:[%s2808] ss:$9 sm:$0xff] %v2572
        %2839 = vst [vmem:[%s2810] ss:$9 sm:$0xff] %v2573
        %2840 = vst [vmem:[%s2812] ss:$9 sm:$0xff] %v2574
        %v2841 = vld [vmem:[#allocation1] sm:$0xff]
        %2842 = vst [vmem:[#allocation1] ss:$9 sm:$0xff] %v2575
        %2843 = vst [vmem:[%s2800] ss:$9 sm:$0xff] %v2576
        %2844 = vst [vmem:[%s2802] ss:$9 sm:$0xff] %v2577
        %2845 = vst [vmem:[%s2804] ss:$9 sm:$0xff] %v2578
        %2846 = vst [vmem:[%s2806] ss:$9 sm:$0xff] %v2579
        %2847 = vst [vmem:[%s2808] ss:$9 sm:$0xff] %v2580
        %2848 = vst [vmem:[%s2810] ss:$9 sm:$0xff] %v2581
        %2849 = vst [vmem:[%s2812] ss:$9 sm:$0xff] %v2582
        %v2850 = vld [vmem:[#allocation1] sm:$0xff]
        %2851 = vst [vmem:[#allocation1] ss:$9 sm:$0xff] %v2583
        %2852 = vst [vmem:[%s2800] ss:$9 sm:$0xff] %v2584
        %2853 = vst [vmem:[%s2802] ss:$9 sm:$0xff] %v2585
        %2854 = vst [vmem:[%s2804] ss:$9 sm:$0xff] %v2586
        %2855 = vst [vmem:[%s2806] ss:$9 sm:$0xff] %v2587
        %2856 = vst [vmem:[%s2808] ss:$9 sm:$0xff] %v2588
        %2857 = vst [vmem:[%s2810] ss:$9 sm:$0xff] %v2589
        %2858 = vst [vmem:[%s2812] ss:$9 sm:$0xff] %v2590
        %v2859 = vld [vmem:[#allocation1] sm:$0xff]
        %2860 = vst [vmem:[#allocation1] ss:$9 sm:$0xff] %v2591
        %2861 = vst [vmem:[%s2800] ss:$9 sm:$0xff] %v2592
        %2862 = vst [vmem:[%s2802] ss:$9 sm:$0xff] %v2593
        %2863 = vst [vmem:[%s2804] ss:$9 sm:$0xff] %v2594
        %2864 = vst [vmem:[%s2806] ss:$9 sm:$0xff] %v2595
        %2865 = vst [vmem:[%s2808] ss:$9 sm:$0xff] %v2596
        %2866 = vst [vmem:[%s2810] ss:$9 sm:$0xff] %v2597
        %2867 = vst [vmem:[%s2812] ss:$9 sm:$0xff] %v2598
        %v2868 = vld [vmem:[#allocation1] sm:$0xff]
        %2869 = vst [vmem:[#allocation1] ss:$9 sm:$0xff] %v2599
        %2870 = vst [vmem:[%s2800] ss:$9 sm:$0xff] %v2600
        %2871 = vst [vmem:[%s2802] ss:$9 sm:$0xff] %v2601
        %2872 = vst [vmem:[%s2804] ss:$9 sm:$0xff] %v2602
        %2873 = vst [vmem:[%s2806] ss:$9 sm:$0xff] %v2603
        %2874 = vst [vmem:[%s2808] ss:$9 sm:$0xff] %v2604
        %2875 = vst [vmem:[%s2810] ss:$9 sm:$0xff] %v2605
        %2876 = vst [vmem:[%s2812] ss:$9 sm:$0xff] %v2606
        %v2877 = vld [vmem:[#allocation1] sm:$0xff]
        %2878 = vst [vmem:[#allocation1] ss:$9 sm:$0xff] %v2607
        %2879 = vst [vmem:[%s2800] ss:$9 sm:$0xff] %v2608
        %2880 = vst [vmem:[%s2802] ss:$9 sm:$0xff] %v2609
        %2881 = vst [vmem:[%s2804] ss:$9 sm:$0xff] %v2610
        %2882 = vst [vmem:[%s2806] ss:$9 sm:$0xff] %v2611
        %2883 = vst [vmem:[%s2808] ss:$9 sm:$0xff] %v2612
        %2884 = vst [vmem:[%s2810] ss:$9 sm:$0xff] %v2613
        %2885 = vst [vmem:[%s2812] ss:$9 sm:$0xff] %v2614
        %v2886 = vld [vmem:[#allocation1] sm:$0xff]
        %2887 = vst [vmem:[#allocation1] ss:$9 sm:$0xff] %v2615
        %2888 = vst [vmem:[%s2800] ss:$9 sm:$0xff] %v2616
        %2889 = vst [vmem:[%s2802] ss:$9 sm:$0xff] %v2617
        %2890 = vst [vmem:[%s2804] ss:$9 sm:$0xff] %v2618
        %2891 = vst [vmem:[%s2806] ss:$9 sm:$0xff] %v2619
        %2892 = vst [vmem:[%s2808] ss:$9 sm:$0xff] %v2620
        %2893 = vst [vmem:[%s2810] ss:$9 sm:$0xff] %v2621
        %2894 = vst [vmem:[%s2812] ss:$9 sm:$0xff] %v2622
        %v2895 = vld [vmem:[#allocation1] sm:$0xff]
        %2896 = vst [vmem:[#allocation1] ss:$9 sm:$0xff] %v2623
        %2897 = vst [vmem:[%s2800] ss:$9 sm:$0xff] %v2624
        %2898 = vst [vmem:[%s2802] ss:$9 sm:$0xff] %v2625
        %2899 = vst [vmem:[%s2804] ss:$9 sm:$0xff] %v2626
        %2900 = vst [vmem:[%s2806] ss:$9 sm:$0xff] %v2627
        %2901 = vst [vmem:[%s2808] ss:$9 sm:$0xff] %v2628
        %2902 = vst [vmem:[%s2810] ss:$9 sm:$0xff] %v2629
        %2903 = vst [vmem:[%s2812] ss:$9 sm:$0xff] %v2630
        %v2904 = vld [vmem:[#allocation1] sm:$0xff]
        %2905 = vst [vmem:[#allocation1] ss:$9 sm:$0xff] %v2631
        %2906 = vst [vmem:[%s2800] ss:$9 sm:$0xff] %v2632
        %2907 = vst [vmem:[%s2802] ss:$9 sm:$0xff] %v2633
        %2908 = vst [vmem:[%s2804] ss:$9 sm:$0xff] %v2634
        %2909 = vst [vmem:[%s2806] ss:$9 sm:$0xff] %v2635
        %2910 = vst [vmem:[%s2808] ss:$9 sm:$0xff] %v2636
        %2911 = vst [vmem:[%s2810] ss:$9 sm:$0xff] %v2637
        %2912 = vst [vmem:[%s2812] ss:$9 sm:$0xff] %v2638
        %v2913 = vld [vmem:[#allocation1] sm:$0xff]
        %2914 = vst [vmem:[#allocation1] ss:$9 sm:$0xff] %v2639
        %2915 = vst [vmem:[%s2800] ss:$9 sm:$0xff] %v2640
        %2916 = vst [vmem:[%s2802] ss:$9 sm:$0xff] %v2641
        %2917 = vst [vmem:[%s2804] ss:$9 sm:$0xff] %v2642
        %2918 = vst [vmem:[%s2806] ss:$9 sm:$0xff] %v2643
        %2919 = vst [vmem:[%s2808] ss:$9 sm:$0xff] %v2644
        %2920 = vst [vmem:[%s2810] ss:$9 sm:$0xff] %v2645
        %2921 = vst [vmem:[%s2812] ss:$9 sm:$0xff] %v2646
        %v2922 = vld [vmem:[#allocation1] sm:$0xff]
        %2923 = vst [vmem:[#allocation1] ss:$9 sm:$0xff] %v2647
        %2924 = vst [vmem:[%s2800] ss:$9 sm:$0xff] %v2648
        %2925 = vst [vmem:[%s2802] ss:$9 sm:$0xff] %v2649
        %2926 = vst [vmem:[%s2804] ss:$9 sm:$0xff] %v2650
        %2927 = vst [vmem:[%s2806] ss:$9 sm:$0xff] %v2651
        %2928 = vst [vmem:[%s2808] ss:$9 sm:$0xff] %v2652
        %2929 = vst [vmem:[%s2810] ss:$9 sm:$0xff] %v2653
        %2930 = vst [vmem:[%s2812] ss:$9 sm:$0xff] %v2654
        %v2931 = vld [vmem:[#allocation1] sm:$0xff]
        %2932 = vst [vmem:[#allocation1] ss:$9 sm:$0xff] %v2655
        %2933 = vst [vmem:[%s2800] ss:$9 sm:$0xff] %v2656
        %2934 = vst [vmem:[%s2802] ss:$9 sm:$0xff] %v2657
        %2935 = vst [vmem:[%s2804] ss:$9 sm:$0xff] %v2658
        %2936 = vst [vmem:[%s2806] ss:$9 sm:$0xff] %v2659
        %2937 = vst [vmem:[%s2808] ss:$9 sm:$0xff] %v2660
        %2938 = vst [vmem:[%s2810] ss:$9 sm:$0xff] %v2661
        %2939 = vst [vmem:[%s2812] ss:$9 sm:$0xff] %v2662
        %v2940 = vld [vmem:[#allocation1] sm:$0xff]
        %2941 = vst [vmem:[#allocation1] ss:$9 sm:$0xff] %v2663
        %2942 = vst [vmem:[%s2800] ss:$9 sm:$0xff] %v2664
        %2943 = vst [vmem:[%s2802] ss:$9 sm:$0xff] %v2665
        %2944 = vst [vmem:[%s2804] ss:$9 sm:$0xff] %v2666
        %2945 = vst [vmem:[%s2806] ss:$9 sm:$0xff] %v2667
        %2946 = vst [vmem:[%s2808] ss:$9 sm:$0xff] %v2668
        %2947 = vst [vmem:[%s2810] ss:$9 sm:$0xff] %v2669
        %2948 = vst [vmem:[%s2812] ss:$9 sm:$0xff] %v2670
        %v2949 = vld [vmem:[#allocation1] sm:$0xff]
        %2950 = vst [vmem:[#allocation1] ss:$9 sm:$0xff] %v2671
        %2951 = vst [vmem:[%s2800] ss:$9 sm:$0xff] %v2672
        %2952 = vst [vmem:[%s2802] ss:$9 sm:$0xff] %v2673
        %2953 = vst [vmem:[%s2804] ss:$9 sm:$0xff] %v2674
        %2954 = vst [vmem:[%s2806] ss:$9 sm:$0xff] %v2675
        %2955 = vst [vmem:[%s2808] ss:$9 sm:$0xff] %v2676
        %2956 = vst [vmem:[%s2810] ss:$9 sm:$0xff] %v2677
        %2957 = vst [vmem:[%s2812] ss:$9 sm:$0xff] %v2678
        %v2958 = vld [vmem:[#allocation1] sm:$0xff]
        %2959 = vst [vmem:[#allocation1] ss:$9 sm:$0xff] %v2679
        %2960 = vst [vmem:[%s2800] ss:$9 sm:$0xff] %v2680
        %2961 = vst [vmem:[%s2802] ss:$9 sm:$0xff] %v2681
        %2962 = vst [vmem:[%s2804] ss:$9 sm:$0xff] %v2682
        %2963 = vst [vmem:[%s2806] ss:$9 sm:$0xff] %v2683
        %2964 = vst [vmem:[%s2808] ss:$9 sm:$0xff] %v2684
        %2965 = vst [vmem:[%s2810] ss:$9 sm:$0xff] %v2685
        %2966 = vst [vmem:[%s2812] ss:$9 sm:$0xff] %v2686
        %v2967 = vld [vmem:[#allocation1] sm:$0xff]
        %2968 = vst [vmem:[#allocation1] ss:$9 sm:$0xff] %v2687
        %2969 = vst [vmem:[%s2800] ss:$9 sm:$0xff] %v2688
        %2970 = vst [vmem:[%s2802] ss:$9 sm:$0xff] %v2689
        %2971 = vst [vmem:[%s2804] ss:$9 sm:$0xff] %v2690
        %2972 = vst [vmem:[%s2806] ss:$9 sm:$0xff] %v2691
        %2973 = vst [vmem:[%s2808] ss:$9 sm:$0xff] %v2692
        %2974 = vst [vmem:[%s2810] ss:$9 sm:$0xff] %v2693
        %2975 = vst [vmem:[%s2812] ss:$9 sm:$0xff] %v2694
        %v2976 = vld [vmem:[#allocation1] sm:$0xff]
        %2977 = vst [vmem:[#allocation1] ss:$9 sm:$0xff] %v2695
        %2978 = vst [vmem:[%s2800] ss:$9 sm:$0xff] %v2696
        %2979 = vst [vmem:[%s2802] ss:$9 sm:$0xff] %v2697
        %2980 = vst [vmem:[%s2804] ss:$9 sm:$0xff] %v2698
        %2981 = vst [vmem:[%s2806] ss:$9 sm:$0xff] %v2699
        %2982 = vst [vmem:[%s2808] ss:$9 sm:$0xff] %v2700
        %2983 = vst [vmem:[%s2810] ss:$9 sm:$0xff] %v2701
        %2984 = vst [vmem:[%s2812] ss:$9 sm:$0xff] %v2702
        %v2985 = vld [vmem:[#allocation1] sm:$0xff]
        %2986 = vst [vmem:[#allocation1] ss:$9 sm:$0xff] %v2703
        %2987 = vst [vmem:[%s2800] ss:$9 sm:$0xff] %v2704
        %2988 = vst [vmem:[%s2802] ss:$9 sm:$0xff] %v2705
        %2989 = vst [vmem:[%s2804] ss:$9 sm:$0xff] %v2706
        %2990 = vst [vmem:[%s2806] ss:$9 sm:$0xff] %v2707
        %2991 = vst [vmem:[%s2808] ss:$9 sm:$0xff] %v2708
        %2992 = vst [vmem:[%s2810] ss:$9 sm:$0xff] %v2709
        %2993 = vst [vmem:[%s2812] ss:$9 sm:$0xff] %v2710
        %v2994 = vld [vmem:[#allocation1] sm:$0xff]
        %2995 = vst [vmem:[#allocation1] ss:$9 sm:$0xff] %v2711
        %2996 = vst [vmem:[%s2800] ss:$9 sm:$0xff] %v2712
        %2997 = vst [vmem:[%s2802] ss:$9 sm:$0xff] %v2713
        %2998 = vst [vmem:[%s2804] ss:$9 sm:$0xff] %v2714
        %2999 = vst [vmem:[%s2806] ss:$9 sm:$0xff] %v2715
        %3000 = vst [vmem:[%s2808] ss:$9 sm:$0xff] %v2716
        %3001 = vst [vmem:[%s2810] ss:$9 sm:$0xff] %v2717
        %3002 = vst [vmem:[%s2812] ss:$9 sm:$0xff] %v2718
        %v3003 = vld [vmem:[#allocation1] sm:$0xff]
        %3004 = vst [vmem:[#allocation1] ss:$9 sm:$0xff] %v2719
        %3005 = vst [vmem:[%s2800] ss:$9 sm:$0xff] %v2720
        %3006 = vst [vmem:[%s2802] ss:$9 sm:$0xff] %v2721
        %3007 = vst [vmem:[%s2804] ss:$9 sm:$0xff] %v2722
        %3008 = vst [vmem:[%s2806] ss:$9 sm:$0xff] %v2723
        %3009 = vst [vmem:[%s2808] ss:$9 sm:$0xff] %v2724
        %3010 = vst [vmem:[%s2810] ss:$9 sm:$0xff] %v2725
        %3011 = vst [vmem:[%s2812] ss:$9 sm:$0xff] %v2726
        %v3012 = vld [vmem:[#allocation1] sm:$0xff]
        %3013 = vst [vmem:[#allocation1] ss:$9 sm:$0xff] %v2727
        %3014 = vst [vmem:[%s2800] ss:$9 sm:$0xff] %v2728
        %3015 = vst [vmem:[%s2802] ss:$9 sm:$0xff] %v2729
        %3016 = vst [vmem:[%s2804] ss:$9 sm:$0xff] %v2730
        %3017 = vst [vmem:[%s2806] ss:$9 sm:$0xff] %v2731
        %3018 = vst [vmem:[%s2808] ss:$9 sm:$0xff] %v2732
        %3019 = vst [vmem:[%s2810] ss:$9 sm:$0xff] %v2733
        %3020 = vst [vmem:[%s2812] ss:$9 sm:$0xff] %v2734
        %v3021 = vld [vmem:[#allocation1] sm:$0xff]
        %3022 = vst [vmem:[#allocation1] ss:$9 sm:$0xff] %v2735
        %3023 = vst [vmem:[%s2800] ss:$9 sm:$0xff] %v2736
        %3024 = vst [vmem:[%s2802] ss:$9 sm:$0xff] %v2737
        %3025 = vst [vmem:[%s2804] ss:$9 sm:$0xff] %v2738
        %3026 = vst [vmem:[%s2806] ss:$9 sm:$0xff] %v2739
        %3027 = vst [vmem:[%s2808] ss:$9 sm:$0xff] %v2740
        %3028 = vst [vmem:[%s2810] ss:$9 sm:$0xff] %v2741
        %3029 = vst [vmem:[%s2812] ss:$9 sm:$0xff] %v2742
        %v3030 = vld [vmem:[#allocation1] sm:$0xff]
        %3031 = vst [vmem:[#allocation1] ss:$9 sm:$0xff] %v2743
        %3032 = vst [vmem:[%s2800] ss:$9 sm:$0xff] %v2744
        %3033 = vst [vmem:[%s2802] ss:$9 sm:$0xff] %v2745
        %3034 = vst [vmem:[%s2804] ss:$9 sm:$0xff] %v2746
        %3035 = vst [vmem:[%s2806] ss:$9 sm:$0xff] %v2747
        %3036 = vst [vmem:[%s2808] ss:$9 sm:$0xff] %v2748
        %3037 = vst [vmem:[%s2810] ss:$9 sm:$0xff] %v2749
        %3038 = vst [vmem:[%s2812] ss:$9 sm:$0xff] %v2750
        %v3039 = vld [vmem:[#allocation1] sm:$0xff]
        %3040 = vst [vmem:[#allocation1] ss:$9 sm:$0xff] %v2751
        %3041 = vst [vmem:[%s2800] ss:$9 sm:$0xff] %v2752
        %3042 = vst [vmem:[%s2802] ss:$9 sm:$0xff] %v2753
        %3043 = vst [vmem:[%s2804] ss:$9 sm:$0xff] %v2754
        %3044 = vst [vmem:[%s2806] ss:$9 sm:$0xff] %v2755
        %3045 = vst [vmem:[%s2808] ss:$9 sm:$0xff] %v2756
        %3046 = vst [vmem:[%s2810] ss:$9 sm:$0xff] %v2757
        %3047 = vst [vmem:[%s2812] ss:$9 sm:$0xff] %v2758
        %v3048 = vld [vmem:[#allocation1] sm:$0xff]
        %3049 = vst [vmem:[#allocation1] ss:$9 sm:$0xff] %v2759
        %3050 = vst [vmem:[%s2800] ss:$9 sm:$0xff] %v2760
        %3051 = vst [vmem:[%s2802] ss:$9 sm:$0xff] %v2761
        %3052 = vst [vmem:[%s2804] ss:$9 sm:$0xff] %v2762
        %3053 = vst [vmem:[%s2806] ss:$9 sm:$0xff] %v2763
        %3054 = vst [vmem:[%s2808] ss:$9 sm:$0xff] %v2764
        %3055 = vst [vmem:[%s2810] ss:$9 sm:$0xff] %v2765
        %3056 = vst [vmem:[%s2812] ss:$9 sm:$0xff] %v2766
        %v3057 = vld [vmem:[#allocation1] sm:$0xff]
        %3058 = vst [vmem:[#allocation1] ss:$9 sm:$0xff] %v2767
        %3059 = vst [vmem:[%s2800] ss:$9 sm:$0xff] %v2768
        %3060 = vst [vmem:[%s2802] ss:$9 sm:$0xff] %v2769
        %3061 = vst [vmem:[%s2804] ss:$9 sm:$0xff] %v2770
        %3062 = vst [vmem:[%s2806] ss:$9 sm:$0xff] %v2771
        %3063 = vst [vmem:[%s2808] ss:$9 sm:$0xff] %v2772
        %3064 = vst [vmem:[%s2810] ss:$9 sm:$0xff] %v2773
        %3065 = vst [vmem:[%s2812] ss:$9 sm:$0xff] %v2774
        %v3066 = vld [vmem:[#allocation1] sm:$0xff]
        %3067 = vst [vmem:[#allocation1] ss:$9 sm:$0xff] %v2775
        %3068 = vst [vmem:[%s2800] ss:$9 sm:$0xff] %v2776
        %3069 = vst [vmem:[%s2802] ss:$9 sm:$0xff] %v2777
        %3070 = vst [vmem:[%s2804] ss:$9 sm:$0xff] %v2778
        %3071 = vst [vmem:[%s2806] ss:$9 sm:$0xff] %v2779
        %3072 = vst [vmem:[%s2808] ss:$9 sm:$0xff] %v2780
        %3073 = vst [vmem:[%s2810] ss:$9 sm:$0xff] %v2781
        %3074 = vst [vmem:[%s2812] ss:$9 sm:$0xff] %v2782
        %v3075 = vld [vmem:[#allocation1] sm:$0xff]
        %3076 = vst [vmem:[#allocation1] ss:$9 sm:$0xff] %v2783
        %3077 = vst [vmem:[%s2800] ss:$9 sm:$0xff] %v2784
        %3078 = vst [vmem:[%s2802] ss:$9 sm:$0xff] %v2785
        %3079 = vst [vmem:[%s2804] ss:$9 sm:$0xff] %v2786
        %3080 = vst [vmem:[%s2806] ss:$9 sm:$0xff] %v2787
        %3081 = vst [vmem:[%s2808] ss:$9 sm:$0xff] %v2788
        %3082 = vst [vmem:[%s2810] ss:$9 sm:$0xff] %v2789
        %3083 = vst [vmem:[%s2812] ss:$9 sm:$0xff] %v2790
        %v3084 = vld [vmem:[#allocation1] sm:$0xff]
        %3085 = vst [vmem:[#allocation1] ss:$9 sm:$0xff] %v2791
        %3086 = vst [vmem:[%s2800] ss:$9 sm:$0xff] %v2792
        %3087 = vst [vmem:[%s2802] ss:$9 sm:$0xff] %v2793
        %3088 = vst [vmem:[%s2804] ss:$9 sm:$0xff] %v2794
        %3089 = vst [vmem:[%s2806] ss:$9 sm:$0xff] %v2795
        %3090 = vst [vmem:[%s2808] ss:$9 sm:$0xff] %v2796
        %3091 = vst [vmem:[%s2810] ss:$9 sm:$0xff] %v2797
        %3092 = vst [vmem:[%s2812] ss:$9 sm:$0xff] %v2798
        %v3093 = vld [vmem:[#allocation1] sm:$0xff]
        %3094 = vset.pattern.permute.xlu0 0
        %3095 = vperm.xlu0 %3094, %v2814
        %v3096 = vpop.permute.xlu0 %3095
        %3097 = vset.pattern.permute.xlu0 0
        %3098 = vperm.xlu0 %3097, %v2823
        %v3099 = vpop.permute.xlu0 %3098
        %3100 = vset.pattern.permute.xlu0 0
        %3101 = vperm.xlu0 %3100, %v2832
        %v3102 = vpop.permute.xlu0 %3101
        %3103 = vset.pattern.permute.xlu0 0
        %3104 = vperm.xlu0 %3103, %v2841
        %v3105 = vpop.permute.xlu0 %3104
        %3106 = vset.pattern.permute.xlu0 0
        %3107 = vperm.xlu0 %3106, %v2850
        %v3108 = vpop.permute.xlu0 %3107
        %3109 = vset.pattern.permute.xlu0 0
        %3110 = vperm.xlu0 %3109, %v2859
        %v3111 = vpop.permute.xlu0 %3110
        %3112 = vset.pattern.permute.xlu0 0
        %3113 = vperm.xlu0 %3112, %v2868
        %v3114 = vpop.permute.xlu0 %3113
        %3115 = vset.pattern.permute.xlu0 0
        %3116 = vperm.xlu0 %3115, %v2877
        %v3117 = vpop.permute.xlu0 %3116
        %3118 = vset.pattern.permute.xlu0 0
        %3119 = vperm.xlu0 %3118, %v2886
        %v3120 = vpop.permute.xlu0 %3119
        %3121 = vset.pattern.permute.xlu0 0
        %3122 = vperm.xlu0 %3121, %v2895
        %v3123 = vpop.permute.xlu0 %3122
        %3124 = vset.pattern.permute.xlu0 0
        %3125 = vperm.xlu0 %3124, %v2904
        %v3126 = vpop.permute.xlu0 %3125
        %3127 = vset.pattern.permute.xlu0 0
        %3128 = vperm.xlu0 %3127, %v2913
        %v3129 = vpop.permute.xlu0 %3128
        %3130 = vset.pattern.permute.xlu0 0
        %3131 = vperm.xlu0 %3130, %v2922
        %v3132 = vpop.permute.xlu0 %3131
        %3133 = vset.pattern.permute.xlu0 0
        %3134 = vperm.xlu0 %3133, %v2931
        %v3135 = vpop.permute.xlu0 %3134
        %3136 = vset.pattern.permute.xlu0 0
        %3137 = vperm.xlu0 %3136, %v2940
        %v3138 = vpop.permute.xlu0 %3137
        %3139 = vset.pattern.permute.xlu0 0
        %3140 = vperm.xlu0 %3139, %v2949
        %v3141 = vpop.permute.xlu0 %3140
        %3142 = vset.pattern.permute.xlu0 0
        %3143 = vperm.xlu0 %3142, %v2958
        %v3144 = vpop.permute.xlu0 %3143
        %3145 = vset.pattern.permute.xlu0 0
        %3146 = vperm.xlu0 %3145, %v2967
        %v3147 = vpop.permute.xlu0 %3146
        %3148 = vset.pattern.permute.xlu0 0
        %3149 = vperm.xlu0 %3148, %v2976
        %v3150 = vpop.permute.xlu0 %3149
        %3151 = vset.pattern.permute.xlu0 0
        %3152 = vperm.xlu0 %3151, %v2985
        %v3153 = vpop.permute.xlu0 %3152
        %3154 = vset.pattern.permute.xlu0 0
        %3155 = vperm.xlu0 %3154, %v2994
        %v3156 = vpop.permute.xlu0 %3155
        %3157 = vset.pattern.permute.xlu0 0
        %3158 = vperm.xlu0 %3157, %v3003
        %v3159 = vpop.permute.xlu0 %3158
        %3160 = vset.pattern.permute.xlu0 0
        %3161 = vperm.xlu0 %3160, %v3012
        %v3162 = vpop.permute.xlu0 %3161
        %3163 = vset.pattern.permute.xlu0 0
        %3164 = vperm.xlu0 %3163, %v3021
        %v3165 = vpop.permute.xlu0 %3164
        %3166 = vset.pattern.permute.xlu0 0
        %3167 = vperm.xlu0 %3166, %v3030
        %v3168 = vpop.permute.xlu0 %3167
        %3169 = vset.pattern.permute.xlu0 0
        %3170 = vperm.xlu0 %3169, %v3039
        %v3171 = vpop.permute.xlu0 %3170
        %3172 = vset.pattern.permute.xlu0 0
        %3173 = vperm.xlu0 %3172, %v3048
        %v3174 = vpop.permute.xlu0 %3173
        %3175 = vset.pattern.permute.xlu0 0
        %3176 = vperm.xlu0 %3175, %v3057
        %v3177 = vpop.permute.xlu0 %3176
        %3178 = vset.pattern.permute.xlu0 0
        %3179 = vperm.xlu0 %3178, %v3066
        %v3180 = vpop.permute.xlu0 %3179
        %3181 = vset.pattern.permute.xlu0 0
        %3182 = vperm.xlu0 %3181, %v3075
        %v3183 = vpop.permute.xlu0 %3182
        %3184 = vset.pattern.permute.xlu0 0
        %3185 = vperm.xlu0 %3184, %v3084
        %v3186 = vpop.permute.xlu0 %3185
        %3187 = vset.pattern.permute.xlu0 0
        %3188 = vperm.xlu0 %3187, %v3093
        %v3189 = vpop.permute.xlu0 %3188
        %v3190 = vlaneseq
        %v3191 = vand.u32 %v3190, 127
        %v3192 = vperm.slane %v3096, %v3191
        %v3193 = vadd.s32 %v3191, 4294967288
        %v3194 = vperm.slane %v3099, %v3193
        %vm3195 = vcmask 130112
        %v3196 = vsel %vm3195, %v3194, %v3192
        %v3197 = vadd.s32 %v3191, 4294967280
        %v3198 = vperm.slane %v3102, %v3197
        %vm3199 = vcmask 195712
        %v3200 = vsel %vm3199, %v3198, %v3196
        %v3201 = vadd.s32 %v3191, 4294967272
        %v3202 = vperm.slane %v3105, %v3201
        %vm3203 = vcmask 261312
        %v3204 = vsel %vm3203, %v3202, %v3200
        %v3205 = vadd.s32 %v3191, 4294967264
        %v3206 = vperm.slane %v3108, %v3205
        %vm3207 = vcmask 326912
        %v3208 = vsel %vm3207, %v3206, %v3204
        %v3209 = vadd.s32 %v3191, 4294967256
        %v3210 = vperm.slane %v3111, %v3209
        %vm3211 = vcmask 392512
        %v3212 = vsel %vm3211, %v3210, %v3208
        %v3213 = vadd.s32 %v3191, 4294967248
        %v3214 = vperm.slane %v3114, %v3213
        %vm3215 = vcmask 458112
        %v3216 = vsel %vm3215, %v3214, %v3212
        %v3217 = vadd.s32 %v3191, 4294967240
        %v3218 = vperm.slane %v3117, %v3217
        %vm3219 = vcmask 523712
        %v3220 = vsel %vm3219, %v3218, %v3216
        %v3221 = vadd.s32 %v3191, 4294967232
        %v3222 = vperm.slane %v3120, %v3221
        %vm3223 = vcmask 589312
        %v3224 = vsel %vm3223, %v3222, %v3220
        %v3225 = vadd.s32 %v3191, 4294967224
        %v3226 = vperm.slane %v3123, %v3225
        %vm3227 = vcmask 654912
        %v3228 = vsel %vm3227, %v3226, %v3224
        %v3229 = vadd.s32 %v3191, 4294967216
        %v3230 = vperm.slane %v3126, %v3229
        %vm3231 = vcmask 720512
        %v3232 = vsel %vm3231, %v3230, %v3228
        %v3233 = vadd.s32 %v3191, 4294967208
        %v3234 = vperm.slane %v3129, %v3233
        %vm3235 = vcmask 786112
        %v3236 = vsel %vm3235, %v3234, %v3232
        %v3237 = vadd.s32 %v3191, 4294967200
        %v3238 = vperm.slane %v3132, %v3237
        %vm3239 = vcmask 851712
        %v3240 = vsel %vm3239, %v3238, %v3236
        %v3241 = vadd.s32 %v3191, 4294967192
        %v3242 = vperm.slane %v3135, %v3241
        %vm3243 = vcmask 917312
        %v3244 = vsel %vm3243, %v3242, %v3240
        %v3245 = vadd.s32 %v3191, 4294967184
        %v3246 = vperm.slane %v3138, %v3245
        %vm3247 = vcmask 982912
        %v3248 = vsel %vm3247, %v3246, %v3244
        %v3249 = vadd.s32 %v3191, 4294967176
        %v3250 = vperm.slane %v3141, %v3249
        %vm3251 = vcmask 1048512
        %v3252 = vsel %vm3251, %v3250, %v3248
        %v3253 = vperm.slane %v3144, %v3191
        %v3254 = vperm.slane %v3147, %v3193
        %v3255 = vsel %vm3195, %v3254, %v3253
        %v3256 = vperm.slane %v3150, %v3197
        %v3257 = vsel %vm3199, %v3256, %v3255
        %v3258 = vperm.slane %v3153, %v3201
        %v3259 = vsel %vm3203, %v3258, %v3257
        %v3260 = vperm.slane %v3156, %v3205
        %v3261 = vsel %vm3207, %v3260, %v3259
        %v3262 = vperm.slane %v3159, %v3209
        %v3263 = vsel %vm3211, %v3262, %v3261
        %v3264 = vperm.slane %v3162, %v3213
        %v3265 = vsel %vm3215, %v3264, %v3263
        %v3266 = vperm.slane %v3165, %v3217
        %v3267 = vsel %vm3219, %v3266, %v3265
        %v3268 = vperm.slane %v3168, %v3221
        %v3269 = vsel %vm3223, %v3268, %v3267
        %v3270 = vperm.slane %v3171, %v3225
        %v3271 = vsel %vm3227, %v3270, %v3269
        %v3272 = vperm.slane %v3174, %v3229
        %v3273 = vsel %vm3231, %v3272, %v3271
        %v3274 = vperm.slane %v3177, %v3233
        %v3275 = vsel %vm3235, %v3274, %v3273
        %v3276 = vperm.slane %v3180, %v3237
        %v3277 = vsel %vm3239, %v3276, %v3275
        %v3278 = vperm.slane %v3183, %v3241
        %v3279 = vsel %vm3243, %v3278, %v3277
        %v3280 = vperm.slane %v3186, %v3245
        %v3281 = vsel %vm3247, %v3280, %v3279
        %v3282 = vperm.slane %v3189, %v3249
        %v3283 = vsel %vm3251, %v3282, %v3281
        %v3284 = vrot.slane %v3283, 7
        %vm3285 = vcmask 1040384
        %v3286 = vsel %vm3285, %v3252, %v3284
        %v3288 = vlaneseq
        %vm3289 = vcmp.ge.s32.totalorder %v3288, 0
        %vm3290 = vcmp.lt.s32.totalorder %v3288, 256
        %vm3291 = vmand %vm3289, %vm3290
        %3292 = vst.msk [vmem:[%s392] sm:$0x3] %vm3291, %v3286
        %s3293 = sand.u32 %s194, 1
        %s3294 = scalar_lea.sflag [#allocation5], %s3293
        %s3295 = sand.u32 %s194, 1
        %s3296 = smul.addr %s3295, 2
        %s3297 = scalar_lea.vmem [#allocation11], %s3296
        // Predicated region
        $region65: #{tpu_custom_call.1} parent=47 // pred_check
          %p3298 = pneg %p204
        $region66: #{tpu_custom_call.1} parent=47 // pred_check_branch
          %3300 = sbr.rel (%p3298) target = $region68
        $region67: #{tpu_custom_call.1} parent=47 // pred_region
          %s3301 = smul.u32 2, %s29
          %s3302 = ssub.s32 3, %s3301
          %p3303 = scmp.lt.s32.totalorder %s3302, 2
          %s3304 = scalar_select %p3303, %s3302, 2
          %s3305 = ssub.s32 2, %s3304
          %s3306 = sshll.u32 %s3305, 4
          %3307 = vsyncadd %s3294, %s3306
          %p3308 = scmp.ne.s32.totalorder 0, %s3304
          %s3309 = scalar_lea.hbm %s7, %s3301
          %s3310 = sshll.u32 %s3304, 4
          %s3311 = sshll.u32 %s3297, 4
          %s3312 = int_to_ptr.vmem [resolvable:$true] %s3311
          %s3313 = sshll.u32 %s3309, 4
          %s3314 = int_to_ptr.hbm [resolvable:$true] %s3313
          %3316 = dma.vmem_to_hbm [thread:$0]  (%p3308), %s3312, %s3310, %s3314, %s3294
        $region68: #{tpu_custom_call.1} parent=47 // pred_fallthru
          _
      $region48: #{tpu_custom_call.1} parent=5 // pred_fallthru
        _
      %p3317 = scmp.le.s32.totalorder 2, %s24
      // Predicated region
      $region69: #{tpu_custom_call.1} parent=5 // pred_check
        %p3318 = pneg %p3317
      $region70: #{tpu_custom_call.1} parent=5 // pred_check_branch
        %3320 = sbr.rel (%p3318) target = $region72
      $region71: #{tpu_custom_call.1} parent=5 // pred_region
        %s3321 = ssub.s32 %s24, 2
        // Predicated region
        $region73: #{tpu_custom_call.1} parent=71 // pred_check
          %p3322 = pneg %p210
        $region74: #{tpu_custom_call.1} parent=71 // pred_check_branch
          %3324 = sbr.rel (%p3322) target = $region76
        $region75: #{tpu_custom_call.1} parent=71 // pred_region
          %s3325 = sand.u32 %s195, 1
          %s3326 = scalar_lea.sflag [#allocation5], %s3325
          %s3327 = sand.u32 %s195, 1
          %s3328 = smul.addr %s3327, 2
          %s3329 = scalar_lea.vmem [#allocation11], %s3328
          %3331 = dma.done %s3326, 32
        $region76: #{tpu_custom_call.1} parent=71 // pred_fallthru
          _
      $region72: #{tpu_custom_call.1} parent=5 // pred_fallthru
        _
    $region6: #{tpu_custom_call.1} parent=1 // loop_footer
      %s28 = sadd.s32 1, %s24
    $region7: #{tpu_custom_call.1} parent=1 // loop_footer_branch
      %23 = sbr.rel target = $region3
    $region8: #{tpu_custom_call.1} parent=1 // loop_exit
      _
    %3332 = vsyncpa [#allocation4], 1
    %s3333 = scalar_lea.sflag [#allocation4], 1
    %3334 = vsyncpa %s3333, 1
    %3335 = vsyncpa [#allocation7], 1
    %s3336 = scalar_lea.sflag [#allocation7], 1
    %3337 = vsyncpa %s3336, 1
    %3338 = vsyncpa [#allocation10], 1
    %3339 = vsyncpa [#allocation5], 1
    %s3340 = scalar_lea.sflag [#allocation5], 1
    %3341 = vsyncpa %s3340, 1

</llo_original>
